<compile_context>
chip_gen: v7x
topology: tpu7x:2x2x1
jax: 0.10.0
libtpu: 0.0.40
codegen_flags: <defaults>
</compile_context>

<pallas_src>
import jax
import jax.numpy as jnp
import numpy as np
from jax.experimental import pallas as pl
from jax.experimental.pallas import tpu as pltpu

EPS = 1e-5
_REF_PRECISION = jax.lax.Precision.HIGHEST  # reference path only


def _vmem_spec():
    # Whole-array-in-VMEM spec (problem sizes are tiny; no tiling needed).
    return pl.BlockSpec(memory_space=pltpu.MemorySpace.VMEM)


# ------------------ compile-time constant builders (numpy, wrapper) ------------------
def _pool_select(B, H, W):
    """(4*B*Ho*Wo, B*H*W) 0/1 matrix gathering the 4 candidates of every 2x2 window.

    Row q*npool + p is the one-hot for candidate q (q = 2*qh + qw) of pooled position
    p = (b, i, j) row-major; an elementwise max over the 4 row-chunks finishes the pool.
    """
    Ho, Wo = H // 2, W // 2
    npool = B * Ho * Wo
    sel = np.zeros((4 * npool, B * H * W), np.float32)
    b, i, j = np.meshgrid(np.arange(B), np.arange(Ho), np.arange(Wo), indexing="ij")
    p = (b * Ho * Wo + i * Wo + j).reshape(-1)
    for q in range(4):
        qh, qw = q // 2, q % 2
        src = (b * H * W + (2 * i + qh) * W + (2 * j + qw)).reshape(-1)
        sel[q * npool + p, src] = 1.0
    return sel


def _border_mask(B, H, W, C):
    """(B*H*W, 9*C) multiplicative mask zeroing 3x3 taps that fall outside the image."""
    i = np.arange(H)[:, None]
    j = np.arange(W)[None, :]
    cols = []
    for dy in range(3):
        for dx in range(3):
            ok = ((i + dy - 1 >= 0) & (i + dy - 1 < H) &
                  (j + dx - 1 >= 0) & (j + dx - 1 < W)).astype(np.float32)   # (H, W)
            m = np.broadcast_to(ok[None, :, :, None], (B, H, W, C))
            cols.append(m.reshape(B * H * W, C))
    return np.concatenate(cols, axis=1)


def _avg_matrix(B, H, W):
    """(B, B*H*W) averaging matrix implementing AdaptiveAvgPool2d((1,1)) per image."""
    m = np.zeros((B, B * H * W), np.float32)
    for b in range(B):
        m[b, b * H * W:(b + 1) * H * W] = 1.0 / (H * W)
    return m


# --------------------------------- fused kernel -------------------------------------
def _make_kernel(dims):
    C1, C2 = dims["C1"], dims["C2"]
    W2, W3 = dims["W2"], dims["W3"]
    N1, N2, N3 = dims["N1"], dims["N2"], dims["N3"]
    P2, P3 = dims["P2"], dims["P3"]
    f32 = jnp.float32

    def bn_relu(y, n):
        # training-mode BatchNorm (gamma=1, beta=0, biased variance), fused ReLU.
        s1 = jnp.sum(y, axis=0, keepdims=True)
        s2 = jnp.sum(y * y, axis=0, keepdims=True)
        mean = s1 * (1.0 / n)
        var = jnp.maximum(s2 * (1.0 / n) - mean * mean, 0.0)
        return jnp.maximum((y - mean) * jax.lax.rsqrt(var + EPS), 0.0)

    def max4(z, n):
        return jnp.maximum(jnp.maximum(z[0:n], z[n:2 * n]),
                           jnp.maximum(z[2 * n:3 * n], z[3 * n:4 * n]))

    def im2col(src_ref, mask_ref, pad, n, w):
        # 9 shifted windows of the flat halo scratch, concatenated along lanes, times
        # one precomputed multiplicative border mask (handles image borders AND the
        # row/image wrap of the flat layout).  One elementwise mul, no per-tap masks.
        taps = [src_ref[pad + (t // 3 - 1) * w + (t % 3 - 1):
                        pad + (t // 3 - 1) * w + (t % 3 - 1) + n, :]
                for t in range(9)]
        return jnp.concatenate(taps, axis=1) * mask_ref[...]

    def kernel(pat1_ref, w1_ref, w2_ref, w3_ref, wfc_ref, bfc_ref,
               sel1_ref, sel2_ref, mask2_ref, mask3_ref, avg_ref,
               o_ref, s2_ref, s3_ref):
        # ---- block 1: conv(1->16) as one (N1,9)x(9,16) matmul + BN + ReLU + pool ----
        y = jnp.dot(pat1_ref[...], w1_ref[...], preferred_element_type=f32)   # (N1, C1)
        y = bn_relu(y, N1)
        z = jnp.dot(sel1_ref[...], y, preferred_element_type=f32)             # (4*N2, C1)
        pool1 = max4(z, N2)                                                   # (N2, C1)

        # stash pooled activations in a flat halo scratch; zero only the halos.
        s2_ref[0:P2, :] = jnp.zeros((P2, C1), f32)
        s2_ref[P2 + N2:2 * P2 + N2, :] = jnp.zeros((P2, C1), f32)
        s2_ref[P2:P2 + N2, :] = pool1

        # ---- block 2: conv(16->32) as one (N2,144)x(144,32) matmul + BN + pool -----
        patch2 = im2col(s2_ref, mask2_ref, P2, N2, W2)                        # (N2, 144)
        y = jnp.dot(patch2, w2_ref[...], preferred_element_type=f32)          # (N2, C2)
        y = bn_relu(y, N2)
        z = jnp.dot(sel2_ref[...], y, preferred_element_type=f32)             # (4*N3, C2)
        pool2 = max4(z, N3)                                                   # (N3, C2)

        s3_ref[0:P3, :] = jnp.zeros((P3, C2), f32)
        s3_ref[P3 + N3:2 * P3 + N3, :] = jnp.zeros((P3, C2), f32)
        s3_ref[P3:P3 + N3, :] = pool2

        # ---- block 3: conv(32->64) as one (N3,288)x(288,64) matmul + BN + ReLU -----
        patch3 = im2col(s3_ref, mask3_ref, P3, N3, W3)                        # (N3, 288)
        y = jnp.dot(patch3, w3_ref[...], preferred_element_type=f32)          # (N3, C3)
        y = bn_relu(y, N3)

        # ---- AdaptiveAvgPool((1,1)) + Linear(64, 4), batched: one (B, 4) store -----
        pooled = jnp.dot(avg_ref[...], y, preferred_element_type=f32)         # (B, C3)
        o_ref[...] = (jnp.dot(pooled, wfc_ref[...], preferred_element_type=f32)
                      + bfc_ref[...])

    return kernel


def simple_cnn_forward(x, params):
    """x: (B, H, W) float32 (the module's input before unsqueeze(1))."""
    B, H, W = x.shape
    assert H % 4 == 0 and W % 4 == 0, "two 2x2 max-pools need H, W divisible by 4"
    C1, C2, C3, NCLS = 16, 32, 64, 4
    H2, W2, H3, W3 = H // 2, W // 2, H // 4, W // 4
    N1, N2, N3 = B * H * W, B * H2 * W2, B * H3 * W3
    P2 = ((W2 + 1 + 7) // 8) * 8    # halo >= W2 + 1, sublane-aligned
    P3 = ((W3 + 1 + 7) // 8) * 8

    # conv1 im2col, built lane-dense outside the kernel (tiny (N1, 9) slab).
    xp = jnp.pad(x.astype(jnp.float32), ((0, 0), (1, 1), (1, 1)))
    patches1 = jnp.stack([xp[:, dy:dy + H, dx:dx + W]
                          for dy in range(3) for dx in range(3)],
                         axis=-1).reshape(N1, 9)

    # Compile-time constants (numpy at trace time -> XLA constant-folds them).
    sel1 = jnp.asarray(_pool_select(B, H, W))            # (4*N2, N1)
    sel2 = jnp.asarray(_pool_select(B, H2, W2))          # (4*N3, N2)
    mask2 = jnp.asarray(_border_mask(B, H2, W2, C1))     # (N2, 9*C1)
    mask3 = jnp.asarray(_border_mask(B, H3, W3, C2))     # (N3, 9*C2)
    avgm = jnp.asarray(_avg_matrix(B, H3, W3))           # (B, N3)

    w1 = params["w1"].reshape(9, C1)                     # rows ordered (dy, dx)
    w2 = params["w2"].reshape(9 * C1, C2)                # rows ordered (dy, dx, cin)
    w3 = params["w3"].reshape(9 * C2, C3)
    wfc = params["wfc"]
    bfc = params["bfc"].reshape(1, NCLS)
    # conv biases (params["b1"/"b2"/"b3"]) are intentionally not passed: training-mode
    # BatchNorm mean subtraction cancels them exactly.

    kernel = _make_kernel(dict(C1=C1, C2=C2, W2=W2, W3=W3,
                               N1=N1, N2=N2, N3=N3, P2=P2, P3=P3))

    cost = pl.CostEstimate(flops=12_000_000, transcendentals=112,
                           bytes_accessed=1_500_000)
    return pl.pallas_call(
        kernel,
        out_shape=jax.ShapeDtypeStruct((B, NCLS), jnp.float32),
        in_specs=[_vmem_spec()] * 11,
        out_specs=_vmem_spec(),
        scratch_shapes=[
            pltpu.VMEM((2 * P2 + N2, C1), jnp.float32),   # flat halo for block-2 input
            pltpu.VMEM((2 * P3 + N3, C2), jnp.float32),   # flat halo for block-3 input
        ],
        cost_estimate=cost,
    )(patches1, w1, w2, w3, wfc, bfc, sel1, sel2, mask2, mask3, avgm)


# ----------------------------- deterministic parameter init -------------------------
def init_params(key):
    ks = jax.random.split(key, 8)

    def conv_w(k, cin, cout):
        bound = 1.0 / np.sqrt(9 * cin)
        return jax.random.uniform(k, (3, 3, cin, cout), jnp.float32, -bound, bound)

    def vec(k, n, fan_in):
        bound = 1.0 / np.sqrt(fan_in)
        return jax.random.uniform(k, (n,), jnp.float32, -bound, bound)

    return {
        "w1": conv_w(ks[0], 1, 16),  "b1": vec(ks[1], 16, 9),
        "w2": conv_w(ks[2], 16, 32), "b2": vec(ks[3], 32, 9 * 16),
        "w3": conv_w(ks[4], 32, 64), "b3": vec(ks[5], 64, 9 * 32),
        "wfc": jax.random.uniform(ks[6], (64, 4), jnp.float32,
                                  -1.0 / 8.0, 1.0 / 8.0),
        "bfc": vec(ks[7], 4, 64),
    }


# ------------------------------ pure-JAX reference (check) --------------------------
def ref_forward(x, params):
    x = x[..., None]   # NHWC, C=1

    def conv(x, w, b):
        y = jax.lax.conv_general_dilated(
            x, w, (1, 1), "SAME", dimension_numbers=("NHWC", "HWIO", "NHWC"),
            precision=_REF_PRECISION)
        return y + b

    def bn_relu(y):
        mean = y.mean(axis=(0, 1, 2), keepdims=True)
        var = ((y - mean) ** 2).mean(axis=(0, 1, 2), keepdims=True)
        return jnp.maximum((y - mean) * jax.lax.rsqrt(var + EPS), 0.0)

    def maxpool(y):
        B, H, W, C = y.shape
        return y.reshape(B, H // 2, 2, W // 2, 2, C).max(axis=(2, 4))

    y = maxpool(bn_relu(conv(x, params["w1"], params["b1"])))
    y = maxpool(bn_relu(conv(y, params["w2"], params["b2"])))
    y = bn_relu(conv(y, params["w3"], params["b3"])).mean(axis=(1, 2))
    return jnp.dot(y, params["wfc"], precision=_REF_PRECISION) + params["bfc"]


if __name__ == "__main__":
    key = jax.random.PRNGKey(0)
    kp, kx = jax.random.split(key)
    params = init_params(kp)
    x = jax.random.normal(kx, (2, 16, 16), jnp.float32)  # (B, H, W)

    out = jax.jit(simple_cnn_forward)(x, params)
    out = jax.block_until_ready(out)
    assert out.shape == (2, 4) and out.dtype == jnp.float32

    ref = ref_forward(x, params)
    # Kernel matmuls run at default MXU precision (bf16 inputs, f32 accumulation) per
    # the perf review; the reference is full-f32 (HIGHEST), hence the 2e-2 tolerance.
    np.testing.assert_allclose(np.asarray(out), np.asarray(ref),
                               rtol=2e-2, atol=2e-2)
    print("KERNEL_OK")
</pallas_src>

<mosaic_0001>
module attributes {stable_mosaic.version = 11 : i64} {
  func.func @kernel(%arg0: memref<512x9xf32, #tpu.memory_space<vmem>>, %arg1: memref<9x16xf32, #tpu.memory_space<vmem>>, %arg2: memref<144x32xf32, #tpu.memory_space<vmem>>, %arg3: memref<288x64xf32, #tpu.memory_space<vmem>>, %arg4: memref<64x4xf32, #tpu.memory_space<vmem>>, %arg5: memref<1x4xf32, #tpu.memory_space<vmem>>, %arg6: memref<512x512xf32, #tpu.memory_space<vmem>>, %arg7: memref<128x128xf32, #tpu.memory_space<vmem>>, %arg8: memref<128x144xf32, #tpu.memory_space<vmem>>, %arg9: memref<32x288xf32, #tpu.memory_space<vmem>>, %arg10: memref<2x32xf32, #tpu.memory_space<vmem>>, %arg11: memref<2x4xf32, #tpu.memory_space<vmem>>, %arg12: memref<160x16xf32, #tpu.memory_space<vmem>>, %arg13: memref<48x32xf32, #tpu.memory_space<vmem>>) attributes {dimension_semantics = [], scalar_prefetch = 0 : i64, scratch_operands = 2 : i64, tpu.core_type = #tpu.core_type<tc>} {
    %c0 = arith.constant 0 : index
    %c0_0 = arith.constant 0 : index
    %0 = vector.load %arg0[%c0, %c0_0] : memref<512x9xf32, #tpu.memory_space<vmem>>, vector<512x9xf32>
    %c0_1 = arith.constant 0 : index
    %c0_2 = arith.constant 0 : index
    %1 = vector.load %arg1[%c0_1, %c0_2] : memref<9x16xf32, #tpu.memory_space<vmem>>, vector<9x16xf32>
    %cst = arith.constant dense<0.000000e+00> : vector<512x16xf32>
    %2 = tpu.matmul %0, %1, %cst {dimension_numbers = #tpu.dot_dimension_numbers<[1], [0], [0], [1], [0, 0, 1, 1], [], []>} : vector<512x9xf32>, vector<9x16xf32>, vector<512x16xf32> -> vector<512x16xf32>
    %cst_3 = arith.constant dense<0.000000e+00> : vector<16xf32>
    %3 = vector.multi_reduction <add>, %2, %cst_3 [0] : vector<512x16xf32> to vector<16xf32>
    %4 = vector.shape_cast %3 : vector<16xf32> to vector<1x16xf32>
    %5 = arith.mulf %2, %2 : vector<512x16xf32>
    %cst_4 = arith.constant dense<0.000000e+00> : vector<16xf32>
    %6 = vector.multi_reduction <add>, %5, %cst_4 [0] : vector<512x16xf32> to vector<16xf32>
    %7 = vector.shape_cast %6 : vector<16xf32> to vector<1x16xf32>
    %cst_5 = arith.constant 0.001953125 : f32
    %8 = vector.broadcast %cst_5 : f32 to vector<1x16xf32>
    %9 = arith.mulf %4, %8 : vector<1x16xf32>
    %cst_6 = arith.constant 0.001953125 : f32
    %10 = vector.broadcast %cst_6 : f32 to vector<1x16xf32>
    %11 = arith.mulf %7, %10 : vector<1x16xf32>
    %12 = arith.mulf %9, %9 : vector<1x16xf32>
    %13 = arith.subf %11, %12 : vector<1x16xf32>
    %cst_7 = arith.constant 0.000000e+00 : f32
    %14 = vector.broadcast %cst_7 : f32 to vector<1x16xf32>
    %15 = arith.maximumf %13, %14 : vector<1x16xf32>
    %16 = vector.broadcast %9 : vector<1x16xf32> to vector<512x16xf32>
    %17 = arith.subf %2, %16 : vector<512x16xf32>
    %cst_8 = arith.constant 9.99999974E-6 : f32
    %18 = vector.broadcast %cst_8 : f32 to vector<1x16xf32>
    %19 = arith.addf %15, %18 : vector<1x16xf32>
    %20 = math.rsqrt %19 : vector<1x16xf32>
    %21 = vector.broadcast %20 : vector<1x16xf32> to vector<512x16xf32>
    %22 = arith.mulf %17, %21 : vector<512x16xf32>
    %cst_9 = arith.constant 0.000000e+00 : f32
    %23 = vector.broadcast %cst_9 : f32 to vector<512x16xf32>
    %24 = arith.maximumf %22, %23 : vector<512x16xf32>
    %c0_10 = arith.constant 0 : index
    %c0_11 = arith.constant 0 : index
    %25 = vector.load %arg6[%c0_10, %c0_11] : memref<512x512xf32, #tpu.memory_space<vmem>>, vector<512x512xf32>
    %cst_12 = arith.constant dense<0.000000e+00> : vector<512x16xf32>
    %26 = tpu.matmul %25, %24, %cst_12 {dimension_numbers = #tpu.dot_dimension_numbers<[1], [0], [0], [1], [0, 0, 1, 1], [], []>} : vector<512x512xf32>, vector<512x16xf32>, vector<512x16xf32> -> vector<512x16xf32>
    %27 = vector.extract_strided_slice %26 {offsets = [0, 0], sizes = [128, 16], strides = [1, 1]} : vector<512x16xf32> to vector<128x16xf32>
    %28 = vector.extract_strided_slice %26 {offsets = [128, 0], sizes = [128, 16], strides = [1, 1]} : vector<512x16xf32> to vector<128x16xf32>
    %29 = arith.maximumf %27, %28 : vector<128x16xf32>
    %30 = vector.extract_strided_slice %26 {offsets = [256, 0], sizes = [128, 16], strides = [1, 1]} : vector<512x16xf32> to vector<128x16xf32>
    %31 = vector.extract_strided_slice %26 {offsets = [384, 0], sizes = [128, 16], strides = [1, 1]} : vector<512x16xf32> to vector<128x16xf32>
    %32 = arith.maximumf %30, %31 : vector<128x16xf32>
    %33 = arith.maximumf %29, %32 : vector<128x16xf32>
    %cst_13 = arith.constant 0.000000e+00 : f32
    %34 = vector.broadcast %cst_13 : f32 to vector<16x16xf32>
    %c0_14 = arith.constant 0 : index
    %c0_15 = arith.constant 0 : index
    %35 = vector.load %arg12[%c0_14, %c0_15] : memref<160x16xf32, #tpu.memory_space<vmem>>, vector<16x16xf32>
    tpu.vector_store %arg12[%c0_14, %c0_15], %34 {strides = array<i32>} : memref<160x16xf32, #tpu.memory_space<vmem>>, vector<16x16xf32>,
    %cst_16 = arith.constant 0.000000e+00 : f32
    %36 = vector.broadcast %cst_16 : f32 to vector<16x16xf32>
    %c144 = arith.constant 144 : index
    %c0_17 = arith.constant 0 : index
    %37 = vector.load %arg12[%c144, %c0_17] : memref<160x16xf32, #tpu.memory_space<vmem>>, vector<16x16xf32>
    tpu.vector_store %arg12[%c144, %c0_17], %36 {strides = array<i32>} : memref<160x16xf32, #tpu.memory_space<vmem>>, vector<16x16xf32>,
    %c16 = arith.constant 16 : index
    %c0_18 = arith.constant 0 : index
    %38 = vector.load %arg12[%c16, %c0_18] : memref<160x16xf32, #tpu.memory_space<vmem>>, vector<128x16xf32>
    tpu.vector_store %arg12[%c16, %c0_18], %33 {strides = array<i32>} : memref<160x16xf32, #tpu.memory_space<vmem>>, vector<128x16xf32>,
    %c7 = arith.constant 7 : index
    %c0_19 = arith.constant 0 : index
    %39 = vector.load %arg12[%c7, %c0_19] : memref<160x16xf32, #tpu.memory_space<vmem>>, vector<128x16xf32>
    %c8 = arith.constant 8 : index
    %c0_20 = arith.constant 0 : index
    %40 = vector.load %arg12[%c8, %c0_20] : memref<160x16xf32, #tpu.memory_space<vmem>>, vector<128x16xf32>
    %c9 = arith.constant 9 : index
    %c0_21 = arith.constant 0 : index
    %41 = vector.load %arg12[%c9, %c0_21] : memref<160x16xf32, #tpu.memory_space<vmem>>, vector<128x16xf32>
    %c15 = arith.constant 15 : index
    %c0_22 = arith.constant 0 : index
    %42 = vector.load %arg12[%c15, %c0_22] : memref<160x16xf32, #tpu.memory_space<vmem>>, vector<128x16xf32>
    %c16_23 = arith.constant 16 : index
    %c0_24 = arith.constant 0 : index
    %43 = vector.load %arg12[%c16_23, %c0_24] : memref<160x16xf32, #tpu.memory_space<vmem>>, vector<128x16xf32>
    %c17 = arith.constant 17 : index
    %c0_25 = arith.constant 0 : index
    %44 = vector.load %arg12[%c17, %c0_25] : memref<160x16xf32, #tpu.memory_space<vmem>>, vector<128x16xf32>
    %c23 = arith.constant 23 : index
    %c0_26 = arith.constant 0 : index
    %45 = vector.load %arg12[%c23, %c0_26] : memref<160x16xf32, #tpu.memory_space<vmem>>, vector<128x16xf32>
    %c24 = arith.constant 24 : index
    %c0_27 = arith.constant 0 : index
    %46 = vector.load %arg12[%c24, %c0_27] : memref<160x16xf32, #tpu.memory_space<vmem>>, vector<128x16xf32>
    %c25 = arith.constant 25 : index
    %c0_28 = arith.constant 0 : index
    %47 = vector.load %arg12[%c25, %c0_28] : memref<160x16xf32, #tpu.memory_space<vmem>>, vector<128x16xf32>
    %48 = tpu.concatenate %39, %40, %41, %42, %43, %44, %45, %46, %47 in 1 : vector<128x16xf32>, vector<128x16xf32>, vector<128x16xf32>, vector<128x16xf32>, vector<128x16xf32>, vector<128x16xf32>, vector<128x16xf32>, vector<128x16xf32>, vector<128x16xf32> -> vector<128x144xf32>
    %c0_29 = arith.constant 0 : index
    %c0_30 = arith.constant 0 : index
    %49 = vector.load %arg8[%c0_29, %c0_30] : memref<128x144xf32, #tpu.memory_space<vmem>>, vector<128x144xf32>
    %50 = arith.mulf %48, %49 : vector<128x144xf32>
    %c0_31 = arith.constant 0 : index
    %c0_32 = arith.constant 0 : index
    %51 = vector.load %arg2[%c0_31, %c0_32] : memref<144x32xf32, #tpu.memory_space<vmem>>, vector<144x32xf32>
    %cst_33 = arith.constant dense<0.000000e+00> : vector<128x32xf32>
    %52 = tpu.matmul %50, %51, %cst_33 {dimension_numbers = #tpu.dot_dimension_numbers<[1], [0], [0], [1], [0, 0, 1, 1], [], []>} : vector<128x144xf32>, vector<144x32xf32>, vector<128x32xf32> -> vector<128x32xf32>
    %cst_34 = arith.constant dense<0.000000e+00> : vector<32xf32>
    %53 = vector.multi_reduction <add>, %52, %cst_34 [0] : vector<128x32xf32> to vector<32xf32>
    %54 = vector.shape_cast %53 : vector<32xf32> to vector<1x32xf32>
    %55 = arith.mulf %52, %52 : vector<128x32xf32>
    %cst_35 = arith.constant dense<0.000000e+00> : vector<32xf32>
    %56 = vector.multi_reduction <add>, %55, %cst_35 [0] : vector<128x32xf32> to vector<32xf32>
    %57 = vector.shape_cast %56 : vector<32xf32> to vector<1x32xf32>
    %cst_36 = arith.constant 7.812500e-03 : f32
    %58 = vector.broadcast %cst_36 : f32 to vector<1x32xf32>
    %59 = arith.mulf %54, %58 : vector<1x32xf32>
    %cst_37 = arith.constant 7.812500e-03 : f32
    %60 = vector.broadcast %cst_37 : f32 to vector<1x32xf32>
    %61 = arith.mulf %57, %60 : vector<1x32xf32>
    %62 = arith.mulf %59, %59 : vector<1x32xf32>
    %63 = arith.subf %61, %62 : vector<1x32xf32>
    %cst_38 = arith.constant 0.000000e+00 : f32
    %64 = vector.broadcast %cst_38 : f32 to vector<1x32xf32>
    %65 = arith.maximumf %63, %64 : vector<1x32xf32>
    %66 = vector.broadcast %59 : vector<1x32xf32> to vector<128x32xf32>
    %67 = arith.subf %52, %66 : vector<128x32xf32>
    %cst_39 = arith.constant 9.99999974E-6 : f32
    %68 = vector.broadcast %cst_39 : f32 to vector<1x32xf32>
    %69 = arith.addf %65, %68 : vector<1x32xf32>
    %70 = math.rsqrt %69 : vector<1x32xf32>
    %71 = vector.broadcast %70 : vector<1x32xf32> to vector<128x32xf32>
    %72 = arith.mulf %67, %71 : vector<128x32xf32>
    %cst_40 = arith.constant 0.000000e+00 : f32
    %73 = vector.broadcast %cst_40 : f32 to vector<128x32xf32>
    %74 = arith.maximumf %72, %73 : vector<128x32xf32>
    %c0_41 = arith.constant 0 : index
    %c0_42 = arith.constant 0 : index
    %75 = vector.load %arg7[%c0_41, %c0_42] : memref<128x128xf32, #tpu.memory_space<vmem>>, vector<128x128xf32>
    %cst_43 = arith.constant dense<0.000000e+00> : vector<128x32xf32>
    %76 = tpu.matmul %75, %74, %cst_43 {dimension_numbers = #tpu.dot_dimension_numbers<[1], [0], [0], [1], [0, 0, 1, 1], [], []>} : vector<128x128xf32>, vector<128x32xf32>, vector<128x32xf32> -> vector<128x32xf32>
    %77 = vector.extract_strided_slice %76 {offsets = [0, 0], sizes = [32, 32], strides = [1, 1]} : vector<128x32xf32> to vector<32x32xf32>
    %78 = vector.extract_strided_slice %76 {offsets = [32, 0], sizes = [32, 32], strides = [1, 1]} : vector<128x32xf32> to vector<32x32xf32>
    %79 = arith.maximumf %77, %78 : vector<32x32xf32>
    %80 = vector.extract_strided_slice %76 {offsets = [64, 0], sizes = [32, 32], strides = [1, 1]} : vector<128x32xf32> to vector<32x32xf32>
    %81 = vector.extract_strided_slice %76 {offsets = [96, 0], sizes = [32, 32], strides = [1, 1]} : vector<128x32xf32> to vector<32x32xf32>
    %82 = arith.maximumf %80, %81 : vector<32x32xf32>
    %83 = arith.maximumf %79, %82 : vector<32x32xf32>
    %cst_44 = arith.constant 0.000000e+00 : f32
    %84 = vector.broadcast %cst_44 : f32 to vector<8x32xf32>
    %c0_45 = arith.constant 0 : index
    %c0_46 = arith.constant 0 : index
    %85 = vector.load %arg13[%c0_45, %c0_46] : memref<48x32xf32, #tpu.memory_space<vmem>>, vector<8x32xf32>
    tpu.vector_store %arg13[%c0_45, %c0_46], %84 {strides = array<i32>} : memref<48x32xf32, #tpu.memory_space<vmem>>, vector<8x32xf32>,
    %cst_47 = arith.constant 0.000000e+00 : f32
    %86 = vector.broadcast %cst_47 : f32 to vector<8x32xf32>
    %c40 = arith.constant 40 : index
    %c0_48 = arith.constant 0 : index
    %87 = vector.load %arg13[%c40, %c0_48] : memref<48x32xf32, #tpu.memory_space<vmem>>, vector<8x32xf32>
    tpu.vector_store %arg13[%c40, %c0_48], %86 {strides = array<i32>} : memref<48x32xf32, #tpu.memory_space<vmem>>, vector<8x32xf32>,
    %c8_49 = arith.constant 8 : index
    %c0_50 = arith.constant 0 : index
    %88 = vector.load %arg13[%c8_49, %c0_50] : memref<48x32xf32, #tpu.memory_space<vmem>>, vector<32x32xf32>
    tpu.vector_store %arg13[%c8_49, %c0_50], %83 {strides = array<i32>} : memref<48x32xf32, #tpu.memory_space<vmem>>, vector<32x32xf32>,
    %c3 = arith.constant 3 : index
    %c0_51 = arith.constant 0 : index
    %89 = vector.load %arg13[%c3, %c0_51] : memref<48x32xf32, #tpu.memory_space<vmem>>, vector<32x32xf32>
    %c4 = arith.constant 4 : index
    %c0_52 = arith.constant 0 : index
    %90 = vector.load %arg13[%c4, %c0_52] : memref<48x32xf32, #tpu.memory_space<vmem>>, vector<32x32xf32>
    %c5 = arith.constant 5 : index
    %c0_53 = arith.constant 0 : index
    %91 = vector.load %arg13[%c5, %c0_53] : memref<48x32xf32, #tpu.memory_space<vmem>>, vector<32x32xf32>
    %c7_54 = arith.constant 7 : index
    %c0_55 = arith.constant 0 : index
    %92 = vector.load %arg13[%c7_54, %c0_55] : memref<48x32xf32, #tpu.memory_space<vmem>>, vector<32x32xf32>
    %c8_56 = arith.constant 8 : index
    %c0_57 = arith.constant 0 : index
    %93 = vector.load %arg13[%c8_56, %c0_57] : memref<48x32xf32, #tpu.memory_space<vmem>>, vector<32x32xf32>
    %c9_58 = arith.constant 9 : index
    %c0_59 = arith.constant 0 : index
    %94 = vector.load %arg13[%c9_58, %c0_59] : memref<48x32xf32, #tpu.memory_space<vmem>>, vector<32x32xf32>
    %c11 = arith.constant 11 : index
    %c0_60 = arith.constant 0 : index
    %95 = vector.load %arg13[%c11, %c0_60] : memref<48x32xf32, #tpu.memory_space<vmem>>, vector<32x32xf32>
    %c12 = arith.constant 12 : index
    %c0_61 = arith.constant 0 : index
    %96 = vector.load %arg13[%c12, %c0_61] : memref<48x32xf32, #tpu.memory_space<vmem>>, vector<32x32xf32>
    %c13 = arith.constant 13 : index
    %c0_62 = arith.constant 0 : index
    %97 = vector.load %arg13[%c13, %c0_62] : memref<48x32xf32, #tpu.memory_space<vmem>>, vector<32x32xf32>
    %98 = tpu.concatenate %89, %90, %91, %92, %93, %94, %95, %96, %97 in 1 : vector<32x32xf32>, vector<32x32xf32>, vector<32x32xf32>, vector<32x32xf32>, vector<32x32xf32>, vector<32x32xf32>, vector<32x32xf32>, vector<32x32xf32>, vector<32x32xf32> -> vector<32x288xf32>
    %c0_63 = arith.constant 0 : index
    %c0_64 = arith.constant 0 : index
    %99 = vector.load %arg9[%c0_63, %c0_64] : memref<32x288xf32, #tpu.memory_space<vmem>>, vector<32x288xf32>
    %100 = arith.mulf %98, %99 : vector<32x288xf32>
    %c0_65 = arith.constant 0 : index
    %c0_66 = arith.constant 0 : index
    %101 = vector.load %arg3[%c0_65, %c0_66] : memref<288x64xf32, #tpu.memory_space<vmem>>, vector<288x64xf32>
    %cst_67 = arith.constant dense<0.000000e+00> : vector<32x64xf32>
    %102 = tpu.matmul %100, %101, %cst_67 {dimension_numbers = #tpu.dot_dimension_numbers<[1], [0], [0], [1], [0, 0, 1, 1], [], []>} : vector<32x288xf32>, vector<288x64xf32>, vector<32x64xf32> -> vector<32x64xf32>
    %cst_68 = arith.constant dense<0.000000e+00> : vector<64xf32>
    %103 = vector.multi_reduction <add>, %102, %cst_68 [0] : vector<32x64xf32> to vector<64xf32>
    %104 = vector.shape_cast %103 : vector<64xf32> to vector<1x64xf32>
    %105 = arith.mulf %102, %102 : vector<32x64xf32>
    %cst_69 = arith.constant dense<0.000000e+00> : vector<64xf32>
    %106 = vector.multi_reduction <add>, %105, %cst_69 [0] : vector<32x64xf32> to vector<64xf32>
    %107 = vector.shape_cast %106 : vector<64xf32> to vector<1x64xf32>
    %cst_70 = arith.constant 3.125000e-02 : f32
    %108 = vector.broadcast %cst_70 : f32 to vector<1x64xf32>
    %109 = arith.mulf %104, %108 : vector<1x64xf32>
    %cst_71 = arith.constant 3.125000e-02 : f32
    %110 = vector.broadcast %cst_71 : f32 to vector<1x64xf32>
    %111 = arith.mulf %107, %110 : vector<1x64xf32>
    %112 = arith.mulf %109, %109 : vector<1x64xf32>
    %113 = arith.subf %111, %112 : vector<1x64xf32>
    %cst_72 = arith.constant 0.000000e+00 : f32
    %114 = vector.broadcast %cst_72 : f32 to vector<1x64xf32>
    %115 = arith.maximumf %113, %114 : vector<1x64xf32>
    %116 = vector.broadcast %109 : vector<1x64xf32> to vector<32x64xf32>
    %117 = arith.subf %102, %116 : vector<32x64xf32>
    %cst_73 = arith.constant 9.99999974E-6 : f32
    %118 = vector.broadcast %cst_73 : f32 to vector<1x64xf32>
    %119 = arith.addf %115, %118 : vector<1x64xf32>
    %120 = math.rsqrt %119 : vector<1x64xf32>
    %121 = vector.broadcast %120 : vector<1x64xf32> to vector<32x64xf32>
    %122 = arith.mulf %117, %121 : vector<32x64xf32>
    %cst_74 = arith.constant 0.000000e+00 : f32
    %123 = vector.broadcast %cst_74 : f32 to vector<32x64xf32>
    %124 = arith.maximumf %122, %123 : vector<32x64xf32>
    %c0_75 = arith.constant 0 : index
    %c0_76 = arith.constant 0 : index
    %125 = vector.load %arg10[%c0_75, %c0_76] : memref<2x32xf32, #tpu.memory_space<vmem>>, vector<2x32xf32>
    %cst_77 = arith.constant dense<0.000000e+00> : vector<2x64xf32>
    %126 = tpu.matmul %125, %124, %cst_77 {dimension_numbers = #tpu.dot_dimension_numbers<[1], [0], [0], [1], [0, 0, 1, 1], [], []>} : vector<2x32xf32>, vector<32x64xf32>, vector<2x64xf32> -> vector<2x64xf32>
    %c0_78 = arith.constant 0 : index
    %c0_79 = arith.constant 0 : index
    %127 = vector.load %arg4[%c0_78, %c0_79] : memref<64x4xf32, #tpu.memory_space<vmem>>, vector<64x4xf32>
    %cst_80 = arith.constant dense<0.000000e+00> : vector<2x4xf32>
    %128 = tpu.matmul %126, %127, %cst_80 {dimension_numbers = #tpu.dot_dimension_numbers<[1], [0], [0], [1], [0, 0, 1, 1], [], []>} : vector<2x64xf32>, vector<64x4xf32>, vector<2x4xf32> -> vector<2x4xf32>
    %c0_81 = arith.constant 0 : index
    %c0_82 = arith.constant 0 : index
    %129 = vector.load %arg5[%c0_81, %c0_82] : memref<1x4xf32, #tpu.memory_space<vmem>>, vector<1x4xf32>
    %130 = vector.broadcast %129 : vector<1x4xf32> to vector<2x4xf32>
    %131 = arith.addf %128, %130 : vector<2x4xf32>
    %c0_83 = arith.constant 0 : index
    %c0_84 = arith.constant 0 : index
    %132 = vector.load %arg11[%c0_83, %c0_84] : memref<2x4xf32, #tpu.memory_space<vmem>>, vector<2x4xf32>
    tpu.vector_store %arg11[%c0_83, %c0_84], %131 {strides = array<i32>} : memref<2x4xf32, #tpu.memory_space<vmem>>, vector<2x4xf32>,
    return
  }
}

</mosaic_0001>

<llo_original>
// kernel: simple_cnn_forward.1
$region0: #{simple_cnn_forward.1}
  #allocation0 [shape = 'u32[]', space=smem, size = 0x4, offset = 0x4, fixed_abs, tag = 'smem constant byte address 0x4 - core index']
  #allocation1 [shape = 'u32[144,128]{1,0:T(1,128)}', space=vmem, size = 0x12000, scoped, tag = 'internal scratch']
  #allocation2 [shape = 'f32[160,16]{1,0:T(8,128)}', space=vmem, size = 0x14000, scoped, tag = 'scratch operand']
  #allocation3 [shape = 'f32[48,32]{1,0:T(8,128)}', space=vmem, size = 0x6000, scoped, tag = 'scratch operand']
  %s0 = inlined_call_operand.vmem [shape: f32[512,9], index: 0, kind: input, shape index: {}]
  %s1 = inlined_call_operand.vmem [shape: f32[9,16], index: 1, kind: input, shape index: {}]
  %s2 = inlined_call_operand.vmem [shape: f32[144,32], index: 2, kind: input, shape index: {}]
  %s3 = inlined_call_operand.vmem [shape: f32[288,64], index: 3, kind: input, shape index: {}]
  %s4 = inlined_call_operand.vmem [shape: f32[64,4], index: 4, kind: input, shape index: {}]
  %s5 = inlined_call_operand.vmem [shape: f32[1,4], index: 5, kind: input, shape index: {}]
  %s6 = inlined_call_operand.hbm [shape: f32[512,512], index: 6, kind: input, shape index: {}]
  %s7 = inlined_call_operand.vmem [shape: f32[128,128], index: 7, kind: input, shape index: {}]
  %s8 = inlined_call_operand.vmem [shape: f32[128,144], index: 8, kind: input, shape index: {}]
  %s9 = inlined_call_operand.vmem [shape: f32[32,288], index: 9, kind: input, shape index: {}]
  %s10 = inlined_call_operand.vmem [shape: f32[2,32], index: 10, kind: input, shape index: {}]
  %s11 = inlined_call_operand.hbm [shape: f32[2,4], index: 11, kind: output, shape index: {}]
  %s12 = sld [smem:[#allocation0]]
  $region58: #{simple_cnn_forward.1} parent=0
    _
  %s14 = ssub.s32 1, %s12
  %s15 = scalar_select 0, %s14, %s12
  $region1: #{simple_cnn_forward.1} parent=0
    #allocation4 [shape = 'u8[1048576]{0}', space=vmem, size = 0x100000, scoped, tag = 'input window, operand 6, single buffered']
    #allocation5 [shape = 's32[1]{0}', space=sflag, size = 0x4, scoped, tag = 'scoped memory for simple_cnn_forward.1']
    #allocation6 [shape = 's32[1]{0}', space=sflag, size = 0x4, scoped, tag = 'scoped memory for simple_cnn_forward.1']
    #allocation7 [shape = 'u8[1024]{0}', space=vmem, size = 0x400, scoped, tag = 'output window, operand 0, single buffered']
    %16 = vsyncpa [#allocation5], 0
    %17 = vsyncpa [#allocation6], 0
    // Predicated region
    $region2: #{simple_cnn_forward.1} parent=1 // pred_check
      _
    $region3: #{simple_cnn_forward.1} parent=1 // pred_check_branch
      %19 = sbr.rel (0) target = $region5
    $region4: #{simple_cnn_forward.1} parent=1 // pred_region
      _
    $region5: #{simple_cnn_forward.1} parent=1 // pred_fallthru
      _
    // Predicated region
    $region6: #{simple_cnn_forward.1} parent=1 // pred_check
      _
    $region7: #{simple_cnn_forward.1} parent=1 // pred_check_branch
      %21 = sbr.rel (0) target = $region9
    $region8: #{simple_cnn_forward.1} parent=1 // pred_region
      _
    $region9: #{simple_cnn_forward.1} parent=1 // pred_fallthru
      _
    // Predicated region
    $region10: #{simple_cnn_forward.1} parent=1 // pred_check
      _
    $region11: #{simple_cnn_forward.1} parent=1 // pred_check_branch
      %23 = sbr.rel (0) target = $region13
    $region12: #{simple_cnn_forward.1} parent=1 // pred_region
      _
    $region13: #{simple_cnn_forward.1} parent=1 // pred_fallthru
      _
    // Predicated region
    $region14: #{simple_cnn_forward.1} parent=1 // pred_check
      _
    $region15: #{simple_cnn_forward.1} parent=1 // pred_check_branch
      %25 = sbr.rel (0) target = $region17
    $region16: #{simple_cnn_forward.1} parent=1 // pred_region
      _
    $region17: #{simple_cnn_forward.1} parent=1 // pred_fallthru
      _
    // Predicated region
    $region18: #{simple_cnn_forward.1} parent=1 // pred_check
      _
    $region19: #{simple_cnn_forward.1} parent=1 // pred_check_branch
      %27 = sbr.rel (0) target = $region21
    $region20: #{simple_cnn_forward.1} parent=1 // pred_region
      _
    $region21: #{simple_cnn_forward.1} parent=1 // pred_fallthru
      _
    // Predicated region
    $region22: #{simple_cnn_forward.1} parent=1 // pred_check
      _
    $region23: #{simple_cnn_forward.1} parent=1 // pred_check_branch
      %29 = sbr.rel (0) target = $region25
    $region24: #{simple_cnn_forward.1} parent=1 // pred_region
      _
    $region25: #{simple_cnn_forward.1} parent=1 // pred_fallthru
      _
    // Predicated region
    $region26: #{simple_cnn_forward.1} parent=1 // pred_check
      _
    $region27: #{simple_cnn_forward.1} parent=1 // pred_check_branch
      %31 = sbr.rel (0) target = $region29
    $region28: #{simple_cnn_forward.1} parent=1 // pred_region
      %s33 = ssub.s32 32768, 32768
      %34 = vsyncadd [#allocation5], %s33
      %s35 = sshll.u32 [#allocation4], 4
      %s36 = int_to_ptr.vmem [resolvable:$true] %s35
      %41 = dma.hbm_to_vmem [thread:$0]  %s6, 32768, %s36, [#allocation5], 512, 512, 32
    $region29: #{simple_cnn_forward.1} parent=1 // pred_fallthru
      _
    // Predicated region
    $region30: #{simple_cnn_forward.1} parent=1 // pred_check
      _
    $region31: #{simple_cnn_forward.1} parent=1 // pred_check_branch
      %43 = sbr.rel (0) target = $region33
    $region32: #{simple_cnn_forward.1} parent=1 // pred_region
      _
    $region33: #{simple_cnn_forward.1} parent=1 // pred_fallthru
      _
    // Predicated region
    $region34: #{simple_cnn_forward.1} parent=1 // pred_check
      _
    $region35: #{simple_cnn_forward.1} parent=1 // pred_check_branch
      %45 = sbr.rel (0) target = $region37
    $region36: #{simple_cnn_forward.1} parent=1 // pred_region
      _
    $region37: #{simple_cnn_forward.1} parent=1 // pred_fallthru
      _
    // Predicated region
    $region38: #{simple_cnn_forward.1} parent=1 // pred_check
      _
    $region39: #{simple_cnn_forward.1} parent=1 // pred_check_branch
      %47 = sbr.rel (0) target = $region41
    $region40: #{simple_cnn_forward.1} parent=1 // pred_region
      _
    $region41: #{simple_cnn_forward.1} parent=1 // pred_fallthru
      _
    // Predicated region
    $region42: #{simple_cnn_forward.1} parent=1 // pred_check
      _
    $region43: #{simple_cnn_forward.1} parent=1 // pred_check_branch
      %49 = sbr.rel (0) target = $region45
    $region44: #{simple_cnn_forward.1} parent=1 // pred_region
      _
    $region45: #{simple_cnn_forward.1} parent=1 // pred_fallthru
      _
    // Predicated region
    $region46: #{simple_cnn_forward.1} parent=1 // pred_check
      _
    $region47: #{simple_cnn_forward.1} parent=1 // pred_check_branch
      %51 = sbr.rel (0) target = $region49
    $region48: #{simple_cnn_forward.1} parent=1 // pred_region
      %52 = dma.done [#allocation5], 32768
    $region49: #{simple_cnn_forward.1} parent=1 // pred_fallthru
      _
    %v53 = vld [vmem:[%s0] sm:$0xff]
    %v54 = vld [vmem:[%s0 + $0x8] sm:$0xff]
    %v55 = vld [vmem:[%s0 + $0x10] sm:$0xff]
    %v56 = vld [vmem:[%s0 + $0x18] sm:$0xff]
    %v57 = vld [vmem:[%s0 + $0x20] sm:$0xff]
    %v58 = vld [vmem:[%s0 + $0x28] sm:$0xff]
    %v59 = vld [vmem:[%s0 + $0x30] sm:$0xff]
    %v60 = vld [vmem:[%s0 + $0x38] sm:$0xff]
    %v61 = vld [vmem:[%s0 + $0x40] sm:$0xff]
    %v62 = vld [vmem:[%s0 + $0x48] sm:$0xff]
    %v63 = vld [vmem:[%s0 + $0x50] sm:$0xff]
    %v64 = vld [vmem:[%s0 + $0x58] sm:$0xff]
    %v65 = vld [vmem:[%s0 + $0x60] sm:$0xff]
    %v66 = vld [vmem:[%s0 + $0x68] sm:$0xff]
    %v67 = vld [vmem:[%s0 + $0x70] sm:$0xff]
    %v68 = vld [vmem:[%s0 + $0x78] sm:$0xff]
    %v69 = vld [vmem:[%s0 + $0x80] sm:$0xff]
    %v70 = vld [vmem:[%s0 + $0x88] sm:$0xff]
    %v71 = vld [vmem:[%s0 + $0x90] sm:$0xff]
    %v72 = vld [vmem:[%s0 + $0x98] sm:$0xff]
    %v73 = vld [vmem:[%s0 + $0xa0] sm:$0xff]
    %v74 = vld [vmem:[%s0 + $0xa8] sm:$0xff]
    %v75 = vld [vmem:[%s0 + $0xb0] sm:$0xff]
    %v76 = vld [vmem:[%s0 + $0xb8] sm:$0xff]
    %v77 = vld [vmem:[%s0 + $0xc0] sm:$0xff]
    %v78 = vld [vmem:[%s0 + $0xc8] sm:$0xff]
    %v79 = vld [vmem:[%s0 + $0xd0] sm:$0xff]
    %v80 = vld [vmem:[%s0 + $0xd8] sm:$0xff]
    %v81 = vld [vmem:[%s0 + $0xe0] sm:$0xff]
    %v82 = vld [vmem:[%s0 + $0xe8] sm:$0xff]
    %v83 = vld [vmem:[%s0 + $0xf0] sm:$0xff]
    %v84 = vld [vmem:[%s0 + $0xf8] sm:$0xff]
    %v85 = vld [vmem:[%s0 + $0x100] sm:$0xff]
    %v86 = vld [vmem:[%s0 + $0x108] sm:$0xff]
    %v87 = vld [vmem:[%s0 + $0x110] sm:$0xff]
    %v88 = vld [vmem:[%s0 + $0x118] sm:$0xff]
    %v89 = vld [vmem:[%s0 + $0x120] sm:$0xff]
    %v90 = vld [vmem:[%s0 + $0x128] sm:$0xff]
    %v91 = vld [vmem:[%s0 + $0x130] sm:$0xff]
    %v92 = vld [vmem:[%s0 + $0x138] sm:$0xff]
    %v93 = vld [vmem:[%s0 + $0x140] sm:$0xff]
    %v94 = vld [vmem:[%s0 + $0x148] sm:$0xff]
    %v95 = vld [vmem:[%s0 + $0x150] sm:$0xff]
    %v96 = vld [vmem:[%s0 + $0x158] sm:$0xff]
    %v97 = vld [vmem:[%s0 + $0x160] sm:$0xff]
    %v98 = vld [vmem:[%s0 + $0x168] sm:$0xff]
    %v99 = vld [vmem:[%s0 + $0x170] sm:$0xff]
    %v100 = vld [vmem:[%s0 + $0x178] sm:$0xff]
    %v101 = vld [vmem:[%s0 + $0x180] sm:$0xff]
    %v102 = vld [vmem:[%s0 + $0x188] sm:$0xff]
    %v103 = vld [vmem:[%s0 + $0x190] sm:$0xff]
    %v104 = vld [vmem:[%s0 + $0x198] sm:$0xff]
    %v105 = vld [vmem:[%s0 + $0x1a0] sm:$0xff]
    %v106 = vld [vmem:[%s0 + $0x1a8] sm:$0xff]
    %v107 = vld [vmem:[%s0 + $0x1b0] sm:$0xff]
    %v108 = vld [vmem:[%s0 + $0x1b8] sm:$0xff]
    %v109 = vld [vmem:[%s0 + $0x1c0] sm:$0xff]
    %v110 = vld [vmem:[%s0 + $0x1c8] sm:$0xff]
    %v111 = vld [vmem:[%s0 + $0x1d0] sm:$0xff]
    %v112 = vld [vmem:[%s0 + $0x1d8] sm:$0xff]
    %v113 = vld [vmem:[%s0 + $0x1e0] sm:$0xff]
    %v114 = vld [vmem:[%s0 + $0x1e8] sm:$0xff]
    %v115 = vld [vmem:[%s0 + $0x1f0] sm:$0xff]
    %v116 = vld [vmem:[%s0 + $0x1f8] sm:$0xff]
    %v117 = vld [vmem:[%s1] sm:$0xff]
    %v118 = vld [vmem:[%s1 + $0x8] sm:$0x1]
    %vm119 = vcmask 72704
    %v121 = vsel %vm119, %v53, 0
    %v124 = vsel %vm119, %v54, 0
    %v127 = vsel %vm119, %v55, 0
    %v130 = vsel %vm119, %v56, 0
    %v133 = vsel %vm119, %v57, 0
    %v136 = vsel %vm119, %v58, 0
    %v139 = vsel %vm119, %v59, 0
    %v142 = vsel %vm119, %v60, 0
    %v145 = vsel %vm119, %v61, 0
    %v148 = vsel %vm119, %v62, 0
    %v151 = vsel %vm119, %v63, 0
    %v154 = vsel %vm119, %v64, 0
    %v157 = vsel %vm119, %v65, 0
    %v160 = vsel %vm119, %v66, 0
    %v163 = vsel %vm119, %v67, 0
    %v166 = vsel %vm119, %v68, 0
    %v169 = vsel %vm119, %v69, 0
    %v172 = vsel %vm119, %v70, 0
    %v175 = vsel %vm119, %v71, 0
    %v178 = vsel %vm119, %v72, 0
    %v181 = vsel %vm119, %v73, 0
    %v184 = vsel %vm119, %v74, 0
    %v187 = vsel %vm119, %v75, 0
    %v190 = vsel %vm119, %v76, 0
    %v193 = vsel %vm119, %v77, 0
    %v196 = vsel %vm119, %v78, 0
    %v199 = vsel %vm119, %v79, 0
    %v202 = vsel %vm119, %v80, 0
    %v205 = vsel %vm119, %v81, 0
    %v208 = vsel %vm119, %v82, 0
    %v211 = vsel %vm119, %v83, 0
    %v214 = vsel %vm119, %v84, 0
    %v217 = vsel %vm119, %v85, 0
    %v220 = vsel %vm119, %v86, 0
    %v223 = vsel %vm119, %v87, 0
    %v226 = vsel %vm119, %v88, 0
    %v229 = vsel %vm119, %v89, 0
    %v232 = vsel %vm119, %v90, 0
    %v235 = vsel %vm119, %v91, 0
    %v238 = vsel %vm119, %v92, 0
    %v241 = vsel %vm119, %v93, 0
    %v244 = vsel %vm119, %v94, 0
    %v247 = vsel %vm119, %v95, 0
    %v250 = vsel %vm119, %v96, 0
    %v253 = vsel %vm119, %v97, 0
    %v256 = vsel %vm119, %v98, 0
    %v259 = vsel %vm119, %v99, 0
    %v262 = vsel %vm119, %v100, 0
    %v265 = vsel %vm119, %v101, 0
    %v268 = vsel %vm119, %v102, 0
    %v271 = vsel %vm119, %v103, 0
    %v274 = vsel %vm119, %v104, 0
    %v277 = vsel %vm119, %v105, 0
    %v280 = vsel %vm119, %v106, 0
    %v283 = vsel %vm119, %v107, 0
    %v286 = vsel %vm119, %v108, 0
    %v289 = vsel %vm119, %v109, 0
    %v292 = vsel %vm119, %v110, 0
    %v295 = vsel %vm119, %v111, 0
    %v298 = vsel %vm119, %v112, 0
    %v301 = vsel %vm119, %v113, 0
    %v304 = vsel %vm119, %v114, 0
    %v307 = vsel %vm119, %v115, 0
    %v310 = vsel %vm119, %v116, 0
    %vm312 = vcmask 1040384
    %v314 = vsel %vm312, %v118, 0
    %316 = vmatprep.subr.mxu0 0.0
    %317 = vmatpush1.msra.mxu0 %v117
    %318 = vmatprep.subr.mxu0 0.0
    %319 = vmatpush1.msra.mxu0 %v314
    %320 = vmatprep.subr.mxu0 0.0
    %321 = vmatpush1.msra.mxu0 0.0
    %322 = vmatprep.subr.mxu0 0.0
    %323 = vmatpush1.msra.mxu0 0.0
    %324 = vmatprep.subr.mxu0 0.0
    %325 = vmatpush1.msra.mxu0 0.0
    %326 = vmatprep.subr.mxu0 0.0
    %327 = vmatpush1.msra.mxu0 0.0
    %328 = vmatprep.subr.mxu0 0.0
    %329 = vmatpush1.msra.mxu0 0.0
    %330 = vmatprep.subr.mxu0 0.0
    %331 = vmatpush1.msra.mxu0 0.0
    %332 = vmatprep.subr.mxu0 0.0
    %333 = vmatpush1.msra.mxu0 0.0
    %334 = vmatprep.subr.mxu0 0.0
    %335 = vmatpush1.msra.mxu0 0.0
    %336 = vmatprep.subr.mxu0 0.0
    %337 = vmatpush1.msra.mxu0 0.0
    %338 = vmatprep.subr.mxu0 0.0
    %339 = vmatpush1.msra.mxu0 0.0
    %340 = vmatprep.subr.mxu0 0.0
    %341 = vmatpush1.msra.mxu0 0.0
    %342 = vmatprep.subr.mxu0 0.0
    %343 = vmatpush1.msra.mxu0 0.0
    %344 = vmatprep.subr.mxu0 0.0
    %345 = vmatpush1.msra.mxu0 0.0
    %346 = vmatprep.subr.mxu0 0.0
    %347 = vmatpush1.msra.mxu0 0.0
    %348 = vmatprep.subr.mxu0 0.0
    %349 = vmatpush1.msra.mxu0 0.0
    %350 = vmatprep.subr.mxu0 0.0
    %351 = vmatpush1.msra.mxu0 0.0
    %352 = vmatprep.subr.mxu0 0.0
    %353 = vmatpush1.msra.mxu0 0.0
    %354 = vmatprep.subr.mxu0 0.0
    %355 = vmatpush1.msra.mxu0 0.0
    %356 = vmatprep.subr.mxu0 0.0
    %357 = vmatpush1.msra.mxu0 0.0
    %358 = vmatprep.subr.mxu0 0.0
    %359 = vmatpush1.msra.mxu0 0.0
    %360 = vmatprep.subr.mxu0 0.0
    %361 = vmatpush1.msra.mxu0 0.0
    %362 = vmatprep.subr.mxu0 0.0
    %363 = vmatpush1.msra.mxu0 0.0
    %364 = vmatprep.subr.mxu0 0.0
    %365 = vmatpush1.msra.mxu0 0.0
    %366 = vmatprep.subr.mxu0 0.0
    %367 = vmatpush1.msra.mxu0 0.0
    %368 = vmatprep.subr.mxu0 0.0
    %369 = vmatpush1.msra.mxu0 0.0
    %370 = vmatprep.subr.mxu0 0.0
    %371 = vmatpush1.msra.mxu0 0.0
    %372 = vmatprep.subr.mxu0 0.0
    %373 = vmatpush1.msra.mxu0 0.0
    %374 = vmatprep.subr.mxu0 0.0
    %375 = vmatpush1.msra.mxu0 0.0
    %376 = vmatprep.subr.mxu0 0.0
    %377 = vmatpush1.msra.mxu0 0.0
    %378 = vmatprep.subr.mxu0 0.0
    %379 = vmatpush1.msra.mxu0 0.0
    %380 = vmatprep.mubr.f32.mxu0 0.0
    %381 = vmatmul.mubr.f32.gmra.mrb[0].mxu0 %v121
    %v382 = vpop.f32.mrb[0].mxu0
    %v383 = vadd.f32 0.0, %v382
    %v384 = vpop.f32.mrb[0].mxu0
    %385 = vmatprep.mubr.f32.mxu0 0.0
    %386 = vmatmul.mubr.f32.gmra.mrb[0].mxu0 %v124
    %v387 = vpop.f32.mrb[0].mxu0
    %v388 = vadd.f32 0.0, %v387
    %v389 = vpop.f32.mrb[0].mxu0
    %390 = vmatprep.mubr.f32.mxu0 0.0
    %391 = vmatmul.mubr.f32.gmra.mrb[0].mxu0 %v127
    %v392 = vpop.f32.mrb[0].mxu0
    %v393 = vadd.f32 0.0, %v392
    %v394 = vpop.f32.mrb[0].mxu0
    %395 = vmatprep.mubr.f32.mxu0 0.0
    %396 = vmatmul.mubr.f32.gmra.mrb[0].mxu0 %v130
    %v397 = vpop.f32.mrb[0].mxu0
    %v398 = vadd.f32 0.0, %v397
    %v399 = vpop.f32.mrb[0].mxu0
    %400 = vmatprep.mubr.f32.mxu0 0.0
    %401 = vmatmul.mubr.f32.gmra.mrb[0].mxu0 %v133
    %v402 = vpop.f32.mrb[0].mxu0
    %v403 = vadd.f32 0.0, %v402
    %v404 = vpop.f32.mrb[0].mxu0
    %405 = vmatprep.mubr.f32.mxu0 0.0
    %406 = vmatmul.mubr.f32.gmra.mrb[0].mxu0 %v136
    %v407 = vpop.f32.mrb[0].mxu0
    %v408 = vadd.f32 0.0, %v407
    %v409 = vpop.f32.mrb[0].mxu0
    %410 = vmatprep.mubr.f32.mxu0 0.0
    %411 = vmatmul.mubr.f32.gmra.mrb[0].mxu0 %v139
    %v412 = vpop.f32.mrb[0].mxu0
    %v413 = vadd.f32 0.0, %v412
    %v414 = vpop.f32.mrb[0].mxu0
    %415 = vmatprep.mubr.f32.mxu0 0.0
    %416 = vmatmul.mubr.f32.gmra.mrb[0].mxu0 %v142
    %v417 = vpop.f32.mrb[0].mxu0
    %v418 = vadd.f32 0.0, %v417
    %v419 = vpop.f32.mrb[0].mxu0
    %420 = vmatprep.mubr.f32.mxu0 0.0
    %421 = vmatmul.mubr.f32.gmra.mrb[0].mxu0 %v145
    %v422 = vpop.f32.mrb[0].mxu0
    %v423 = vadd.f32 0.0, %v422
    %v424 = vpop.f32.mrb[0].mxu0
    %425 = vmatprep.mubr.f32.mxu0 0.0
    %426 = vmatmul.mubr.f32.gmra.mrb[0].mxu0 %v148
    %v427 = vpop.f32.mrb[0].mxu0
    %v428 = vadd.f32 0.0, %v427
    %v429 = vpop.f32.mrb[0].mxu0
    %430 = vmatprep.mubr.f32.mxu0 0.0
    %431 = vmatmul.mubr.f32.gmra.mrb[0].mxu0 %v151
    %v432 = vpop.f32.mrb[0].mxu0
    %v433 = vadd.f32 0.0, %v432
    %v434 = vpop.f32.mrb[0].mxu0
    %435 = vmatprep.mubr.f32.mxu0 0.0
    %436 = vmatmul.mubr.f32.gmra.mrb[0].mxu0 %v154
    %v437 = vpop.f32.mrb[0].mxu0
    %v438 = vadd.f32 0.0, %v437
    %v439 = vpop.f32.mrb[0].mxu0
    %440 = vmatprep.mubr.f32.mxu0 0.0
    %441 = vmatmul.mubr.f32.gmra.mrb[0].mxu0 %v157
    %v442 = vpop.f32.mrb[0].mxu0
    %v443 = vadd.f32 0.0, %v442
    %v444 = vpop.f32.mrb[0].mxu0
    %445 = vmatprep.mubr.f32.mxu0 0.0
    %446 = vmatmul.mubr.f32.gmra.mrb[0].mxu0 %v160
    %v447 = vpop.f32.mrb[0].mxu0
    %v448 = vadd.f32 0.0, %v447
    %v449 = vpop.f32.mrb[0].mxu0
    %450 = vmatprep.mubr.f32.mxu0 0.0
    %451 = vmatmul.mubr.f32.gmra.mrb[0].mxu0 %v163
    %v452 = vpop.f32.mrb[0].mxu0
    %v453 = vadd.f32 0.0, %v452
    %v454 = vpop.f32.mrb[0].mxu0
    %455 = vmatprep.mubr.f32.mxu0 0.0
    %456 = vmatmul.mubr.f32.gmra.mrb[0].mxu0 %v166
    %v457 = vpop.f32.mrb[0].mxu0
    %v458 = vadd.f32 0.0, %v457
    %v459 = vpop.f32.mrb[0].mxu0
    %460 = vmatprep.mubr.f32.mxu0 0.0
    %461 = vmatmul.mubr.f32.gmra.mrb[0].mxu0 %v169
    %v462 = vpop.f32.mrb[0].mxu0
    %v463 = vadd.f32 0.0, %v462
    %v464 = vpop.f32.mrb[0].mxu0
    %465 = vmatprep.mubr.f32.mxu0 0.0
    %466 = vmatmul.mubr.f32.gmra.mrb[0].mxu0 %v172
    %v467 = vpop.f32.mrb[0].mxu0
    %v468 = vadd.f32 0.0, %v467
    %v469 = vpop.f32.mrb[0].mxu0
    %470 = vmatprep.mubr.f32.mxu0 0.0
    %471 = vmatmul.mubr.f32.gmra.mrb[0].mxu0 %v175
    %v472 = vpop.f32.mrb[0].mxu0
    %v473 = vadd.f32 0.0, %v472
    %v474 = vpop.f32.mrb[0].mxu0
    %475 = vmatprep.mubr.f32.mxu0 0.0
    %476 = vmatmul.mubr.f32.gmra.mrb[0].mxu0 %v178
    %v477 = vpop.f32.mrb[0].mxu0
    %v478 = vadd.f32 0.0, %v477
    %v479 = vpop.f32.mrb[0].mxu0
    %480 = vmatprep.mubr.f32.mxu0 0.0
    %481 = vmatmul.mubr.f32.gmra.mrb[0].mxu0 %v181
    %v482 = vpop.f32.mrb[0].mxu0
    %v483 = vadd.f32 0.0, %v482
    %v484 = vpop.f32.mrb[0].mxu0
    %485 = vmatprep.mubr.f32.mxu0 0.0
    %486 = vmatmul.mubr.f32.gmra.mrb[0].mxu0 %v184
    %v487 = vpop.f32.mrb[0].mxu0
    %v488 = vadd.f32 0.0, %v487
    %v489 = vpop.f32.mrb[0].mxu0
    %490 = vmatprep.mubr.f32.mxu0 0.0
    %491 = vmatmul.mubr.f32.gmra.mrb[0].mxu0 %v187
    %v492 = vpop.f32.mrb[0].mxu0
    %v493 = vadd.f32 0.0, %v492
    %v494 = vpop.f32.mrb[0].mxu0
    %495 = vmatprep.mubr.f32.mxu0 0.0
    %496 = vmatmul.mubr.f32.gmra.mrb[0].mxu0 %v190
    %v497 = vpop.f32.mrb[0].mxu0
    %v498 = vadd.f32 0.0, %v497
    %v499 = vpop.f32.mrb[0].mxu0
    %500 = vmatprep.mubr.f32.mxu0 0.0
    %501 = vmatmul.mubr.f32.gmra.mrb[0].mxu0 %v193
    %v502 = vpop.f32.mrb[0].mxu0
    %v503 = vadd.f32 0.0, %v502
    %v504 = vpop.f32.mrb[0].mxu0
    %505 = vmatprep.mubr.f32.mxu0 0.0
    %506 = vmatmul.mubr.f32.gmra.mrb[0].mxu0 %v196
    %v507 = vpop.f32.mrb[0].mxu0
    %v508 = vadd.f32 0.0, %v507
    %v509 = vpop.f32.mrb[0].mxu0
    %510 = vmatprep.mubr.f32.mxu0 0.0
    %511 = vmatmul.mubr.f32.gmra.mrb[0].mxu0 %v199
    %v512 = vpop.f32.mrb[0].mxu0
    %v513 = vadd.f32 0.0, %v512
    %v514 = vpop.f32.mrb[0].mxu0
    %515 = vmatprep.mubr.f32.mxu0 0.0
    %516 = vmatmul.mubr.f32.gmra.mrb[0].mxu0 %v202
    %v517 = vpop.f32.mrb[0].mxu0
    %v518 = vadd.f32 0.0, %v517
    %v519 = vpop.f32.mrb[0].mxu0
    %520 = vmatprep.mubr.f32.mxu0 0.0
    %521 = vmatmul.mubr.f32.gmra.mrb[0].mxu0 %v205
    %v522 = vpop.f32.mrb[0].mxu0
    %v523 = vadd.f32 0.0, %v522
    %v524 = vpop.f32.mrb[0].mxu0
    %525 = vmatprep.mubr.f32.mxu0 0.0
    %526 = vmatmul.mubr.f32.gmra.mrb[0].mxu0 %v208
    %v527 = vpop.f32.mrb[0].mxu0
    %v528 = vadd.f32 0.0, %v527
    %v529 = vpop.f32.mrb[0].mxu0
    %530 = vmatprep.mubr.f32.mxu0 0.0
    %531 = vmatmul.mubr.f32.gmra.mrb[0].mxu0 %v211
    %v532 = vpop.f32.mrb[0].mxu0
    %v533 = vadd.f32 0.0, %v532
    %v534 = vpop.f32.mrb[0].mxu0
    %535 = vmatprep.mubr.f32.mxu0 0.0
    %536 = vmatmul.mubr.f32.gmra.mrb[0].mxu0 %v214
    %v537 = vpop.f32.mrb[0].mxu0
    %v538 = vadd.f32 0.0, %v537
    %v539 = vpop.f32.mrb[0].mxu0
    %540 = vmatprep.mubr.f32.mxu0 0.0
    %541 = vmatmul.mubr.f32.gmra.mrb[0].mxu0 %v217
    %v542 = vpop.f32.mrb[0].mxu0
    %v543 = vadd.f32 0.0, %v542
    %v544 = vpop.f32.mrb[0].mxu0
    %545 = vmatprep.mubr.f32.mxu0 0.0
    %546 = vmatmul.mubr.f32.gmra.mrb[0].mxu0 %v220
    %v547 = vpop.f32.mrb[0].mxu0
    %v548 = vadd.f32 0.0, %v547
    %v549 = vpop.f32.mrb[0].mxu0
    %550 = vmatprep.mubr.f32.mxu0 0.0
    %551 = vmatmul.mubr.f32.gmra.mrb[0].mxu0 %v223
    %v552 = vpop.f32.mrb[0].mxu0
    %v553 = vadd.f32 0.0, %v552
    %v554 = vpop.f32.mrb[0].mxu0
    %555 = vmatprep.mubr.f32.mxu0 0.0
    %556 = vmatmul.mubr.f32.gmra.mrb[0].mxu0 %v226
    %v557 = vpop.f32.mrb[0].mxu0
    %v558 = vadd.f32 0.0, %v557
    %v559 = vpop.f32.mrb[0].mxu0
    %560 = vmatprep.mubr.f32.mxu0 0.0
    %561 = vmatmul.mubr.f32.gmra.mrb[0].mxu0 %v229
    %v562 = vpop.f32.mrb[0].mxu0
    %v563 = vadd.f32 0.0, %v562
    %v564 = vpop.f32.mrb[0].mxu0
    %565 = vmatprep.mubr.f32.mxu0 0.0
    %566 = vmatmul.mubr.f32.gmra.mrb[0].mxu0 %v232
    %v567 = vpop.f32.mrb[0].mxu0
    %v568 = vadd.f32 0.0, %v567
    %v569 = vpop.f32.mrb[0].mxu0
    %570 = vmatprep.mubr.f32.mxu0 0.0
    %571 = vmatmul.mubr.f32.gmra.mrb[0].mxu0 %v235
    %v572 = vpop.f32.mrb[0].mxu0
    %v573 = vadd.f32 0.0, %v572
    %v574 = vpop.f32.mrb[0].mxu0
    %575 = vmatprep.mubr.f32.mxu0 0.0
    %576 = vmatmul.mubr.f32.gmra.mrb[0].mxu0 %v238
    %v577 = vpop.f32.mrb[0].mxu0
    %v578 = vadd.f32 0.0, %v577
    %v579 = vpop.f32.mrb[0].mxu0
    %580 = vmatprep.mubr.f32.mxu0 0.0
    %581 = vmatmul.mubr.f32.gmra.mrb[0].mxu0 %v241
    %v582 = vpop.f32.mrb[0].mxu0
    %v583 = vadd.f32 0.0, %v582
    %v584 = vpop.f32.mrb[0].mxu0
    %585 = vmatprep.mubr.f32.mxu0 0.0
    %586 = vmatmul.mubr.f32.gmra.mrb[0].mxu0 %v244
    %v587 = vpop.f32.mrb[0].mxu0
    %v588 = vadd.f32 0.0, %v587
    %v589 = vpop.f32.mrb[0].mxu0
    %590 = vmatprep.mubr.f32.mxu0 0.0
    %591 = vmatmul.mubr.f32.gmra.mrb[0].mxu0 %v247
    %v592 = vpop.f32.mrb[0].mxu0
    %v593 = vadd.f32 0.0, %v592
    %v594 = vpop.f32.mrb[0].mxu0
    %595 = vmatprep.mubr.f32.mxu0 0.0
    %596 = vmatmul.mubr.f32.gmra.mrb[0].mxu0 %v250
    %v597 = vpop.f32.mrb[0].mxu0
    %v598 = vadd.f32 0.0, %v597
    %v599 = vpop.f32.mrb[0].mxu0
    %600 = vmatprep.mubr.f32.mxu0 0.0
    %601 = vmatmul.mubr.f32.gmra.mrb[0].mxu0 %v253
    %v602 = vpop.f32.mrb[0].mxu0
    %v603 = vadd.f32 0.0, %v602
    %v604 = vpop.f32.mrb[0].mxu0
    %605 = vmatprep.mubr.f32.mxu0 0.0
    %606 = vmatmul.mubr.f32.gmra.mrb[0].mxu0 %v256
    %v607 = vpop.f32.mrb[0].mxu0
    %v608 = vadd.f32 0.0, %v607
    %v609 = vpop.f32.mrb[0].mxu0
    %610 = vmatprep.mubr.f32.mxu0 0.0
    %611 = vmatmul.mubr.f32.gmra.mrb[0].mxu0 %v259
    %v612 = vpop.f32.mrb[0].mxu0
    %v613 = vadd.f32 0.0, %v612
    %v614 = vpop.f32.mrb[0].mxu0
    %615 = vmatprep.mubr.f32.mxu0 0.0
    %616 = vmatmul.mubr.f32.gmra.mrb[0].mxu0 %v262
    %v617 = vpop.f32.mrb[0].mxu0
    %v618 = vadd.f32 0.0, %v617
    %v619 = vpop.f32.mrb[0].mxu0
    %620 = vmatprep.mubr.f32.mxu0 0.0
    %621 = vmatmul.mubr.f32.gmra.mrb[0].mxu0 %v265
    %v622 = vpop.f32.mrb[0].mxu0
    %v623 = vadd.f32 0.0, %v622
    %v624 = vpop.f32.mrb[0].mxu0
    %625 = vmatprep.mubr.f32.mxu0 0.0
    %626 = vmatmul.mubr.f32.gmra.mrb[0].mxu0 %v268
    %v627 = vpop.f32.mrb[0].mxu0
    %v628 = vadd.f32 0.0, %v627
    %v629 = vpop.f32.mrb[0].mxu0
    %630 = vmatprep.mubr.f32.mxu0 0.0
    %631 = vmatmul.mubr.f32.gmra.mrb[0].mxu0 %v271
    %v632 = vpop.f32.mrb[0].mxu0
    %v633 = vadd.f32 0.0, %v632
    %v634 = vpop.f32.mrb[0].mxu0
    %635 = vmatprep.mubr.f32.mxu0 0.0
    %636 = vmatmul.mubr.f32.gmra.mrb[0].mxu0 %v274
    %v637 = vpop.f32.mrb[0].mxu0
    %v638 = vadd.f32 0.0, %v637
    %v639 = vpop.f32.mrb[0].mxu0
    %640 = vmatprep.mubr.f32.mxu0 0.0
    %641 = vmatmul.mubr.f32.gmra.mrb[0].mxu0 %v277
    %v642 = vpop.f32.mrb[0].mxu0
    %v643 = vadd.f32 0.0, %v642
    %v644 = vpop.f32.mrb[0].mxu0
    %645 = vmatprep.mubr.f32.mxu0 0.0
    %646 = vmatmul.mubr.f32.gmra.mrb[0].mxu0 %v280
    %v647 = vpop.f32.mrb[0].mxu0
    %v648 = vadd.f32 0.0, %v647
    %v649 = vpop.f32.mrb[0].mxu0
    %650 = vmatprep.mubr.f32.mxu0 0.0
    %651 = vmatmul.mubr.f32.gmra.mrb[0].mxu0 %v283
    %v652 = vpop.f32.mrb[0].mxu0
    %v653 = vadd.f32 0.0, %v652
    %v654 = vpop.f32.mrb[0].mxu0
    %655 = vmatprep.mubr.f32.mxu0 0.0
    %656 = vmatmul.mubr.f32.gmra.mrb[0].mxu0 %v286
    %v657 = vpop.f32.mrb[0].mxu0
    %v658 = vadd.f32 0.0, %v657
    %v659 = vpop.f32.mrb[0].mxu0
    %660 = vmatprep.mubr.f32.mxu0 0.0
    %661 = vmatmul.mubr.f32.gmra.mrb[0].mxu0 %v289
    %v662 = vpop.f32.mrb[0].mxu0
    %v663 = vadd.f32 0.0, %v662
    %v664 = vpop.f32.mrb[0].mxu0
    %665 = vmatprep.mubr.f32.mxu0 0.0
    %666 = vmatmul.mubr.f32.gmra.mrb[0].mxu0 %v292
    %v667 = vpop.f32.mrb[0].mxu0
    %v668 = vadd.f32 0.0, %v667
    %v669 = vpop.f32.mrb[0].mxu0
    %670 = vmatprep.mubr.f32.mxu0 0.0
    %671 = vmatmul.mubr.f32.gmra.mrb[0].mxu0 %v295
    %v672 = vpop.f32.mrb[0].mxu0
    %v673 = vadd.f32 0.0, %v672
    %v674 = vpop.f32.mrb[0].mxu0
    %675 = vmatprep.mubr.f32.mxu0 0.0
    %676 = vmatmul.mubr.f32.gmra.mrb[0].mxu0 %v298
    %v677 = vpop.f32.mrb[0].mxu0
    %v678 = vadd.f32 0.0, %v677
    %v679 = vpop.f32.mrb[0].mxu0
    %680 = vmatprep.mubr.f32.mxu0 0.0
    %681 = vmatmul.mubr.f32.gmra.mrb[0].mxu0 %v301
    %v682 = vpop.f32.mrb[0].mxu0
    %v683 = vadd.f32 0.0, %v682
    %v684 = vpop.f32.mrb[0].mxu0
    %685 = vmatprep.mubr.f32.mxu0 0.0
    %686 = vmatmul.mubr.f32.gmra.mrb[0].mxu0 %v304
    %v687 = vpop.f32.mrb[0].mxu0
    %v688 = vadd.f32 0.0, %v687
    %v689 = vpop.f32.mrb[0].mxu0
    %690 = vmatprep.mubr.f32.mxu0 0.0
    %691 = vmatmul.mubr.f32.gmra.mrb[0].mxu0 %v307
    %v692 = vpop.f32.mrb[0].mxu0
    %v693 = vadd.f32 0.0, %v692
    %v694 = vpop.f32.mrb[0].mxu0
    %695 = vmatprep.mubr.f32.mxu0 0.0
    %696 = vmatmul.mubr.f32.gmra.mrb[0].mxu0 %v310
    %v697 = vpop.f32.mrb[0].mxu0
    %v698 = vadd.f32 0.0, %v697
    %v699 = vpop.f32.mrb[0].mxu0
    %700 = vdwg.mxu0
    %vm701 = vcmask 130048
    %v702 = vsel %vm701, %v383, 0.0
    %v703 = vsel %vm701, %v388, 0.0
    %v704 = vadd.f32 %v702, %v703
    %v705 = vsel %vm701, %v393, 0.0
    %v706 = vadd.f32 %v704, %v705
    %v707 = vsel %vm701, %v398, 0.0
    %v708 = vadd.f32 %v706, %v707
    %v709 = vsel %vm701, %v403, 0.0
    %v710 = vadd.f32 %v708, %v709
    %v711 = vsel %vm701, %v408, 0.0
    %v712 = vadd.f32 %v710, %v711
    %v713 = vsel %vm701, %v413, 0.0
    %v714 = vadd.f32 %v712, %v713
    %v715 = vsel %vm701, %v418, 0.0
    %v716 = vadd.f32 %v714, %v715
    %v717 = vsel %vm701, %v423, 0.0
    %v718 = vadd.f32 %v716, %v717
    %v719 = vsel %vm701, %v428, 0.0
    %v720 = vadd.f32 %v718, %v719
    %v721 = vsel %vm701, %v433, 0.0
    %v722 = vadd.f32 %v720, %v721
    %v723 = vsel %vm701, %v438, 0.0
    %v724 = vadd.f32 %v722, %v723
    %v725 = vsel %vm701, %v443, 0.0
    %v726 = vadd.f32 %v724, %v725
    %v727 = vsel %vm701, %v448, 0.0
    %v728 = vadd.f32 %v726, %v727
    %v729 = vsel %vm701, %v453, 0.0
    %v730 = vadd.f32 %v728, %v729
    %v731 = vsel %vm701, %v458, 0.0
    %v732 = vadd.f32 %v730, %v731
    %v733 = vsel %vm701, %v463, 0.0
    %v734 = vadd.f32 %v732, %v733
    %v735 = vsel %vm701, %v468, 0.0
    %v736 = vadd.f32 %v734, %v735
    %v737 = vsel %vm701, %v473, 0.0
    %v738 = vadd.f32 %v736, %v737
    %v739 = vsel %vm701, %v478, 0.0
    %v740 = vadd.f32 %v738, %v739
    %v741 = vsel %vm701, %v483, 0.0
    %v742 = vadd.f32 %v740, %v741
    %v743 = vsel %vm701, %v488, 0.0
    %v744 = vadd.f32 %v742, %v743
    %v745 = vsel %vm701, %v493, 0.0
    %v746 = vadd.f32 %v744, %v745
    %v747 = vsel %vm701, %v498, 0.0
    %v748 = vadd.f32 %v746, %v747
    %v749 = vsel %vm701, %v503, 0.0
    %v750 = vadd.f32 %v748, %v749
    %v751 = vsel %vm701, %v508, 0.0
    %v752 = vadd.f32 %v750, %v751
    %v753 = vsel %vm701, %v513, 0.0
    %v754 = vadd.f32 %v752, %v753
    %v755 = vsel %vm701, %v518, 0.0
    %v756 = vadd.f32 %v754, %v755
    %v757 = vsel %vm701, %v523, 0.0
    %v758 = vadd.f32 %v756, %v757
    %v759 = vsel %vm701, %v528, 0.0
    %v760 = vadd.f32 %v758, %v759
    %v761 = vsel %vm701, %v533, 0.0
    %v762 = vadd.f32 %v760, %v761
    %v763 = vsel %vm701, %v538, 0.0
    %v764 = vadd.f32 %v762, %v763
    %v765 = vsel %vm701, %v543, 0.0
    %v766 = vadd.f32 %v764, %v765
    %v767 = vsel %vm701, %v548, 0.0
    %v768 = vadd.f32 %v766, %v767
    %v769 = vsel %vm701, %v553, 0.0
    %v770 = vadd.f32 %v768, %v769
    %v771 = vsel %vm701, %v558, 0.0
    %v772 = vadd.f32 %v770, %v771
    %v773 = vsel %vm701, %v563, 0.0
    %v774 = vadd.f32 %v772, %v773
    %v775 = vsel %vm701, %v568, 0.0
    %v776 = vadd.f32 %v774, %v775
    %v777 = vsel %vm701, %v573, 0.0
    %v778 = vadd.f32 %v776, %v777
    %v779 = vsel %vm701, %v578, 0.0
    %v780 = vadd.f32 %v778, %v779
    %v781 = vsel %vm701, %v583, 0.0
    %v782 = vadd.f32 %v780, %v781
    %v783 = vsel %vm701, %v588, 0.0
    %v784 = vadd.f32 %v782, %v783
    %v785 = vsel %vm701, %v593, 0.0
    %v786 = vadd.f32 %v784, %v785
    %v787 = vsel %vm701, %v598, 0.0
    %v788 = vadd.f32 %v786, %v787
    %v789 = vsel %vm701, %v603, 0.0
    %v790 = vadd.f32 %v788, %v789
    %v791 = vsel %vm701, %v608, 0.0
    %v792 = vadd.f32 %v790, %v791
    %v793 = vsel %vm701, %v613, 0.0
    %v794 = vadd.f32 %v792, %v793
    %v795 = vsel %vm701, %v618, 0.0
    %v796 = vadd.f32 %v794, %v795
    %v797 = vsel %vm701, %v623, 0.0
    %v798 = vadd.f32 %v796, %v797
    %v799 = vsel %vm701, %v628, 0.0
    %v800 = vadd.f32 %v798, %v799
    %v801 = vsel %vm701, %v633, 0.0
    %v802 = vadd.f32 %v800, %v801
    %v803 = vsel %vm701, %v638, 0.0
    %v804 = vadd.f32 %v802, %v803
    %v805 = vsel %vm701, %v643, 0.0
    %v806 = vadd.f32 %v804, %v805
    %v807 = vsel %vm701, %v648, 0.0
    %v808 = vadd.f32 %v806, %v807
    %v809 = vsel %vm701, %v653, 0.0
    %v810 = vadd.f32 %v808, %v809
    %v811 = vsel %vm701, %v658, 0.0
    %v812 = vadd.f32 %v810, %v811
    %v813 = vsel %vm701, %v663, 0.0
    %v814 = vadd.f32 %v812, %v813
    %v815 = vsel %vm701, %v668, 0.0
    %v816 = vadd.f32 %v814, %v815
    %v817 = vsel %vm701, %v673, 0.0
    %v818 = vadd.f32 %v816, %v817
    %v819 = vsel %vm701, %v678, 0.0
    %v820 = vadd.f32 %v818, %v819
    %v821 = vsel %vm701, %v683, 0.0
    %v822 = vadd.f32 %v820, %v821
    %v823 = vsel %vm701, %v688, 0.0
    %v824 = vadd.f32 %v822, %v823
    %v825 = vsel %vm701, %v693, 0.0
    %v826 = vadd.f32 %v824, %v825
    %v827 = vsel %vm701, %v698, 0.0
    %v828 = vadd.f32 %v826, %v827
    %v829 = vrot.slane %v828, 4
    %v830 = vadd.f32 %v828, %v829
    %v831 = vrot.slane %v830, 2
    %v832 = vadd.f32 %v830, %v831
    %v833 = vrot.slane %v832, 1
    %v834 = vadd.f32 %v832, %v833
    %v835 = vmul.f32 %v383, %v383
    %v836 = vmul.f32 %v388, %v388
    %v837 = vmul.f32 %v393, %v393
    %v838 = vmul.f32 %v398, %v398
    %v839 = vmul.f32 %v403, %v403
    %v840 = vmul.f32 %v408, %v408
    %v841 = vmul.f32 %v413, %v413
    %v842 = vmul.f32 %v418, %v418
    %v843 = vmul.f32 %v423, %v423
    %v844 = vmul.f32 %v428, %v428
    %v845 = vmul.f32 %v433, %v433
    %v846 = vmul.f32 %v438, %v438
    %v847 = vmul.f32 %v443, %v443
    %v848 = vmul.f32 %v448, %v448
    %v849 = vmul.f32 %v453, %v453
    %v850 = vmul.f32 %v458, %v458
    %v851 = vmul.f32 %v463, %v463
    %v852 = vmul.f32 %v468, %v468
    %v853 = vmul.f32 %v473, %v473
    %v854 = vmul.f32 %v478, %v478
    %v855 = vmul.f32 %v483, %v483
    %v856 = vmul.f32 %v488, %v488
    %v857 = vmul.f32 %v493, %v493
    %v858 = vmul.f32 %v498, %v498
    %v859 = vmul.f32 %v503, %v503
    %v860 = vmul.f32 %v508, %v508
    %v861 = vmul.f32 %v513, %v513
    %v862 = vmul.f32 %v518, %v518
    %v863 = vmul.f32 %v523, %v523
    %v864 = vmul.f32 %v528, %v528
    %v865 = vmul.f32 %v533, %v533
    %v866 = vmul.f32 %v538, %v538
    %v867 = vmul.f32 %v543, %v543
    %v868 = vmul.f32 %v548, %v548
    %v869 = vmul.f32 %v553, %v553
    %v870 = vmul.f32 %v558, %v558
    %v871 = vmul.f32 %v563, %v563
    %v872 = vmul.f32 %v568, %v568
    %v873 = vmul.f32 %v573, %v573
    %v874 = vmul.f32 %v578, %v578
    %v875 = vmul.f32 %v583, %v583
    %v876 = vmul.f32 %v588, %v588
    %v877 = vmul.f32 %v593, %v593
    %v878 = vmul.f32 %v598, %v598
    %v879 = vmul.f32 %v603, %v603
    %v880 = vmul.f32 %v608, %v608
    %v881 = vmul.f32 %v613, %v613
    %v882 = vmul.f32 %v618, %v618
    %v883 = vmul.f32 %v623, %v623
    %v884 = vmul.f32 %v628, %v628
    %v885 = vmul.f32 %v633, %v633
    %v886 = vmul.f32 %v638, %v638
    %v887 = vmul.f32 %v643, %v643
    %v888 = vmul.f32 %v648, %v648
    %v889 = vmul.f32 %v653, %v653
    %v890 = vmul.f32 %v658, %v658
    %v891 = vmul.f32 %v663, %v663
    %v892 = vmul.f32 %v668, %v668
    %v893 = vmul.f32 %v673, %v673
    %v894 = vmul.f32 %v678, %v678
    %v895 = vmul.f32 %v683, %v683
    %v896 = vmul.f32 %v688, %v688
    %v897 = vmul.f32 %v693, %v693
    %v898 = vmul.f32 %v698, %v698
    %v899 = vsel %vm701, %v835, 0.0
    %v900 = vsel %vm701, %v836, 0.0
    %v901 = vadd.f32 %v899, %v900
    %v902 = vsel %vm701, %v837, 0.0
    %v903 = vadd.f32 %v901, %v902
    %v904 = vsel %vm701, %v838, 0.0
    %v905 = vadd.f32 %v903, %v904
    %v906 = vsel %vm701, %v839, 0.0
    %v907 = vadd.f32 %v905, %v906
    %v908 = vsel %vm701, %v840, 0.0
    %v909 = vadd.f32 %v907, %v908
    %v910 = vsel %vm701, %v841, 0.0
    %v911 = vadd.f32 %v909, %v910
    %v912 = vsel %vm701, %v842, 0.0
    %v913 = vadd.f32 %v911, %v912
    %v914 = vsel %vm701, %v843, 0.0
    %v915 = vadd.f32 %v913, %v914
    %v916 = vsel %vm701, %v844, 0.0
    %v917 = vadd.f32 %v915, %v916
    %v918 = vsel %vm701, %v845, 0.0
    %v919 = vadd.f32 %v917, %v918
    %v920 = vsel %vm701, %v846, 0.0
    %v921 = vadd.f32 %v919, %v920
    %v922 = vsel %vm701, %v847, 0.0
    %v923 = vadd.f32 %v921, %v922
    %v924 = vsel %vm701, %v848, 0.0
    %v925 = vadd.f32 %v923, %v924
    %v926 = vsel %vm701, %v849, 0.0
    %v927 = vadd.f32 %v925, %v926
    %v928 = vsel %vm701, %v850, 0.0
    %v929 = vadd.f32 %v927, %v928
    %v930 = vsel %vm701, %v851, 0.0
    %v931 = vadd.f32 %v929, %v930
    %v932 = vsel %vm701, %v852, 0.0
    %v933 = vadd.f32 %v931, %v932
    %v934 = vsel %vm701, %v853, 0.0
    %v935 = vadd.f32 %v933, %v934
    %v936 = vsel %vm701, %v854, 0.0
    %v937 = vadd.f32 %v935, %v936
    %v938 = vsel %vm701, %v855, 0.0
    %v939 = vadd.f32 %v937, %v938
    %v940 = vsel %vm701, %v856, 0.0
    %v941 = vadd.f32 %v939, %v940
    %v942 = vsel %vm701, %v857, 0.0
    %v943 = vadd.f32 %v941, %v942
    %v944 = vsel %vm701, %v858, 0.0
    %v945 = vadd.f32 %v943, %v944
    %v946 = vsel %vm701, %v859, 0.0
    %v947 = vadd.f32 %v945, %v946
    %v948 = vsel %vm701, %v860, 0.0
    %v949 = vadd.f32 %v947, %v948
    %v950 = vsel %vm701, %v861, 0.0
    %v951 = vadd.f32 %v949, %v950
    %v952 = vsel %vm701, %v862, 0.0
    %v953 = vadd.f32 %v951, %v952
    %v954 = vsel %vm701, %v863, 0.0
    %v955 = vadd.f32 %v953, %v954
    %v956 = vsel %vm701, %v864, 0.0
    %v957 = vadd.f32 %v955, %v956
    %v958 = vsel %vm701, %v865, 0.0
    %v959 = vadd.f32 %v957, %v958
    %v960 = vsel %vm701, %v866, 0.0
    %v961 = vadd.f32 %v959, %v960
    %v962 = vsel %vm701, %v867, 0.0
    %v963 = vadd.f32 %v961, %v962
    %v964 = vsel %vm701, %v868, 0.0
    %v965 = vadd.f32 %v963, %v964
    %v966 = vsel %vm701, %v869, 0.0
    %v967 = vadd.f32 %v965, %v966
    %v968 = vsel %vm701, %v870, 0.0
    %v969 = vadd.f32 %v967, %v968
    %v970 = vsel %vm701, %v871, 0.0
    %v971 = vadd.f32 %v969, %v970
    %v972 = vsel %vm701, %v872, 0.0
    %v973 = vadd.f32 %v971, %v972
    %v974 = vsel %vm701, %v873, 0.0
    %v975 = vadd.f32 %v973, %v974
    %v976 = vsel %vm701, %v874, 0.0
    %v977 = vadd.f32 %v975, %v976
    %v978 = vsel %vm701, %v875, 0.0
    %v979 = vadd.f32 %v977, %v978
    %v980 = vsel %vm701, %v876, 0.0
    %v981 = vadd.f32 %v979, %v980
    %v982 = vsel %vm701, %v877, 0.0
    %v983 = vadd.f32 %v981, %v982
    %v984 = vsel %vm701, %v878, 0.0
    %v985 = vadd.f32 %v983, %v984
    %v986 = vsel %vm701, %v879, 0.0
    %v987 = vadd.f32 %v985, %v986
    %v988 = vsel %vm701, %v880, 0.0
    %v989 = vadd.f32 %v987, %v988
    %v990 = vsel %vm701, %v881, 0.0
    %v991 = vadd.f32 %v989, %v990
    %v992 = vsel %vm701, %v882, 0.0
    %v993 = vadd.f32 %v991, %v992
    %v994 = vsel %vm701, %v883, 0.0
    %v995 = vadd.f32 %v993, %v994
    %v996 = vsel %vm701, %v884, 0.0
    %v997 = vadd.f32 %v995, %v996
    %v998 = vsel %vm701, %v885, 0.0
    %v999 = vadd.f32 %v997, %v998
    %v1000 = vsel %vm701, %v886, 0.0
    %v1001 = vadd.f32 %v999, %v1000
    %v1002 = vsel %vm701, %v887, 0.0
    %v1003 = vadd.f32 %v1001, %v1002
    %v1004 = vsel %vm701, %v888, 0.0
    %v1005 = vadd.f32 %v1003, %v1004
    %v1006 = vsel %vm701, %v889, 0.0
    %v1007 = vadd.f32 %v1005, %v1006
    %v1008 = vsel %vm701, %v890, 0.0
    %v1009 = vadd.f32 %v1007, %v1008
    %v1010 = vsel %vm701, %v891, 0.0
    %v1011 = vadd.f32 %v1009, %v1010
    %v1012 = vsel %vm701, %v892, 0.0
    %v1013 = vadd.f32 %v1011, %v1012
    %v1014 = vsel %vm701, %v893, 0.0
    %v1015 = vadd.f32 %v1013, %v1014
    %v1016 = vsel %vm701, %v894, 0.0
    %v1017 = vadd.f32 %v1015, %v1016
    %v1018 = vsel %vm701, %v895, 0.0
    %v1019 = vadd.f32 %v1017, %v1018
    %v1020 = vsel %vm701, %v896, 0.0
    %v1021 = vadd.f32 %v1019, %v1020
    %v1022 = vsel %vm701, %v897, 0.0
    %v1023 = vadd.f32 %v1021, %v1022
    %v1024 = vsel %vm701, %v898, 0.0
    %v1025 = vadd.f32 %v1023, %v1024
    %v1026 = vrot.slane %v1025, 4
    %v1027 = vadd.f32 %v1025, %v1026
    %v1028 = vrot.slane %v1027, 2
    %v1029 = vadd.f32 %v1027, %v1028
    %v1030 = vrot.slane %v1029, 1
    %v1031 = vadd.f32 %v1029, %v1030
    %v1032 = vmul.f32 %v834, 0.001953125
    %v1033 = vmul.f32 %v1031, 0.001953125
    %v1034 = vmul.f32 %v1032, %v1032
    %v1035 = vsub.f32 %v1033, %v1034
    %v1036 = vmax.f32 %v1035, 0.0
    %v1037 = vsub.f32 %v383, %v1032
    %v1038 = vsub.f32 %v388, %v1032
    %v1039 = vsub.f32 %v393, %v1032
    %v1040 = vsub.f32 %v398, %v1032
    %v1041 = vsub.f32 %v403, %v1032
    %v1042 = vsub.f32 %v408, %v1032
    %v1043 = vsub.f32 %v413, %v1032
    %v1044 = vsub.f32 %v418, %v1032
    %v1045 = vsub.f32 %v423, %v1032
    %v1046 = vsub.f32 %v428, %v1032
    %v1047 = vsub.f32 %v433, %v1032
    %v1048 = vsub.f32 %v438, %v1032
    %v1049 = vsub.f32 %v443, %v1032
    %v1050 = vsub.f32 %v448, %v1032
    %v1051 = vsub.f32 %v453, %v1032
    %v1052 = vsub.f32 %v458, %v1032
    %v1053 = vsub.f32 %v463, %v1032
    %v1054 = vsub.f32 %v468, %v1032
    %v1055 = vsub.f32 %v473, %v1032
    %v1056 = vsub.f32 %v478, %v1032
    %v1057 = vsub.f32 %v483, %v1032
    %v1058 = vsub.f32 %v488, %v1032
    %v1059 = vsub.f32 %v493, %v1032
    %v1060 = vsub.f32 %v498, %v1032
    %v1061 = vsub.f32 %v503, %v1032
    %v1062 = vsub.f32 %v508, %v1032
    %v1063 = vsub.f32 %v513, %v1032
    %v1064 = vsub.f32 %v518, %v1032
    %v1065 = vsub.f32 %v523, %v1032
    %v1066 = vsub.f32 %v528, %v1032
    %v1067 = vsub.f32 %v533, %v1032
    %v1068 = vsub.f32 %v538, %v1032
    %v1069 = vsub.f32 %v543, %v1032
    %v1070 = vsub.f32 %v548, %v1032
    %v1071 = vsub.f32 %v553, %v1032
    %v1072 = vsub.f32 %v558, %v1032
    %v1073 = vsub.f32 %v563, %v1032
    %v1074 = vsub.f32 %v568, %v1032
    %v1075 = vsub.f32 %v573, %v1032
    %v1076 = vsub.f32 %v578, %v1032
    %v1077 = vsub.f32 %v583, %v1032
    %v1078 = vsub.f32 %v588, %v1032
    %v1079 = vsub.f32 %v593, %v1032
    %v1080 = vsub.f32 %v598, %v1032
    %v1081 = vsub.f32 %v603, %v1032
    %v1082 = vsub.f32 %v608, %v1032
    %v1083 = vsub.f32 %v613, %v1032
    %v1084 = vsub.f32 %v618, %v1032
    %v1085 = vsub.f32 %v623, %v1032
    %v1086 = vsub.f32 %v628, %v1032
    %v1087 = vsub.f32 %v633, %v1032
    %v1088 = vsub.f32 %v638, %v1032
    %v1089 = vsub.f32 %v643, %v1032
    %v1090 = vsub.f32 %v648, %v1032
    %v1091 = vsub.f32 %v653, %v1032
    %v1092 = vsub.f32 %v658, %v1032
    %v1093 = vsub.f32 %v663, %v1032
    %v1094 = vsub.f32 %v668, %v1032
    %v1095 = vsub.f32 %v673, %v1032
    %v1096 = vsub.f32 %v678, %v1032
    %v1097 = vsub.f32 %v683, %v1032
    %v1098 = vsub.f32 %v688, %v1032
    %v1099 = vsub.f32 %v693, %v1032
    %v1100 = vsub.f32 %v698, %v1032
    %v1101 = vadd.f32 %v1036, 1e-05
    %v1102 = vrsqrt.pop %v1101
    %v1103 = vmul.f32 %v1037, %v1102
    %v1104 = vmul.f32 %v1038, %v1102
    %v1105 = vmul.f32 %v1039, %v1102
    %v1106 = vmul.f32 %v1040, %v1102
    %v1107 = vmul.f32 %v1041, %v1102
    %v1108 = vmul.f32 %v1042, %v1102
    %v1109 = vmul.f32 %v1043, %v1102
    %v1110 = vmul.f32 %v1044, %v1102
    %v1111 = vmul.f32 %v1045, %v1102
    %v1112 = vmul.f32 %v1046, %v1102
    %v1113 = vmul.f32 %v1047, %v1102
    %v1114 = vmul.f32 %v1048, %v1102
    %v1115 = vmul.f32 %v1049, %v1102
    %v1116 = vmul.f32 %v1050, %v1102
    %v1117 = vmul.f32 %v1051, %v1102
    %v1118 = vmul.f32 %v1052, %v1102
    %v1119 = vmul.f32 %v1053, %v1102
    %v1120 = vmul.f32 %v1054, %v1102
    %v1121 = vmul.f32 %v1055, %v1102
    %v1122 = vmul.f32 %v1056, %v1102
    %v1123 = vmul.f32 %v1057, %v1102
    %v1124 = vmul.f32 %v1058, %v1102
    %v1125 = vmul.f32 %v1059, %v1102
    %v1126 = vmul.f32 %v1060, %v1102
    %v1127 = vmul.f32 %v1061, %v1102
    %v1128 = vmul.f32 %v1062, %v1102
    %v1129 = vmul.f32 %v1063, %v1102
    %v1130 = vmul.f32 %v1064, %v1102
    %v1131 = vmul.f32 %v1065, %v1102
    %v1132 = vmul.f32 %v1066, %v1102
    %v1133 = vmul.f32 %v1067, %v1102
    %v1134 = vmul.f32 %v1068, %v1102
    %v1135 = vmul.f32 %v1069, %v1102
    %v1136 = vmul.f32 %v1070, %v1102
    %v1137 = vmul.f32 %v1071, %v1102
    %v1138 = vmul.f32 %v1072, %v1102
    %v1139 = vmul.f32 %v1073, %v1102
    %v1140 = vmul.f32 %v1074, %v1102
    %v1141 = vmul.f32 %v1075, %v1102
    %v1142 = vmul.f32 %v1076, %v1102
    %v1143 = vmul.f32 %v1077, %v1102
    %v1144 = vmul.f32 %v1078, %v1102
    %v1145 = vmul.f32 %v1079, %v1102
    %v1146 = vmul.f32 %v1080, %v1102
    %v1147 = vmul.f32 %v1081, %v1102
    %v1148 = vmul.f32 %v1082, %v1102
    %v1149 = vmul.f32 %v1083, %v1102
    %v1150 = vmul.f32 %v1084, %v1102
    %v1151 = vmul.f32 %v1085, %v1102
    %v1152 = vmul.f32 %v1086, %v1102
    %v1153 = vmul.f32 %v1087, %v1102
    %v1154 = vmul.f32 %v1088, %v1102
    %v1155 = vmul.f32 %v1089, %v1102
    %v1156 = vmul.f32 %v1090, %v1102
    %v1157 = vmul.f32 %v1091, %v1102
    %v1158 = vmul.f32 %v1092, %v1102
    %v1159 = vmul.f32 %v1093, %v1102
    %v1160 = vmul.f32 %v1094, %v1102
    %v1161 = vmul.f32 %v1095, %v1102
    %v1162 = vmul.f32 %v1096, %v1102
    %v1163 = vmul.f32 %v1097, %v1102
    %v1164 = vmul.f32 %v1098, %v1102
    %v1165 = vmul.f32 %v1099, %v1102
    %v1166 = vmul.f32 %v1100, %v1102
    %v1167 = vmax.f32 %v1103, 0.0
    %v1168 = vmax.f32 %v1104, 0.0
    %v1169 = vmax.f32 %v1105, 0.0
    %v1170 = vmax.f32 %v1106, 0.0
    %v1171 = vmax.f32 %v1107, 0.0
    %v1172 = vmax.f32 %v1108, 0.0
    %v1173 = vmax.f32 %v1109, 0.0
    %v1174 = vmax.f32 %v1110, 0.0
    %v1175 = vmax.f32 %v1111, 0.0
    %v1176 = vmax.f32 %v1112, 0.0
    %v1177 = vmax.f32 %v1113, 0.0
    %v1178 = vmax.f32 %v1114, 0.0
    %v1179 = vmax.f32 %v1115, 0.0
    %v1180 = vmax.f32 %v1116, 0.0
    %v1181 = vmax.f32 %v1117, 0.0
    %v1182 = vmax.f32 %v1118, 0.0
    %v1183 = vmax.f32 %v1119, 0.0
    %v1184 = vmax.f32 %v1120, 0.0
    %v1185 = vmax.f32 %v1121, 0.0
    %v1186 = vmax.f32 %v1122, 0.0
    %v1187 = vmax.f32 %v1123, 0.0
    %v1188 = vmax.f32 %v1124, 0.0
    %v1189 = vmax.f32 %v1125, 0.0
    %v1190 = vmax.f32 %v1126, 0.0
    %v1191 = vmax.f32 %v1127, 0.0
    %v1192 = vmax.f32 %v1128, 0.0
    %v1193 = vmax.f32 %v1129, 0.0
    %v1194 = vmax.f32 %v1130, 0.0
    %v1195 = vmax.f32 %v1131, 0.0
    %v1196 = vmax.f32 %v1132, 0.0
    %v1197 = vmax.f32 %v1133, 0.0
    %v1198 = vmax.f32 %v1134, 0.0
    %v1199 = vmax.f32 %v1135, 0.0
    %v1200 = vmax.f32 %v1136, 0.0
    %v1201 = vmax.f32 %v1137, 0.0
    %v1202 = vmax.f32 %v1138, 0.0
    %v1203 = vmax.f32 %v1139, 0.0
    %v1204 = vmax.f32 %v1140, 0.0
    %v1205 = vmax.f32 %v1141, 0.0
    %v1206 = vmax.f32 %v1142, 0.0
    %v1207 = vmax.f32 %v1143, 0.0
    %v1208 = vmax.f32 %v1144, 0.0
    %v1209 = vmax.f32 %v1145, 0.0
    %v1210 = vmax.f32 %v1146, 0.0
    %v1211 = vmax.f32 %v1147, 0.0
    %v1212 = vmax.f32 %v1148, 0.0
    %v1213 = vmax.f32 %v1149, 0.0
    %v1214 = vmax.f32 %v1150, 0.0
    %v1215 = vmax.f32 %v1151, 0.0
    %v1216 = vmax.f32 %v1152, 0.0
    %v1217 = vmax.f32 %v1153, 0.0
    %v1218 = vmax.f32 %v1154, 0.0
    %v1219 = vmax.f32 %v1155, 0.0
    %v1220 = vmax.f32 %v1156, 0.0
    %v1221 = vmax.f32 %v1157, 0.0
    %v1222 = vmax.f32 %v1158, 0.0
    %v1223 = vmax.f32 %v1159, 0.0
    %v1224 = vmax.f32 %v1160, 0.0
    %v1225 = vmax.f32 %v1161, 0.0
    %v1226 = vmax.f32 %v1162, 0.0
    %v1227 = vmax.f32 %v1163, 0.0
    %v1228 = vmax.f32 %v1164, 0.0
    %v1229 = vmax.f32 %v1165, 0.0
    %v1230 = vmax.f32 %v1166, 0.0
    %v1231 = vld [vmem:[#allocation4] sm:$0xff]
    %v1232 = vld [vmem:[#allocation4 + $0x8] sm:$0xff]
    %v1233 = vld [vmem:[#allocation4 + $0x10] sm:$0xff]
    %v1234 = vld [vmem:[#allocation4 + $0x18] sm:$0xff]
    %v1235 = vld [vmem:[#allocation4 + $0x20] sm:$0xff]
    %v1236 = vld [vmem:[#allocation4 + $0x28] sm:$0xff]
    %v1237 = vld [vmem:[#allocation4 + $0x30] sm:$0xff]
    %v1238 = vld [vmem:[#allocation4 + $0x38] sm:$0xff]
    %v1239 = vld [vmem:[#allocation4 + $0x40] sm:$0xff]
    %v1240 = vld [vmem:[#allocation4 + $0x48] sm:$0xff]
    %v1241 = vld [vmem:[#allocation4 + $0x50] sm:$0xff]
    %v1242 = vld [vmem:[#allocation4 + $0x58] sm:$0xff]
    %v1243 = vld [vmem:[#allocation4 + $0x60] sm:$0xff]
    %v1244 = vld [vmem:[#allocation4 + $0x68] sm:$0xff]
    %v1245 = vld [vmem:[#allocation4 + $0x70] sm:$0xff]
    %v1246 = vld [vmem:[#allocation4 + $0x78] sm:$0xff]
    %v1247 = vld [vmem:[#allocation4 + $0x80] sm:$0xff]
    %v1248 = vld [vmem:[#allocation4 + $0x88] sm:$0xff]
    %v1249 = vld [vmem:[#allocation4 + $0x90] sm:$0xff]
    %v1250 = vld [vmem:[#allocation4 + $0x98] sm:$0xff]
    %v1251 = vld [vmem:[#allocation4 + $0xa0] sm:$0xff]
    %v1252 = vld [vmem:[#allocation4 + $0xa8] sm:$0xff]
    %v1253 = vld [vmem:[#allocation4 + $0xb0] sm:$0xff]
    %v1254 = vld [vmem:[#allocation4 + $0xb8] sm:$0xff]
    %v1255 = vld [vmem:[#allocation4 + $0xc0] sm:$0xff]
    %v1256 = vld [vmem:[#allocation4 + $0xc8] sm:$0xff]
    %v1257 = vld [vmem:[#allocation4 + $0xd0] sm:$0xff]
    %v1258 = vld [vmem:[#allocation4 + $0xd8] sm:$0xff]
    %v1259 = vld [vmem:[#allocation4 + $0xe0] sm:$0xff]
    %v1260 = vld [vmem:[#allocation4 + $0xe8] sm:$0xff]
    %v1261 = vld [vmem:[#allocation4 + $0xf0] sm:$0xff]
    %v1262 = vld [vmem:[#allocation4 + $0xf8] sm:$0xff]
    %v1263 = vld [vmem:[#allocation4 + $0x100] sm:$0xff]
    %v1264 = vld [vmem:[#allocation4 + $0x108] sm:$0xff]
    %v1265 = vld [vmem:[#allocation4 + $0x110] sm:$0xff]
    %v1266 = vld [vmem:[#allocation4 + $0x118] sm:$0xff]
    %v1267 = vld [vmem:[#allocation4 + $0x120] sm:$0xff]
    %v1268 = vld [vmem:[#allocation4 + $0x128] sm:$0xff]
    %v1269 = vld [vmem:[#allocation4 + $0x130] sm:$0xff]
    %v1270 = vld [vmem:[#allocation4 + $0x138] sm:$0xff]
    %v1271 = vld [vmem:[#allocation4 + $0x140] sm:$0xff]
    %v1272 = vld [vmem:[#allocation4 + $0x148] sm:$0xff]
    %v1273 = vld [vmem:[#allocation4 + $0x150] sm:$0xff]
    %v1274 = vld [vmem:[#allocation4 + $0x158] sm:$0xff]
    %v1275 = vld [vmem:[#allocation4 + $0x160] sm:$0xff]
    %v1276 = vld [vmem:[#allocation4 + $0x168] sm:$0xff]
    %v1277 = vld [vmem:[#allocation4 + $0x170] sm:$0xff]
    %v1278 = vld [vmem:[#allocation4 + $0x178] sm:$0xff]
    %v1279 = vld [vmem:[#allocation4 + $0x180] sm:$0xff]
    %v1280 = vld [vmem:[#allocation4 + $0x188] sm:$0xff]
    %v1281 = vld [vmem:[#allocation4 + $0x190] sm:$0xff]
    %v1282 = vld [vmem:[#allocation4 + $0x198] sm:$0xff]
    %v1283 = vld [vmem:[#allocation4 + $0x1a0] sm:$0xff]
    %v1284 = vld [vmem:[#allocation4 + $0x1a8] sm:$0xff]
    %v1285 = vld [vmem:[#allocation4 + $0x1b0] sm:$0xff]
    %v1286 = vld [vmem:[#allocation4 + $0x1b8] sm:$0xff]
    %v1287 = vld [vmem:[#allocation4 + $0x1c0] sm:$0xff]
    %v1288 = vld [vmem:[#allocation4 + $0x1c8] sm:$0xff]
    %v1289 = vld [vmem:[#allocation4 + $0x1d0] sm:$0xff]
    %v1290 = vld [vmem:[#allocation4 + $0x1d8] sm:$0xff]
    %v1291 = vld [vmem:[#allocation4 + $0x1e0] sm:$0xff]
    %v1292 = vld [vmem:[#allocation4 + $0x1e8] sm:$0xff]
    %v1293 = vld [vmem:[#allocation4 + $0x1f0] sm:$0xff]
    %v1294 = vld [vmem:[#allocation4 + $0x1f8] sm:$0xff]
    %v1295 = vld [vmem:[#allocation4 + $0x200] sm:$0xff]
    %v1296 = vld [vmem:[#allocation4 + $0x208] sm:$0xff]
    %v1297 = vld [vmem:[#allocation4 + $0x210] sm:$0xff]
    %v1298 = vld [vmem:[#allocation4 + $0x218] sm:$0xff]
    %v1299 = vld [vmem:[#allocation4 + $0x220] sm:$0xff]
    %v1300 = vld [vmem:[#allocation4 + $0x228] sm:$0xff]
    %v1301 = vld [vmem:[#allocation4 + $0x230] sm:$0xff]
    %v1302 = vld [vmem:[#allocation4 + $0x238] sm:$0xff]
    %v1303 = vld [vmem:[#allocation4 + $0x240] sm:$0xff]
    %v1304 = vld [vmem:[#allocation4 + $0x248] sm:$0xff]
    %v1305 = vld [vmem:[#allocation4 + $0x250] sm:$0xff]
    %v1306 = vld [vmem:[#allocation4 + $0x258] sm:$0xff]
    %v1307 = vld [vmem:[#allocation4 + $0x260] sm:$0xff]
    %v1308 = vld [vmem:[#allocation4 + $0x268] sm:$0xff]
    %v1309 = vld [vmem:[#allocation4 + $0x270] sm:$0xff]
    %v1310 = vld [vmem:[#allocation4 + $0x278] sm:$0xff]
    %v1311 = vld [vmem:[#allocation4 + $0x280] sm:$0xff]
    %v1312 = vld [vmem:[#allocation4 + $0x288] sm:$0xff]
    %v1313 = vld [vmem:[#allocation4 + $0x290] sm:$0xff]
    %v1314 = vld [vmem:[#allocation4 + $0x298] sm:$0xff]
    %v1315 = vld [vmem:[#allocation4 + $0x2a0] sm:$0xff]
    %v1316 = vld [vmem:[#allocation4 + $0x2a8] sm:$0xff]
    %v1317 = vld [vmem:[#allocation4 + $0x2b0] sm:$0xff]
    %v1318 = vld [vmem:[#allocation4 + $0x2b8] sm:$0xff]
    %v1319 = vld [vmem:[#allocation4 + $0x2c0] sm:$0xff]
    %v1320 = vld [vmem:[#allocation4 + $0x2c8] sm:$0xff]
    %v1321 = vld [vmem:[#allocation4 + $0x2d0] sm:$0xff]
    %v1322 = vld [vmem:[#allocation4 + $0x2d8] sm:$0xff]
    %v1323 = vld [vmem:[#allocation4 + $0x2e0] sm:$0xff]
    %v1324 = vld [vmem:[#allocation4 + $0x2e8] sm:$0xff]
    %v1325 = vld [vmem:[#allocation4 + $0x2f0] sm:$0xff]
    %v1326 = vld [vmem:[#allocation4 + $0x2f8] sm:$0xff]
    %v1327 = vld [vmem:[#allocation4 + $0x300] sm:$0xff]
    %v1328 = vld [vmem:[#allocation4 + $0x308] sm:$0xff]
    %v1329 = vld [vmem:[#allocation4 + $0x310] sm:$0xff]
    %v1330 = vld [vmem:[#allocation4 + $0x318] sm:$0xff]
    %v1331 = vld [vmem:[#allocation4 + $0x320] sm:$0xff]
    %v1332 = vld [vmem:[#allocation4 + $0x328] sm:$0xff]
    %v1333 = vld [vmem:[#allocation4 + $0x330] sm:$0xff]
    %v1334 = vld [vmem:[#allocation4 + $0x338] sm:$0xff]
    %v1335 = vld [vmem:[#allocation4 + $0x340] sm:$0xff]
    %v1336 = vld [vmem:[#allocation4 + $0x348] sm:$0xff]
    %v1337 = vld [vmem:[#allocation4 + $0x350] sm:$0xff]
    %v1338 = vld [vmem:[#allocation4 + $0x358] sm:$0xff]
    %v1339 = vld [vmem:[#allocation4 + $0x360] sm:$0xff]
    %v1340 = vld [vmem:[#allocation4 + $0x368] sm:$0xff]
    %v1341 = vld [vmem:[#allocation4 + $0x370] sm:$0xff]
    %v1342 = vld [vmem:[#allocation4 + $0x378] sm:$0xff]
    %v1343 = vld [vmem:[#allocation4 + $0x380] sm:$0xff]
    %v1344 = vld [vmem:[#allocation4 + $0x388] sm:$0xff]
    %v1345 = vld [vmem:[#allocation4 + $0x390] sm:$0xff]
    %v1346 = vld [vmem:[#allocation4 + $0x398] sm:$0xff]
    %v1347 = vld [vmem:[#allocation4 + $0x3a0] sm:$0xff]
    %v1348 = vld [vmem:[#allocation4 + $0x3a8] sm:$0xff]
    %v1349 = vld [vmem:[#allocation4 + $0x3b0] sm:$0xff]
    %v1350 = vld [vmem:[#allocation4 + $0x3b8] sm:$0xff]
    %v1351 = vld [vmem:[#allocation4 + $0x3c0] sm:$0xff]
    %v1352 = vld [vmem:[#allocation4 + $0x3c8] sm:$0xff]
    %v1353 = vld [vmem:[#allocation4 + $0x3d0] sm:$0xff]
    %v1354 = vld [vmem:[#allocation4 + $0x3d8] sm:$0xff]
    %v1355 = vld [vmem:[#allocation4 + $0x3e0] sm:$0xff]
    %v1356 = vld [vmem:[#allocation4 + $0x3e8] sm:$0xff]
    %v1357 = vld [vmem:[#allocation4 + $0x3f0] sm:$0xff]
    %v1358 = vld [vmem:[#allocation4 + $0x3f8] sm:$0xff]
    %v1359 = vld [vmem:[#allocation4 + $0x400] sm:$0xff]
    %v1360 = vld [vmem:[#allocation4 + $0x408] sm:$0xff]
    %v1361 = vld [vmem:[#allocation4 + $0x410] sm:$0xff]
    %v1362 = vld [vmem:[#allocation4 + $0x418] sm:$0xff]
    %v1363 = vld [vmem:[#allocation4 + $0x420] sm:$0xff]
    %v1364 = vld [vmem:[#allocation4 + $0x428] sm:$0xff]
    %v1365 = vld [vmem:[#allocation4 + $0x430] sm:$0xff]
    %v1366 = vld [vmem:[#allocation4 + $0x438] sm:$0xff]
    %v1367 = vld [vmem:[#allocation4 + $0x440] sm:$0xff]
    %v1368 = vld [vmem:[#allocation4 + $0x448] sm:$0xff]
    %v1369 = vld [vmem:[#allocation4 + $0x450] sm:$0xff]
    %v1370 = vld [vmem:[#allocation4 + $0x458] sm:$0xff]
    %v1371 = vld [vmem:[#allocation4 + $0x460] sm:$0xff]
    %v1372 = vld [vmem:[#allocation4 + $0x468] sm:$0xff]
    %v1373 = vld [vmem:[#allocation4 + $0x470] sm:$0xff]
    %v1374 = vld [vmem:[#allocation4 + $0x478] sm:$0xff]
    %v1375 = vld [vmem:[#allocation4 + $0x480] sm:$0xff]
    %v1376 = vld [vmem:[#allocation4 + $0x488] sm:$0xff]
    %v1377 = vld [vmem:[#allocation4 + $0x490] sm:$0xff]
    %v1378 = vld [vmem:[#allocation4 + $0x498] sm:$0xff]
    %v1379 = vld [vmem:[#allocation4 + $0x4a0] sm:$0xff]
    %v1380 = vld [vmem:[#allocation4 + $0x4a8] sm:$0xff]
    %v1381 = vld [vmem:[#allocation4 + $0x4b0] sm:$0xff]
    %v1382 = vld [vmem:[#allocation4 + $0x4b8] sm:$0xff]
    %v1383 = vld [vmem:[#allocation4 + $0x4c0] sm:$0xff]
    %v1384 = vld [vmem:[#allocation4 + $0x4c8] sm:$0xff]
    %v1385 = vld [vmem:[#allocation4 + $0x4d0] sm:$0xff]
    %v1386 = vld [vmem:[#allocation4 + $0x4d8] sm:$0xff]
    %v1387 = vld [vmem:[#allocation4 + $0x4e0] sm:$0xff]
    %v1388 = vld [vmem:[#allocation4 + $0x4e8] sm:$0xff]
    %v1389 = vld [vmem:[#allocation4 + $0x4f0] sm:$0xff]
    %v1390 = vld [vmem:[#allocation4 + $0x4f8] sm:$0xff]
    %v1391 = vld [vmem:[#allocation4 + $0x500] sm:$0xff]
    %v1392 = vld [vmem:[#allocation4 + $0x508] sm:$0xff]
    %v1393 = vld [vmem:[#allocation4 + $0x510] sm:$0xff]
    %v1394 = vld [vmem:[#allocation4 + $0x518] sm:$0xff]
    %v1395 = vld [vmem:[#allocation4 + $0x520] sm:$0xff]
    %v1396 = vld [vmem:[#allocation4 + $0x528] sm:$0xff]
    %v1397 = vld [vmem:[#allocation4 + $0x530] sm:$0xff]
    %v1398 = vld [vmem:[#allocation4 + $0x538] sm:$0xff]
    %v1399 = vld [vmem:[#allocation4 + $0x540] sm:$0xff]
    %v1400 = vld [vmem:[#allocation4 + $0x548] sm:$0xff]
    %v1401 = vld [vmem:[#allocation4 + $0x550] sm:$0xff]
    %v1402 = vld [vmem:[#allocation4 + $0x558] sm:$0xff]
    %v1403 = vld [vmem:[#allocation4 + $0x560] sm:$0xff]
    %v1404 = vld [vmem:[#allocation4 + $0x568] sm:$0xff]
    %v1405 = vld [vmem:[#allocation4 + $0x570] sm:$0xff]
    %v1406 = vld [vmem:[#allocation4 + $0x578] sm:$0xff]
    %v1407 = vld [vmem:[#allocation4 + $0x580] sm:$0xff]
    %v1408 = vld [vmem:[#allocation4 + $0x588] sm:$0xff]
    %v1409 = vld [vmem:[#allocation4 + $0x590] sm:$0xff]
    %v1410 = vld [vmem:[#allocation4 + $0x598] sm:$0xff]
    %v1411 = vld [vmem:[#allocation4 + $0x5a0] sm:$0xff]
    %v1412 = vld [vmem:[#allocation4 + $0x5a8] sm:$0xff]
    %v1413 = vld [vmem:[#allocation4 + $0x5b0] sm:$0xff]
    %v1414 = vld [vmem:[#allocation4 + $0x5b8] sm:$0xff]
    %v1415 = vld [vmem:[#allocation4 + $0x5c0] sm:$0xff]
    %v1416 = vld [vmem:[#allocation4 + $0x5c8] sm:$0xff]
    %v1417 = vld [vmem:[#allocation4 + $0x5d0] sm:$0xff]
    %v1418 = vld [vmem:[#allocation4 + $0x5d8] sm:$0xff]
    %v1419 = vld [vmem:[#allocation4 + $0x5e0] sm:$0xff]
    %v1420 = vld [vmem:[#allocation4 + $0x5e8] sm:$0xff]
    %v1421 = vld [vmem:[#allocation4 + $0x5f0] sm:$0xff]
    %v1422 = vld [vmem:[#allocation4 + $0x5f8] sm:$0xff]
    %v1423 = vld [vmem:[#allocation4 + $0x600] sm:$0xff]
    %v1424 = vld [vmem:[#allocation4 + $0x608] sm:$0xff]
    %v1425 = vld [vmem:[#allocation4 + $0x610] sm:$0xff]
    %v1426 = vld [vmem:[#allocation4 + $0x618] sm:$0xff]
    %v1427 = vld [vmem:[#allocation4 + $0x620] sm:$0xff]
    %v1428 = vld [vmem:[#allocation4 + $0x628] sm:$0xff]
    %v1429 = vld [vmem:[#allocation4 + $0x630] sm:$0xff]
    %v1430 = vld [vmem:[#allocation4 + $0x638] sm:$0xff]
    %v1431 = vld [vmem:[#allocation4 + $0x640] sm:$0xff]
    %v1432 = vld [vmem:[#allocation4 + $0x648] sm:$0xff]
    %v1433 = vld [vmem:[#allocation4 + $0x650] sm:$0xff]
    %v1434 = vld [vmem:[#allocation4 + $0x658] sm:$0xff]
    %v1435 = vld [vmem:[#allocation4 + $0x660] sm:$0xff]
    %v1436 = vld [vmem:[#allocation4 + $0x668] sm:$0xff]
    %v1437 = vld [vmem:[#allocation4 + $0x670] sm:$0xff]
    %v1438 = vld [vmem:[#allocation4 + $0x678] sm:$0xff]
    %v1439 = vld [vmem:[#allocation4 + $0x680] sm:$0xff]
    %v1440 = vld [vmem:[#allocation4 + $0x688] sm:$0xff]
    %v1441 = vld [vmem:[#allocation4 + $0x690] sm:$0xff]
    %v1442 = vld [vmem:[#allocation4 + $0x698] sm:$0xff]
    %v1443 = vld [vmem:[#allocation4 + $0x6a0] sm:$0xff]
    %v1444 = vld [vmem:[#allocation4 + $0x6a8] sm:$0xff]
    %v1445 = vld [vmem:[#allocation4 + $0x6b0] sm:$0xff]
    %v1446 = vld [vmem:[#allocation4 + $0x6b8] sm:$0xff]
    %v1447 = vld [vmem:[#allocation4 + $0x6c0] sm:$0xff]
    %v1448 = vld [vmem:[#allocation4 + $0x6c8] sm:$0xff]
    %v1449 = vld [vmem:[#allocation4 + $0x6d0] sm:$0xff]
    %v1450 = vld [vmem:[#allocation4 + $0x6d8] sm:$0xff]
    %v1451 = vld [vmem:[#allocation4 + $0x6e0] sm:$0xff]
    %v1452 = vld [vmem:[#allocation4 + $0x6e8] sm:$0xff]
    %v1453 = vld [vmem:[#allocation4 + $0x6f0] sm:$0xff]
    %v1454 = vld [vmem:[#allocation4 + $0x6f8] sm:$0xff]
    %v1455 = vld [vmem:[#allocation4 + $0x700] sm:$0xff]
    %v1456 = vld [vmem:[#allocation4 + $0x708] sm:$0xff]
    %v1457 = vld [vmem:[#allocation4 + $0x710] sm:$0xff]
    %v1458 = vld [vmem:[#allocation4 + $0x718] sm:$0xff]
    %v1459 = vld [vmem:[#allocation4 + $0x720] sm:$0xff]
    %v1460 = vld [vmem:[#allocation4 + $0x728] sm:$0xff]
    %v1461 = vld [vmem:[#allocation4 + $0x730] sm:$0xff]
    %v1462 = vld [vmem:[#allocation4 + $0x738] sm:$0xff]
    %v1463 = vld [vmem:[#allocation4 + $0x740] sm:$0xff]
    %v1464 = vld [vmem:[#allocation4 + $0x748] sm:$0xff]
    %v1465 = vld [vmem:[#allocation4 + $0x750] sm:$0xff]
    %v1466 = vld [vmem:[#allocation4 + $0x758] sm:$0xff]
    %v1467 = vld [vmem:[#allocation4 + $0x760] sm:$0xff]
    %v1468 = vld [vmem:[#allocation4 + $0x768] sm:$0xff]
    %v1469 = vld [vmem:[#allocation4 + $0x770] sm:$0xff]
    %v1470 = vld [vmem:[#allocation4 + $0x778] sm:$0xff]
    %v1471 = vld [vmem:[#allocation4 + $0x780] sm:$0xff]
    %v1472 = vld [vmem:[#allocation4 + $0x788] sm:$0xff]
    %v1473 = vld [vmem:[#allocation4 + $0x790] sm:$0xff]
    %v1474 = vld [vmem:[#allocation4 + $0x798] sm:$0xff]
    %v1475 = vld [vmem:[#allocation4 + $0x7a0] sm:$0xff]
    %v1476 = vld [vmem:[#allocation4 + $0x7a8] sm:$0xff]
    %v1477 = vld [vmem:[#allocation4 + $0x7b0] sm:$0xff]
    %v1478 = vld [vmem:[#allocation4 + $0x7b8] sm:$0xff]
    %v1479 = vld [vmem:[#allocation4 + $0x7c0] sm:$0xff]
    %v1480 = vld [vmem:[#allocation4 + $0x7c8] sm:$0xff]
    %v1481 = vld [vmem:[#allocation4 + $0x7d0] sm:$0xff]
    %v1482 = vld [vmem:[#allocation4 + $0x7d8] sm:$0xff]
    %v1483 = vld [vmem:[#allocation4 + $0x7e0] sm:$0xff]
    %v1484 = vld [vmem:[#allocation4 + $0x7e8] sm:$0xff]
    %v1485 = vld [vmem:[#allocation4 + $0x7f0] sm:$0xff]
    %v1486 = vld [vmem:[#allocation4 + $0x7f8] sm:$0xff]
    %1487 = vmatprep.subr.mxu0 0.0
    %1488 = vmatpush1.msra.mxu0 %v1167
    %1489 = vmatprep.subr.mxu0 0.0
    %1490 = vmatpush1.msra.mxu0 %v1168
    %1491 = vmatprep.subr.mxu0 0.0
    %1492 = vmatpush1.msra.mxu0 %v1169
    %1493 = vmatprep.subr.mxu0 0.0
    %1494 = vmatpush1.msra.mxu0 %v1170
    %1495 = vmatprep.subr.mxu0 0.0
    %1496 = vmatpush1.msra.mxu0 %v1171
    %1497 = vmatprep.subr.mxu0 0.0
    %1498 = vmatpush1.msra.mxu0 %v1172
    %1499 = vmatprep.subr.mxu0 0.0
    %1500 = vmatpush1.msra.mxu0 %v1173
    %1501 = vmatprep.subr.mxu0 0.0
    %1502 = vmatpush1.msra.mxu0 %v1174
    %1503 = vmatprep.subr.mxu0 0.0
    %1504 = vmatpush1.msra.mxu0 %v1175
    %1505 = vmatprep.subr.mxu0 0.0
    %1506 = vmatpush1.msra.mxu0 %v1176
    %1507 = vmatprep.subr.mxu0 0.0
    %1508 = vmatpush1.msra.mxu0 %v1177
    %1509 = vmatprep.subr.mxu0 0.0
    %1510 = vmatpush1.msra.mxu0 %v1178
    %1511 = vmatprep.subr.mxu0 0.0
    %1512 = vmatpush1.msra.mxu0 %v1179
    %1513 = vmatprep.subr.mxu0 0.0
    %1514 = vmatpush1.msra.mxu0 %v1180
    %1515 = vmatprep.subr.mxu0 0.0
    %1516 = vmatpush1.msra.mxu0 %v1181
    %1517 = vmatprep.subr.mxu0 0.0
    %1518 = vmatpush1.msra.mxu0 %v1182
    %1519 = vmatprep.subr.mxu0 0.0
    %1520 = vmatpush1.msra.mxu0 %v1183
    %1521 = vmatprep.subr.mxu0 0.0
    %1522 = vmatpush1.msra.mxu0 %v1184
    %1523 = vmatprep.subr.mxu0 0.0
    %1524 = vmatpush1.msra.mxu0 %v1185
    %1525 = vmatprep.subr.mxu0 0.0
    %1526 = vmatpush1.msra.mxu0 %v1186
    %1527 = vmatprep.subr.mxu0 0.0
    %1528 = vmatpush1.msra.mxu0 %v1187
    %1529 = vmatprep.subr.mxu0 0.0
    %1530 = vmatpush1.msra.mxu0 %v1188
    %1531 = vmatprep.subr.mxu0 0.0
    %1532 = vmatpush1.msra.mxu0 %v1189
    %1533 = vmatprep.subr.mxu0 0.0
    %1534 = vmatpush1.msra.mxu0 %v1190
    %1535 = vmatprep.subr.mxu0 0.0
    %1536 = vmatpush1.msra.mxu0 %v1191
    %1537 = vmatprep.subr.mxu0 0.0
    %1538 = vmatpush1.msra.mxu0 %v1192
    %1539 = vmatprep.subr.mxu0 0.0
    %1540 = vmatpush1.msra.mxu0 %v1193
    %1541 = vmatprep.subr.mxu0 0.0
    %1542 = vmatpush1.msra.mxu0 %v1194
    %1543 = vmatprep.subr.mxu0 0.0
    %1544 = vmatpush1.msra.mxu0 %v1195
    %1545 = vmatprep.subr.mxu0 0.0
    %1546 = vmatpush1.msra.mxu0 %v1196
    %1547 = vmatprep.subr.mxu0 0.0
    %1548 = vmatpush1.msra.mxu0 %v1197
    %1549 = vmatprep.subr.mxu0 0.0
    %1550 = vmatpush1.msra.mxu0 %v1198
    %1551 = vmatprep.mubr.f32.mxu0 %v1232
    %1552 = vmatmul.mubr.f32.gmra.mrb[0].mxu0 %v1231
    %v1553 = vpop.f32.mrb[0].mxu0
    %v1554 = vadd.f32 0.0, %v1553
    %v1555 = vpop.f32.mrb[0].mxu0
    %1556 = vmatprep.mubr.f32.mxu0 %v1236
    %1557 = vmatmul.mubr.f32.gmra.mrb[0].mxu0 %v1235
    %v1558 = vpop.f32.mrb[0].mxu0
    %v1559 = vadd.f32 0.0, %v1558
    %v1560 = vpop.f32.mrb[0].mxu0
    %1561 = vmatprep.mubr.f32.mxu0 %v1240
    %1562 = vmatmul.mubr.f32.gmra.mrb[0].mxu0 %v1239
    %v1563 = vpop.f32.mrb[0].mxu0
    %v1564 = vadd.f32 0.0, %v1563
    %v1565 = vpop.f32.mrb[0].mxu0
    %1566 = vmatprep.mubr.f32.mxu0 %v1244
    %1567 = vmatmul.mubr.f32.gmra.mrb[0].mxu0 %v1243
    %v1568 = vpop.f32.mrb[0].mxu0
    %v1569 = vadd.f32 0.0, %v1568
    %v1570 = vpop.f32.mrb[0].mxu0
    %1571 = vmatprep.mubr.f32.mxu0 %v1248
    %1572 = vmatmul.mubr.f32.gmra.mrb[0].mxu0 %v1247
    %v1573 = vpop.f32.mrb[0].mxu0
    %v1574 = vadd.f32 0.0, %v1573
    %v1575 = vpop.f32.mrb[0].mxu0
    %1576 = vmatprep.mubr.f32.mxu0 %v1252
    %1577 = vmatmul.mubr.f32.gmra.mrb[0].mxu0 %v1251
    %v1578 = vpop.f32.mrb[0].mxu0
    %v1579 = vadd.f32 0.0, %v1578
    %v1580 = vpop.f32.mrb[0].mxu0
    %1581 = vmatprep.mubr.f32.mxu0 %v1256
    %1582 = vmatmul.mubr.f32.gmra.mrb[0].mxu0 %v1255
    %v1583 = vpop.f32.mrb[0].mxu0
    %v1584 = vadd.f32 0.0, %v1583
    %v1585 = vpop.f32.mrb[0].mxu0
    %1586 = vmatprep.mubr.f32.mxu0 %v1260
    %1587 = vmatmul.mubr.f32.gmra.mrb[0].mxu0 %v1259
    %v1588 = vpop.f32.mrb[0].mxu0
    %v1589 = vadd.f32 0.0, %v1588
    %v1590 = vpop.f32.mrb[0].mxu0
    %1591 = vmatprep.mubr.f32.mxu0 %v1264
    %1592 = vmatmul.mubr.f32.gmra.mrb[0].mxu0 %v1263
    %v1593 = vpop.f32.mrb[0].mxu0
    %v1594 = vadd.f32 0.0, %v1593
    %v1595 = vpop.f32.mrb[0].mxu0
    %1596 = vmatprep.mubr.f32.mxu0 %v1268
    %1597 = vmatmul.mubr.f32.gmra.mrb[0].mxu0 %v1267
    %v1598 = vpop.f32.mrb[0].mxu0
    %v1599 = vadd.f32 0.0, %v1598
    %v1600 = vpop.f32.mrb[0].mxu0
    %1601 = vmatprep.mubr.f32.mxu0 %v1272
    %1602 = vmatmul.mubr.f32.gmra.mrb[0].mxu0 %v1271
    %v1603 = vpop.f32.mrb[0].mxu0
    %v1604 = vadd.f32 0.0, %v1603
    %v1605 = vpop.f32.mrb[0].mxu0
    %1606 = vmatprep.mubr.f32.mxu0 %v1276
    %1607 = vmatmul.mubr.f32.gmra.mrb[0].mxu0 %v1275
    %v1608 = vpop.f32.mrb[0].mxu0
    %v1609 = vadd.f32 0.0, %v1608
    %v1610 = vpop.f32.mrb[0].mxu0
    %1611 = vmatprep.mubr.f32.mxu0 %v1280
    %1612 = vmatmul.mubr.f32.gmra.mrb[0].mxu0 %v1279
    %v1613 = vpop.f32.mrb[0].mxu0
    %v1614 = vadd.f32 0.0, %v1613
    %v1615 = vpop.f32.mrb[0].mxu0
    %1616 = vmatprep.mubr.f32.mxu0 %v1284
    %1617 = vmatmul.mubr.f32.gmra.mrb[0].mxu0 %v1283
    %v1618 = vpop.f32.mrb[0].mxu0
    %v1619 = vadd.f32 0.0, %v1618
    %v1620 = vpop.f32.mrb[0].mxu0
    %1621 = vmatprep.mubr.f32.mxu0 %v1288
    %1622 = vmatmul.mubr.f32.gmra.mrb[0].mxu0 %v1287
    %v1623 = vpop.f32.mrb[0].mxu0
    %v1624 = vadd.f32 0.0, %v1623
    %v1625 = vpop.f32.mrb[0].mxu0
    %1626 = vmatprep.mubr.f32.mxu0 %v1292
    %1627 = vmatmul.mubr.f32.gmra.mrb[0].mxu0 %v1291
    %v1628 = vpop.f32.mrb[0].mxu0
    %v1629 = vadd.f32 0.0, %v1628
    %v1630 = vpop.f32.mrb[0].mxu0
    %1631 = vmatprep.mubr.f32.mxu0 %v1296
    %1632 = vmatmul.mubr.f32.gmra.mrb[0].mxu0 %v1295
    %v1633 = vpop.f32.mrb[0].mxu0
    %v1634 = vadd.f32 0.0, %v1633
    %v1635 = vpop.f32.mrb[0].mxu0
    %1636 = vmatprep.mubr.f32.mxu0 %v1300
    %1637 = vmatmul.mubr.f32.gmra.mrb[0].mxu0 %v1299
    %v1638 = vpop.f32.mrb[0].mxu0
    %v1639 = vadd.f32 0.0, %v1638
    %v1640 = vpop.f32.mrb[0].mxu0
    %1641 = vmatprep.mubr.f32.mxu0 %v1304
    %1642 = vmatmul.mubr.f32.gmra.mrb[0].mxu0 %v1303
    %v1643 = vpop.f32.mrb[0].mxu0
    %v1644 = vadd.f32 0.0, %v1643
    %v1645 = vpop.f32.mrb[0].mxu0
    %1646 = vmatprep.mubr.f32.mxu0 %v1308
    %1647 = vmatmul.mubr.f32.gmra.mrb[0].mxu0 %v1307
    %v1648 = vpop.f32.mrb[0].mxu0
    %v1649 = vadd.f32 0.0, %v1648
    %v1650 = vpop.f32.mrb[0].mxu0
    %1651 = vmatprep.mubr.f32.mxu0 %v1312
    %1652 = vmatmul.mubr.f32.gmra.mrb[0].mxu0 %v1311
    %v1653 = vpop.f32.mrb[0].mxu0
    %v1654 = vadd.f32 0.0, %v1653
    %v1655 = vpop.f32.mrb[0].mxu0
    %1656 = vmatprep.mubr.f32.mxu0 %v1316
    %1657 = vmatmul.mubr.f32.gmra.mrb[0].mxu0 %v1315
    %v1658 = vpop.f32.mrb[0].mxu0
    %v1659 = vadd.f32 0.0, %v1658
    %v1660 = vpop.f32.mrb[0].mxu0
    %1661 = vmatprep.mubr.f32.mxu0 %v1320
    %1662 = vmatmul.mubr.f32.gmra.mrb[0].mxu0 %v1319
    %v1663 = vpop.f32.mrb[0].mxu0
    %v1664 = vadd.f32 0.0, %v1663
    %v1665 = vpop.f32.mrb[0].mxu0
    %1666 = vmatprep.mubr.f32.mxu0 %v1324
    %1667 = vmatmul.mubr.f32.gmra.mrb[0].mxu0 %v1323
    %v1668 = vpop.f32.mrb[0].mxu0
    %v1669 = vadd.f32 0.0, %v1668
    %v1670 = vpop.f32.mrb[0].mxu0
    %1671 = vmatprep.mubr.f32.mxu0 %v1328
    %1672 = vmatmul.mubr.f32.gmra.mrb[0].mxu0 %v1327
    %v1673 = vpop.f32.mrb[0].mxu0
    %v1674 = vadd.f32 0.0, %v1673
    %v1675 = vpop.f32.mrb[0].mxu0
    %1676 = vmatprep.mubr.f32.mxu0 %v1332
    %1677 = vmatmul.mubr.f32.gmra.mrb[0].mxu0 %v1331
    %v1678 = vpop.f32.mrb[0].mxu0
    %v1679 = vadd.f32 0.0, %v1678
    %v1680 = vpop.f32.mrb[0].mxu0
    %1681 = vmatprep.mubr.f32.mxu0 %v1336
    %1682 = vmatmul.mubr.f32.gmra.mrb[0].mxu0 %v1335
    %v1683 = vpop.f32.mrb[0].mxu0
    %v1684 = vadd.f32 0.0, %v1683
    %v1685 = vpop.f32.mrb[0].mxu0
    %1686 = vmatprep.mubr.f32.mxu0 %v1340
    %1687 = vmatmul.mubr.f32.gmra.mrb[0].mxu0 %v1339
    %v1688 = vpop.f32.mrb[0].mxu0
    %v1689 = vadd.f32 0.0, %v1688
    %v1690 = vpop.f32.mrb[0].mxu0
    %1691 = vmatprep.mubr.f32.mxu0 %v1344
    %1692 = vmatmul.mubr.f32.gmra.mrb[0].mxu0 %v1343
    %v1693 = vpop.f32.mrb[0].mxu0
    %v1694 = vadd.f32 0.0, %v1693
    %v1695 = vpop.f32.mrb[0].mxu0
    %1696 = vmatprep.mubr.f32.mxu0 %v1348
    %1697 = vmatmul.mubr.f32.gmra.mrb[0].mxu0 %v1347
    %v1698 = vpop.f32.mrb[0].mxu0
    %v1699 = vadd.f32 0.0, %v1698
    %v1700 = vpop.f32.mrb[0].mxu0
    %1701 = vmatprep.mubr.f32.mxu0 %v1352
    %1702 = vmatmul.mubr.f32.gmra.mrb[0].mxu0 %v1351
    %v1703 = vpop.f32.mrb[0].mxu0
    %v1704 = vadd.f32 0.0, %v1703
    %v1705 = vpop.f32.mrb[0].mxu0
    %1706 = vmatprep.mubr.f32.mxu0 %v1356
    %1707 = vmatmul.mubr.f32.gmra.mrb[0].mxu0 %v1355
    %v1708 = vpop.f32.mrb[0].mxu0
    %v1709 = vadd.f32 0.0, %v1708
    %v1710 = vpop.f32.mrb[0].mxu0
    %1711 = vmatprep.mubr.f32.mxu0 %v1360
    %1712 = vmatmul.mubr.f32.gmra.mrb[0].mxu0 %v1359
    %v1713 = vpop.f32.mrb[0].mxu0
    %v1714 = vadd.f32 0.0, %v1713
    %v1715 = vpop.f32.mrb[0].mxu0
    %1716 = vmatprep.mubr.f32.mxu0 %v1364
    %1717 = vmatmul.mubr.f32.gmra.mrb[0].mxu0 %v1363
    %v1718 = vpop.f32.mrb[0].mxu0
    %v1719 = vadd.f32 0.0, %v1718
    %v1720 = vpop.f32.mrb[0].mxu0
    %1721 = vmatprep.mubr.f32.mxu0 %v1368
    %1722 = vmatmul.mubr.f32.gmra.mrb[0].mxu0 %v1367
    %v1723 = vpop.f32.mrb[0].mxu0
    %v1724 = vadd.f32 0.0, %v1723
    %v1725 = vpop.f32.mrb[0].mxu0
    %1726 = vmatprep.mubr.f32.mxu0 %v1372
    %1727 = vmatmul.mubr.f32.gmra.mrb[0].mxu0 %v1371
    %v1728 = vpop.f32.mrb[0].mxu0
    %v1729 = vadd.f32 0.0, %v1728
    %v1730 = vpop.f32.mrb[0].mxu0
    %1731 = vmatprep.mubr.f32.mxu0 %v1376
    %1732 = vmatmul.mubr.f32.gmra.mrb[0].mxu0 %v1375
    %v1733 = vpop.f32.mrb[0].mxu0
    %v1734 = vadd.f32 0.0, %v1733
    %v1735 = vpop.f32.mrb[0].mxu0
    %1736 = vmatprep.mubr.f32.mxu0 %v1380
    %1737 = vmatmul.mubr.f32.gmra.mrb[0].mxu0 %v1379
    %v1738 = vpop.f32.mrb[0].mxu0
    %v1739 = vadd.f32 0.0, %v1738
    %v1740 = vpop.f32.mrb[0].mxu0
    %1741 = vmatprep.mubr.f32.mxu0 %v1384
    %1742 = vmatmul.mubr.f32.gmra.mrb[0].mxu0 %v1383
    %v1743 = vpop.f32.mrb[0].mxu0
    %v1744 = vadd.f32 0.0, %v1743
    %v1745 = vpop.f32.mrb[0].mxu0
    %1746 = vmatprep.mubr.f32.mxu0 %v1388
    %1747 = vmatmul.mubr.f32.gmra.mrb[0].mxu0 %v1387
    %v1748 = vpop.f32.mrb[0].mxu0
    %v1749 = vadd.f32 0.0, %v1748
    %v1750 = vpop.f32.mrb[0].mxu0
    %1751 = vmatprep.mubr.f32.mxu0 %v1392
    %1752 = vmatmul.mubr.f32.gmra.mrb[0].mxu0 %v1391
    %v1753 = vpop.f32.mrb[0].mxu0
    %v1754 = vadd.f32 0.0, %v1753
    %v1755 = vpop.f32.mrb[0].mxu0
    %1756 = vmatprep.mubr.f32.mxu0 %v1396
    %1757 = vmatmul.mubr.f32.gmra.mrb[0].mxu0 %v1395
    %v1758 = vpop.f32.mrb[0].mxu0
    %v1759 = vadd.f32 0.0, %v1758
    %v1760 = vpop.f32.mrb[0].mxu0
    %1761 = vmatprep.mubr.f32.mxu0 %v1400
    %1762 = vmatmul.mubr.f32.gmra.mrb[0].mxu0 %v1399
    %v1763 = vpop.f32.mrb[0].mxu0
    %v1764 = vadd.f32 0.0, %v1763
    %v1765 = vpop.f32.mrb[0].mxu0
    %1766 = vmatprep.mubr.f32.mxu0 %v1404
    %1767 = vmatmul.mubr.f32.gmra.mrb[0].mxu0 %v1403
    %v1768 = vpop.f32.mrb[0].mxu0
    %v1769 = vadd.f32 0.0, %v1768
    %v1770 = vpop.f32.mrb[0].mxu0
    %1771 = vmatprep.mubr.f32.mxu0 %v1408
    %1772 = vmatmul.mubr.f32.gmra.mrb[0].mxu0 %v1407
    %v1773 = vpop.f32.mrb[0].mxu0
    %v1774 = vadd.f32 0.0, %v1773
    %v1775 = vpop.f32.mrb[0].mxu0
    %1776 = vmatprep.mubr.f32.mxu0 %v1412
    %1777 = vmatmul.mubr.f32.gmra.mrb[0].mxu0 %v1411
    %v1778 = vpop.f32.mrb[0].mxu0
    %v1779 = vadd.f32 0.0, %v1778
    %v1780 = vpop.f32.mrb[0].mxu0
    %1781 = vmatprep.mubr.f32.mxu0 %v1416
    %1782 = vmatmul.mubr.f32.gmra.mrb[0].mxu0 %v1415
    %v1783 = vpop.f32.mrb[0].mxu0
    %v1784 = vadd.f32 0.0, %v1783
    %v1785 = vpop.f32.mrb[0].mxu0
    %1786 = vmatprep.mubr.f32.mxu0 %v1420
    %1787 = vmatmul.mubr.f32.gmra.mrb[0].mxu0 %v1419
    %v1788 = vpop.f32.mrb[0].mxu0
    %v1789 = vadd.f32 0.0, %v1788
    %v1790 = vpop.f32.mrb[0].mxu0
    %1791 = vmatprep.mubr.f32.mxu0 %v1424
    %1792 = vmatmul.mubr.f32.gmra.mrb[0].mxu0 %v1423
    %v1793 = vpop.f32.mrb[0].mxu0
    %v1794 = vadd.f32 0.0, %v1793
    %v1795 = vpop.f32.mrb[0].mxu0
    %1796 = vmatprep.mubr.f32.mxu0 %v1428
    %1797 = vmatmul.mubr.f32.gmra.mrb[0].mxu0 %v1427
    %v1798 = vpop.f32.mrb[0].mxu0
    %v1799 = vadd.f32 0.0, %v1798
    %v1800 = vpop.f32.mrb[0].mxu0
    %1801 = vmatprep.mubr.f32.mxu0 %v1432
    %1802 = vmatmul.mubr.f32.gmra.mrb[0].mxu0 %v1431
    %v1803 = vpop.f32.mrb[0].mxu0
    %v1804 = vadd.f32 0.0, %v1803
    %v1805 = vpop.f32.mrb[0].mxu0
    %1806 = vmatprep.mubr.f32.mxu0 %v1436
    %1807 = vmatmul.mubr.f32.gmra.mrb[0].mxu0 %v1435
    %v1808 = vpop.f32.mrb[0].mxu0
    %v1809 = vadd.f32 0.0, %v1808
    %v1810 = vpop.f32.mrb[0].mxu0
    %1811 = vmatprep.mubr.f32.mxu0 %v1440
    %1812 = vmatmul.mubr.f32.gmra.mrb[0].mxu0 %v1439
    %v1813 = vpop.f32.mrb[0].mxu0
    %v1814 = vadd.f32 0.0, %v1813
    %v1815 = vpop.f32.mrb[0].mxu0
    %1816 = vmatprep.mubr.f32.mxu0 %v1444
    %1817 = vmatmul.mubr.f32.gmra.mrb[0].mxu0 %v1443
    %v1818 = vpop.f32.mrb[0].mxu0
    %v1819 = vadd.f32 0.0, %v1818
    %v1820 = vpop.f32.mrb[0].mxu0
    %1821 = vmatprep.mubr.f32.mxu0 %v1448
    %1822 = vmatmul.mubr.f32.gmra.mrb[0].mxu0 %v1447
    %v1823 = vpop.f32.mrb[0].mxu0
    %v1824 = vadd.f32 0.0, %v1823
    %v1825 = vpop.f32.mrb[0].mxu0
    %1826 = vmatprep.mubr.f32.mxu0 %v1452
    %1827 = vmatmul.mubr.f32.gmra.mrb[0].mxu0 %v1451
    %v1828 = vpop.f32.mrb[0].mxu0
    %v1829 = vadd.f32 0.0, %v1828
    %v1830 = vpop.f32.mrb[0].mxu0
    %1831 = vmatprep.mubr.f32.mxu0 %v1456
    %1832 = vmatmul.mubr.f32.gmra.mrb[0].mxu0 %v1455
    %v1833 = vpop.f32.mrb[0].mxu0
    %v1834 = vadd.f32 0.0, %v1833
    %v1835 = vpop.f32.mrb[0].mxu0
    %1836 = vmatprep.mubr.f32.mxu0 %v1460
    %1837 = vmatmul.mubr.f32.gmra.mrb[0].mxu0 %v1459
    %v1838 = vpop.f32.mrb[0].mxu0
    %v1839 = vadd.f32 0.0, %v1838
    %v1840 = vpop.f32.mrb[0].mxu0
    %1841 = vmatprep.mubr.f32.mxu0 %v1464
    %1842 = vmatmul.mubr.f32.gmra.mrb[0].mxu0 %v1463
    %v1843 = vpop.f32.mrb[0].mxu0
    %v1844 = vadd.f32 0.0, %v1843
    %v1845 = vpop.f32.mrb[0].mxu0
    %1846 = vmatprep.mubr.f32.mxu0 %v1468
    %1847 = vmatmul.mubr.f32.gmra.mrb[0].mxu0 %v1467
    %v1848 = vpop.f32.mrb[0].mxu0
    %v1849 = vadd.f32 0.0, %v1848
    %v1850 = vpop.f32.mrb[0].mxu0
    %1851 = vmatprep.mubr.f32.mxu0 %v1472
    %1852 = vmatmul.mubr.f32.gmra.mrb[0].mxu0 %v1471
    %v1853 = vpop.f32.mrb[0].mxu0
    %v1854 = vadd.f32 0.0, %v1853
    %v1855 = vpop.f32.mrb[0].mxu0
    %1856 = vmatprep.mubr.f32.mxu0 %v1476
    %1857 = vmatmul.mubr.f32.gmra.mrb[0].mxu0 %v1475
    %v1858 = vpop.f32.mrb[0].mxu0
    %v1859 = vadd.f32 0.0, %v1858
    %v1860 = vpop.f32.mrb[0].mxu0
    %1861 = vmatprep.mubr.f32.mxu0 %v1480
    %1862 = vmatmul.mubr.f32.gmra.mrb[0].mxu0 %v1479
    %v1863 = vpop.f32.mrb[0].mxu0
    %v1864 = vadd.f32 0.0, %v1863
    %v1865 = vpop.f32.mrb[0].mxu0
    %1866 = vmatprep.mubr.f32.mxu0 %v1484
    %1867 = vmatmul.mubr.f32.gmra.mrb[0].mxu0 %v1483
    %v1868 = vpop.f32.mrb[0].mxu0
    %v1869 = vadd.f32 0.0, %v1868
    %v1870 = vpop.f32.mrb[0].mxu0
    %1871 = vdwg.mxu0
    %1872 = vmatprep.subr.mxu0 0.0
    %1873 = vmatpush1.msra.mxu0 %v1199
    %1874 = vmatprep.subr.mxu0 0.0
    %1875 = vmatpush1.msra.mxu0 %v1200
    %1876 = vmatprep.subr.mxu0 0.0
    %1877 = vmatpush1.msra.mxu0 %v1201
    %1878 = vmatprep.subr.mxu0 0.0
    %1879 = vmatpush1.msra.mxu0 %v1202
    %1880 = vmatprep.subr.mxu0 0.0
    %1881 = vmatpush1.msra.mxu0 %v1203
    %1882 = vmatprep.subr.mxu0 0.0
    %1883 = vmatpush1.msra.mxu0 %v1204
    %1884 = vmatprep.subr.mxu0 0.0
    %1885 = vmatpush1.msra.mxu0 %v1205
    %1886 = vmatprep.subr.mxu0 0.0
    %1887 = vmatpush1.msra.mxu0 %v1206
    %1888 = vmatprep.subr.mxu0 0.0
    %1889 = vmatpush1.msra.mxu0 %v1207
    %1890 = vmatprep.subr.mxu0 0.0
    %1891 = vmatpush1.msra.mxu0 %v1208
    %1892 = vmatprep.subr.mxu0 0.0
    %1893 = vmatpush1.msra.mxu0 %v1209
    %1894 = vmatprep.subr.mxu0 0.0
    %1895 = vmatpush1.msra.mxu0 %v1210
    %1896 = vmatprep.subr.mxu0 0.0
    %1897 = vmatpush1.msra.mxu0 %v1211
    %1898 = vmatprep.subr.mxu0 0.0
    %1899 = vmatpush1.msra.mxu0 %v1212
    %1900 = vmatprep.subr.mxu0 0.0
    %1901 = vmatpush1.msra.mxu0 %v1213
    %1902 = vmatprep.subr.mxu0 0.0
    %1903 = vmatpush1.msra.mxu0 %v1214
    %1904 = vmatprep.subr.mxu0 0.0
    %1905 = vmatpush1.msra.mxu0 %v1215
    %1906 = vmatprep.subr.mxu0 0.0
    %1907 = vmatpush1.msra.mxu0 %v1216
    %1908 = vmatprep.subr.mxu0 0.0
    %1909 = vmatpush1.msra.mxu0 %v1217
    %1910 = vmatprep.subr.mxu0 0.0
    %1911 = vmatpush1.msra.mxu0 %v1218
    %1912 = vmatprep.subr.mxu0 0.0
    %1913 = vmatpush1.msra.mxu0 %v1219
    %1914 = vmatprep.subr.mxu0 0.0
    %1915 = vmatpush1.msra.mxu0 %v1220
    %1916 = vmatprep.subr.mxu0 0.0
    %1917 = vmatpush1.msra.mxu0 %v1221
    %1918 = vmatprep.subr.mxu0 0.0
    %1919 = vmatpush1.msra.mxu0 %v1222
    %1920 = vmatprep.subr.mxu0 0.0
    %1921 = vmatpush1.msra.mxu0 %v1223
    %1922 = vmatprep.subr.mxu0 0.0
    %1923 = vmatpush1.msra.mxu0 %v1224
    %1924 = vmatprep.subr.mxu0 0.0
    %1925 = vmatpush1.msra.mxu0 %v1225
    %1926 = vmatprep.subr.mxu0 0.0
    %1927 = vmatpush1.msra.mxu0 %v1226
    %1928 = vmatprep.subr.mxu0 0.0
    %1929 = vmatpush1.msra.mxu0 %v1227
    %1930 = vmatprep.subr.mxu0 0.0
    %1931 = vmatpush1.msra.mxu0 %v1228
    %1932 = vmatprep.subr.mxu0 0.0
    %1933 = vmatpush1.msra.mxu0 %v1229
    %1934 = vmatprep.subr.mxu0 0.0
    %1935 = vmatpush1.msra.mxu0 %v1230
    %1936 = vmatprep.mubr.f32.mxu0 %v1234
    %1937 = vmatmul.mubr.f32.gmra.mrb[0].mxu0 %v1233
    %v1938 = vpop.f32.mrb[0].mxu0
    %v1939 = vadd.f32 %v1554, %v1938
    %v1940 = vpop.f32.mrb[0].mxu0
    %1941 = vmatprep.mubr.f32.mxu0 %v1238
    %1942 = vmatmul.mubr.f32.gmra.mrb[0].mxu0 %v1237
    %v1943 = vpop.f32.mrb[0].mxu0
    %v1944 = vadd.f32 %v1559, %v1943
    %v1945 = vpop.f32.mrb[0].mxu0
    %1946 = vmatprep.mubr.f32.mxu0 %v1242
    %1947 = vmatmul.mubr.f32.gmra.mrb[0].mxu0 %v1241
    %v1948 = vpop.f32.mrb[0].mxu0
    %v1949 = vadd.f32 %v1564, %v1948
    %v1950 = vpop.f32.mrb[0].mxu0
    %1951 = vmatprep.mubr.f32.mxu0 %v1246
    %1952 = vmatmul.mubr.f32.gmra.mrb[0].mxu0 %v1245
    %v1953 = vpop.f32.mrb[0].mxu0
    %v1954 = vadd.f32 %v1569, %v1953
    %v1955 = vpop.f32.mrb[0].mxu0
    %1956 = vmatprep.mubr.f32.mxu0 %v1250
    %1957 = vmatmul.mubr.f32.gmra.mrb[0].mxu0 %v1249
    %v1958 = vpop.f32.mrb[0].mxu0
    %v1959 = vadd.f32 %v1574, %v1958
    %v1960 = vpop.f32.mrb[0].mxu0
    %1961 = vmatprep.mubr.f32.mxu0 %v1254
    %1962 = vmatmul.mubr.f32.gmra.mrb[0].mxu0 %v1253
    %v1963 = vpop.f32.mrb[0].mxu0
    %v1964 = vadd.f32 %v1579, %v1963
    %v1965 = vpop.f32.mrb[0].mxu0
    %1966 = vmatprep.mubr.f32.mxu0 %v1258
    %1967 = vmatmul.mubr.f32.gmra.mrb[0].mxu0 %v1257
    %v1968 = vpop.f32.mrb[0].mxu0
    %v1969 = vadd.f32 %v1584, %v1968
    %v1970 = vpop.f32.mrb[0].mxu0
    %1971 = vmatprep.mubr.f32.mxu0 %v1262
    %1972 = vmatmul.mubr.f32.gmra.mrb[0].mxu0 %v1261
    %v1973 = vpop.f32.mrb[0].mxu0
    %v1974 = vadd.f32 %v1589, %v1973
    %v1975 = vpop.f32.mrb[0].mxu0
    %1976 = vmatprep.mubr.f32.mxu0 %v1266
    %1977 = vmatmul.mubr.f32.gmra.mrb[0].mxu0 %v1265
    %v1978 = vpop.f32.mrb[0].mxu0
    %v1979 = vadd.f32 %v1594, %v1978
    %v1980 = vpop.f32.mrb[0].mxu0
    %1981 = vmatprep.mubr.f32.mxu0 %v1270
    %1982 = vmatmul.mubr.f32.gmra.mrb[0].mxu0 %v1269
    %v1983 = vpop.f32.mrb[0].mxu0
    %v1984 = vadd.f32 %v1599, %v1983
    %v1985 = vpop.f32.mrb[0].mxu0
    %1986 = vmatprep.mubr.f32.mxu0 %v1274
    %1987 = vmatmul.mubr.f32.gmra.mrb[0].mxu0 %v1273
    %v1988 = vpop.f32.mrb[0].mxu0
    %v1989 = vadd.f32 %v1604, %v1988
    %v1990 = vpop.f32.mrb[0].mxu0
    %1991 = vmatprep.mubr.f32.mxu0 %v1278
    %1992 = vmatmul.mubr.f32.gmra.mrb[0].mxu0 %v1277
    %v1993 = vpop.f32.mrb[0].mxu0
    %v1994 = vadd.f32 %v1609, %v1993
    %v1995 = vpop.f32.mrb[0].mxu0
    %1996 = vmatprep.mubr.f32.mxu0 %v1282
    %1997 = vmatmul.mubr.f32.gmra.mrb[0].mxu0 %v1281
    %v1998 = vpop.f32.mrb[0].mxu0
    %v1999 = vadd.f32 %v1614, %v1998
    %v2000 = vpop.f32.mrb[0].mxu0
    %2001 = vmatprep.mubr.f32.mxu0 %v1286
    %2002 = vmatmul.mubr.f32.gmra.mrb[0].mxu0 %v1285
    %v2003 = vpop.f32.mrb[0].mxu0
    %v2004 = vadd.f32 %v1619, %v2003
    %v2005 = vpop.f32.mrb[0].mxu0
    %2006 = vmatprep.mubr.f32.mxu0 %v1290
    %2007 = vmatmul.mubr.f32.gmra.mrb[0].mxu0 %v1289
    %v2008 = vpop.f32.mrb[0].mxu0
    %v2009 = vadd.f32 %v1624, %v2008
    %v2010 = vpop.f32.mrb[0].mxu0
    %2011 = vmatprep.mubr.f32.mxu0 %v1294
    %2012 = vmatmul.mubr.f32.gmra.mrb[0].mxu0 %v1293
    %v2013 = vpop.f32.mrb[0].mxu0
    %v2014 = vadd.f32 %v1629, %v2013
    %v2015 = vpop.f32.mrb[0].mxu0
    %2016 = vmatprep.mubr.f32.mxu0 %v1298
    %2017 = vmatmul.mubr.f32.gmra.mrb[0].mxu0 %v1297
    %v2018 = vpop.f32.mrb[0].mxu0
    %v2019 = vadd.f32 %v1634, %v2018
    %v2020 = vpop.f32.mrb[0].mxu0
    %2021 = vmatprep.mubr.f32.mxu0 %v1302
    %2022 = vmatmul.mubr.f32.gmra.mrb[0].mxu0 %v1301
    %v2023 = vpop.f32.mrb[0].mxu0
    %v2024 = vadd.f32 %v1639, %v2023
    %v2025 = vpop.f32.mrb[0].mxu0
    %2026 = vmatprep.mubr.f32.mxu0 %v1306
    %2027 = vmatmul.mubr.f32.gmra.mrb[0].mxu0 %v1305
    %v2028 = vpop.f32.mrb[0].mxu0
    %v2029 = vadd.f32 %v1644, %v2028
    %v2030 = vpop.f32.mrb[0].mxu0
    %2031 = vmatprep.mubr.f32.mxu0 %v1310
    %2032 = vmatmul.mubr.f32.gmra.mrb[0].mxu0 %v1309
    %v2033 = vpop.f32.mrb[0].mxu0
    %v2034 = vadd.f32 %v1649, %v2033
    %v2035 = vpop.f32.mrb[0].mxu0
    %2036 = vmatprep.mubr.f32.mxu0 %v1314
    %2037 = vmatmul.mubr.f32.gmra.mrb[0].mxu0 %v1313
    %v2038 = vpop.f32.mrb[0].mxu0
    %v2039 = vadd.f32 %v1654, %v2038
    %v2040 = vpop.f32.mrb[0].mxu0
    %2041 = vmatprep.mubr.f32.mxu0 %v1318
    %2042 = vmatmul.mubr.f32.gmra.mrb[0].mxu0 %v1317
    %v2043 = vpop.f32.mrb[0].mxu0
    %v2044 = vadd.f32 %v1659, %v2043
    %v2045 = vpop.f32.mrb[0].mxu0
    %2046 = vmatprep.mubr.f32.mxu0 %v1322
    %2047 = vmatmul.mubr.f32.gmra.mrb[0].mxu0 %v1321
    %v2048 = vpop.f32.mrb[0].mxu0
    %v2049 = vadd.f32 %v1664, %v2048
    %v2050 = vpop.f32.mrb[0].mxu0
    %2051 = vmatprep.mubr.f32.mxu0 %v1326
    %2052 = vmatmul.mubr.f32.gmra.mrb[0].mxu0 %v1325
    %v2053 = vpop.f32.mrb[0].mxu0
    %v2054 = vadd.f32 %v1669, %v2053
    %v2055 = vpop.f32.mrb[0].mxu0
    %2056 = vmatprep.mubr.f32.mxu0 %v1330
    %2057 = vmatmul.mubr.f32.gmra.mrb[0].mxu0 %v1329
    %v2058 = vpop.f32.mrb[0].mxu0
    %v2059 = vadd.f32 %v1674, %v2058
    %v2060 = vpop.f32.mrb[0].mxu0
    %2061 = vmatprep.mubr.f32.mxu0 %v1334
    %2062 = vmatmul.mubr.f32.gmra.mrb[0].mxu0 %v1333
    %v2063 = vpop.f32.mrb[0].mxu0
    %v2064 = vadd.f32 %v1679, %v2063
    %v2065 = vpop.f32.mrb[0].mxu0
    %2066 = vmatprep.mubr.f32.mxu0 %v1338
    %2067 = vmatmul.mubr.f32.gmra.mrb[0].mxu0 %v1337
    %v2068 = vpop.f32.mrb[0].mxu0
    %v2069 = vadd.f32 %v1684, %v2068
    %v2070 = vpop.f32.mrb[0].mxu0
    %2071 = vmatprep.mubr.f32.mxu0 %v1342
    %2072 = vmatmul.mubr.f32.gmra.mrb[0].mxu0 %v1341
    %v2073 = vpop.f32.mrb[0].mxu0
    %v2074 = vadd.f32 %v1689, %v2073
    %v2075 = vpop.f32.mrb[0].mxu0
    %2076 = vmatprep.mubr.f32.mxu0 %v1346
    %2077 = vmatmul.mubr.f32.gmra.mrb[0].mxu0 %v1345
    %v2078 = vpop.f32.mrb[0].mxu0
    %v2079 = vadd.f32 %v1694, %v2078
    %v2080 = vpop.f32.mrb[0].mxu0
    %2081 = vmatprep.mubr.f32.mxu0 %v1350
    %2082 = vmatmul.mubr.f32.gmra.mrb[0].mxu0 %v1349
    %v2083 = vpop.f32.mrb[0].mxu0
    %v2084 = vadd.f32 %v1699, %v2083
    %v2085 = vpop.f32.mrb[0].mxu0
    %2086 = vmatprep.mubr.f32.mxu0 %v1354
    %2087 = vmatmul.mubr.f32.gmra.mrb[0].mxu0 %v1353
    %v2088 = vpop.f32.mrb[0].mxu0
    %v2089 = vadd.f32 %v1704, %v2088
    %v2090 = vpop.f32.mrb[0].mxu0
    %2091 = vmatprep.mubr.f32.mxu0 %v1358
    %2092 = vmatmul.mubr.f32.gmra.mrb[0].mxu0 %v1357
    %v2093 = vpop.f32.mrb[0].mxu0
    %v2094 = vadd.f32 %v1709, %v2093
    %v2095 = vpop.f32.mrb[0].mxu0
    %2096 = vmatprep.mubr.f32.mxu0 %v1362
    %2097 = vmatmul.mubr.f32.gmra.mrb[0].mxu0 %v1361
    %v2098 = vpop.f32.mrb[0].mxu0
    %v2099 = vadd.f32 %v1714, %v2098
    %v2100 = vpop.f32.mrb[0].mxu0
    %2101 = vmatprep.mubr.f32.mxu0 %v1366
    %2102 = vmatmul.mubr.f32.gmra.mrb[0].mxu0 %v1365
    %v2103 = vpop.f32.mrb[0].mxu0
    %v2104 = vadd.f32 %v1719, %v2103
    %v2105 = vpop.f32.mrb[0].mxu0
    %2106 = vmatprep.mubr.f32.mxu0 %v1370
    %2107 = vmatmul.mubr.f32.gmra.mrb[0].mxu0 %v1369
    %v2108 = vpop.f32.mrb[0].mxu0
    %v2109 = vadd.f32 %v1724, %v2108
    %v2110 = vpop.f32.mrb[0].mxu0
    %2111 = vmatprep.mubr.f32.mxu0 %v1374
    %2112 = vmatmul.mubr.f32.gmra.mrb[0].mxu0 %v1373
    %v2113 = vpop.f32.mrb[0].mxu0
    %v2114 = vadd.f32 %v1729, %v2113
    %v2115 = vpop.f32.mrb[0].mxu0
    %2116 = vmatprep.mubr.f32.mxu0 %v1378
    %2117 = vmatmul.mubr.f32.gmra.mrb[0].mxu0 %v1377
    %v2118 = vpop.f32.mrb[0].mxu0
    %v2119 = vadd.f32 %v1734, %v2118
    %v2120 = vpop.f32.mrb[0].mxu0
    %2121 = vmatprep.mubr.f32.mxu0 %v1382
    %2122 = vmatmul.mubr.f32.gmra.mrb[0].mxu0 %v1381
    %v2123 = vpop.f32.mrb[0].mxu0
    %v2124 = vadd.f32 %v1739, %v2123
    %v2125 = vpop.f32.mrb[0].mxu0
    %2126 = vmatprep.mubr.f32.mxu0 %v1386
    %2127 = vmatmul.mubr.f32.gmra.mrb[0].mxu0 %v1385
    %v2128 = vpop.f32.mrb[0].mxu0
    %v2129 = vadd.f32 %v1744, %v2128
    %v2130 = vpop.f32.mrb[0].mxu0
    %2131 = vmatprep.mubr.f32.mxu0 %v1390
    %2132 = vmatmul.mubr.f32.gmra.mrb[0].mxu0 %v1389
    %v2133 = vpop.f32.mrb[0].mxu0
    %v2134 = vadd.f32 %v1749, %v2133
    %v2135 = vpop.f32.mrb[0].mxu0
    %2136 = vmatprep.mubr.f32.mxu0 %v1394
    %2137 = vmatmul.mubr.f32.gmra.mrb[0].mxu0 %v1393
    %v2138 = vpop.f32.mrb[0].mxu0
    %v2139 = vadd.f32 %v1754, %v2138
    %v2140 = vpop.f32.mrb[0].mxu0
    %2141 = vmatprep.mubr.f32.mxu0 %v1398
    %2142 = vmatmul.mubr.f32.gmra.mrb[0].mxu0 %v1397
    %v2143 = vpop.f32.mrb[0].mxu0
    %v2144 = vadd.f32 %v1759, %v2143
    %v2145 = vpop.f32.mrb[0].mxu0
    %2146 = vmatprep.mubr.f32.mxu0 %v1402
    %2147 = vmatmul.mubr.f32.gmra.mrb[0].mxu0 %v1401
    %v2148 = vpop.f32.mrb[0].mxu0
    %v2149 = vadd.f32 %v1764, %v2148
    %v2150 = vpop.f32.mrb[0].mxu0
    %2151 = vmatprep.mubr.f32.mxu0 %v1406
    %2152 = vmatmul.mubr.f32.gmra.mrb[0].mxu0 %v1405
    %v2153 = vpop.f32.mrb[0].mxu0
    %v2154 = vadd.f32 %v1769, %v2153
    %v2155 = vpop.f32.mrb[0].mxu0
    %2156 = vmatprep.mubr.f32.mxu0 %v1410
    %2157 = vmatmul.mubr.f32.gmra.mrb[0].mxu0 %v1409
    %v2158 = vpop.f32.mrb[0].mxu0
    %v2159 = vadd.f32 %v1774, %v2158
    %v2160 = vpop.f32.mrb[0].mxu0
    %2161 = vmatprep.mubr.f32.mxu0 %v1414
    %2162 = vmatmul.mubr.f32.gmra.mrb[0].mxu0 %v1413
    %v2163 = vpop.f32.mrb[0].mxu0
    %v2164 = vadd.f32 %v1779, %v2163
    %v2165 = vpop.f32.mrb[0].mxu0
    %2166 = vmatprep.mubr.f32.mxu0 %v1418
    %2167 = vmatmul.mubr.f32.gmra.mrb[0].mxu0 %v1417
    %v2168 = vpop.f32.mrb[0].mxu0
    %v2169 = vadd.f32 %v1784, %v2168
    %v2170 = vpop.f32.mrb[0].mxu0
    %2171 = vmatprep.mubr.f32.mxu0 %v1422
    %2172 = vmatmul.mubr.f32.gmra.mrb[0].mxu0 %v1421
    %v2173 = vpop.f32.mrb[0].mxu0
    %v2174 = vadd.f32 %v1789, %v2173
    %v2175 = vpop.f32.mrb[0].mxu0
    %2176 = vmatprep.mubr.f32.mxu0 %v1426
    %2177 = vmatmul.mubr.f32.gmra.mrb[0].mxu0 %v1425
    %v2178 = vpop.f32.mrb[0].mxu0
    %v2179 = vadd.f32 %v1794, %v2178
    %v2180 = vpop.f32.mrb[0].mxu0
    %2181 = vmatprep.mubr.f32.mxu0 %v1430
    %2182 = vmatmul.mubr.f32.gmra.mrb[0].mxu0 %v1429
    %v2183 = vpop.f32.mrb[0].mxu0
    %v2184 = vadd.f32 %v1799, %v2183
    %v2185 = vpop.f32.mrb[0].mxu0
    %2186 = vmatprep.mubr.f32.mxu0 %v1434
    %2187 = vmatmul.mubr.f32.gmra.mrb[0].mxu0 %v1433
    %v2188 = vpop.f32.mrb[0].mxu0
    %v2189 = vadd.f32 %v1804, %v2188
    %v2190 = vpop.f32.mrb[0].mxu0
    %2191 = vmatprep.mubr.f32.mxu0 %v1438
    %2192 = vmatmul.mubr.f32.gmra.mrb[0].mxu0 %v1437
    %v2193 = vpop.f32.mrb[0].mxu0
    %v2194 = vadd.f32 %v1809, %v2193
    %v2195 = vpop.f32.mrb[0].mxu0
    %2196 = vmatprep.mubr.f32.mxu0 %v1442
    %2197 = vmatmul.mubr.f32.gmra.mrb[0].mxu0 %v1441
    %v2198 = vpop.f32.mrb[0].mxu0
    %v2199 = vadd.f32 %v1814, %v2198
    %v2200 = vpop.f32.mrb[0].mxu0
    %2201 = vmatprep.mubr.f32.mxu0 %v1446
    %2202 = vmatmul.mubr.f32.gmra.mrb[0].mxu0 %v1445
    %v2203 = vpop.f32.mrb[0].mxu0
    %v2204 = vadd.f32 %v1819, %v2203
    %v2205 = vpop.f32.mrb[0].mxu0
    %2206 = vmatprep.mubr.f32.mxu0 %v1450
    %2207 = vmatmul.mubr.f32.gmra.mrb[0].mxu0 %v1449
    %v2208 = vpop.f32.mrb[0].mxu0
    %v2209 = vadd.f32 %v1824, %v2208
    %v2210 = vpop.f32.mrb[0].mxu0
    %2211 = vmatprep.mubr.f32.mxu0 %v1454
    %2212 = vmatmul.mubr.f32.gmra.mrb[0].mxu0 %v1453
    %v2213 = vpop.f32.mrb[0].mxu0
    %v2214 = vadd.f32 %v1829, %v2213
    %v2215 = vpop.f32.mrb[0].mxu0
    %2216 = vmatprep.mubr.f32.mxu0 %v1458
    %2217 = vmatmul.mubr.f32.gmra.mrb[0].mxu0 %v1457
    %v2218 = vpop.f32.mrb[0].mxu0
    %v2219 = vadd.f32 %v1834, %v2218
    %v2220 = vpop.f32.mrb[0].mxu0
    %2221 = vmatprep.mubr.f32.mxu0 %v1462
    %2222 = vmatmul.mubr.f32.gmra.mrb[0].mxu0 %v1461
    %v2223 = vpop.f32.mrb[0].mxu0
    %v2224 = vadd.f32 %v1839, %v2223
    %v2225 = vpop.f32.mrb[0].mxu0
    %2226 = vmatprep.mubr.f32.mxu0 %v1466
    %2227 = vmatmul.mubr.f32.gmra.mrb[0].mxu0 %v1465
    %v2228 = vpop.f32.mrb[0].mxu0
    %v2229 = vadd.f32 %v1844, %v2228
    %v2230 = vpop.f32.mrb[0].mxu0
    %2231 = vmatprep.mubr.f32.mxu0 %v1470
    %2232 = vmatmul.mubr.f32.gmra.mrb[0].mxu0 %v1469
    %v2233 = vpop.f32.mrb[0].mxu0
    %v2234 = vadd.f32 %v1849, %v2233
    %v2235 = vpop.f32.mrb[0].mxu0
    %2236 = vmatprep.mubr.f32.mxu0 %v1474
    %2237 = vmatmul.mubr.f32.gmra.mrb[0].mxu0 %v1473
    %v2238 = vpop.f32.mrb[0].mxu0
    %v2239 = vadd.f32 %v1854, %v2238
    %v2240 = vpop.f32.mrb[0].mxu0
    %2241 = vmatprep.mubr.f32.mxu0 %v1478
    %2242 = vmatmul.mubr.f32.gmra.mrb[0].mxu0 %v1477
    %v2243 = vpop.f32.mrb[0].mxu0
    %v2244 = vadd.f32 %v1859, %v2243
    %v2245 = vpop.f32.mrb[0].mxu0
    %2246 = vmatprep.mubr.f32.mxu0 %v1482
    %2247 = vmatmul.mubr.f32.gmra.mrb[0].mxu0 %v1481
    %v2248 = vpop.f32.mrb[0].mxu0
    %v2249 = vadd.f32 %v1864, %v2248
    %v2250 = vpop.f32.mrb[0].mxu0
    %2251 = vmatprep.mubr.f32.mxu0 %v1486
    %2252 = vmatmul.mubr.f32.gmra.mrb[0].mxu0 %v1485
    %v2253 = vpop.f32.mrb[0].mxu0
    %v2254 = vadd.f32 %v1869, %v2253
    %v2255 = vpop.f32.mrb[0].mxu0
    %2256 = vdwg.mxu0
    %v2257 = vmax.f32 %v1939, %v2019
    %v2258 = vmax.f32 %v1944, %v2024
    %v2259 = vmax.f32 %v1949, %v2029
    %v2260 = vmax.f32 %v1954, %v2034
    %v2261 = vmax.f32 %v1959, %v2039
    %v2262 = vmax.f32 %v1964, %v2044
    %v2263 = vmax.f32 %v1969, %v2049
    %v2264 = vmax.f32 %v1974, %v2054
    %v2265 = vmax.f32 %v1979, %v2059
    %v2266 = vmax.f32 %v1984, %v2064
    %v2267 = vmax.f32 %v1989, %v2069
    %v2268 = vmax.f32 %v1994, %v2074
    %v2269 = vmax.f32 %v1999, %v2079
    %v2270 = vmax.f32 %v2004, %v2084
    %v2271 = vmax.f32 %v2009, %v2089
    %v2272 = vmax.f32 %v2014, %v2094
    %v2273 = vmax.f32 %v2099, %v2179
    %v2274 = vmax.f32 %v2104, %v2184
    %v2275 = vmax.f32 %v2109, %v2189
    %v2276 = vmax.f32 %v2114, %v2194
    %v2277 = vmax.f32 %v2119, %v2199
    %v2278 = vmax.f32 %v2124, %v2204
    %v2279 = vmax.f32 %v2129, %v2209
    %v2280 = vmax.f32 %v2134, %v2214
    %v2281 = vmax.f32 %v2139, %v2219
    %v2282 = vmax.f32 %v2144, %v2224
    %v2283 = vmax.f32 %v2149, %v2229
    %v2284 = vmax.f32 %v2154, %v2234
    %v2285 = vmax.f32 %v2159, %v2239
    %v2286 = vmax.f32 %v2164, %v2244
    %v2287 = vmax.f32 %v2169, %v2249
    %v2288 = vmax.f32 %v2174, %v2254
    %v2289 = vmax.f32 %v2257, %v2273
    %v2290 = vmax.f32 %v2258, %v2274
    %v2291 = vmax.f32 %v2259, %v2275
    %v2292 = vmax.f32 %v2260, %v2276
    %v2293 = vmax.f32 %v2261, %v2277
    %v2294 = vmax.f32 %v2262, %v2278
    %v2295 = vmax.f32 %v2263, %v2279
    %v2296 = vmax.f32 %v2264, %v2280
    %v2297 = vmax.f32 %v2265, %v2281
    %v2298 = vmax.f32 %v2266, %v2282
    %v2299 = vmax.f32 %v2267, %v2283
    %v2300 = vmax.f32 %v2268, %v2284
    %v2301 = vmax.f32 %v2269, %v2285
    %v2302 = vmax.f32 %v2270, %v2286
    %v2303 = vmax.f32 %v2271, %v2287
    %v2304 = vmax.f32 %v2272, %v2288
    %2305 = vst.msk [vmem:[#allocation2] sm:$0xff] %vm701, 0.0
    %2306 = vst.msk [vmem:[#allocation2 + $0x8] sm:$0xff] %vm701, 0.0
    %2307 = vst.msk [vmem:[#allocation2 + $0x90] sm:$0xff] %vm701, 0.0
    %2308 = vst.msk [vmem:[#allocation2 + $0x98] sm:$0xff] %vm701, 0.0
    %2309 = vst.msk [vmem:[#allocation2 + $0x10] sm:$0xff] %vm701, %v2289
    %2310 = vst.msk [vmem:[#allocation2 + $0x18] sm:$0xff] %vm701, %v2290
    %2311 = vst.msk [vmem:[#allocation2 + $0x20] sm:$0xff] %vm701, %v2291
    %2312 = vst.msk [vmem:[#allocation2 + $0x28] sm:$0xff] %vm701, %v2292
    %2313 = vst.msk [vmem:[#allocation2 + $0x30] sm:$0xff] %vm701, %v2293
    %2314 = vst.msk [vmem:[#allocation2 + $0x38] sm:$0xff] %vm701, %v2294
    %2315 = vst.msk [vmem:[#allocation2 + $0x40] sm:$0xff] %vm701, %v2295
    %2316 = vst.msk [vmem:[#allocation2 + $0x48] sm:$0xff] %vm701, %v2296
    %2317 = vst.msk [vmem:[#allocation2 + $0x50] sm:$0xff] %vm701, %v2297
    %2318 = vst.msk [vmem:[#allocation2 + $0x58] sm:$0xff] %vm701, %v2298
    %2319 = vst.msk [vmem:[#allocation2 + $0x60] sm:$0xff] %vm701, %v2299
    %2320 = vst.msk [vmem:[#allocation2 + $0x68] sm:$0xff] %vm701, %v2300
    %2321 = vst.msk [vmem:[#allocation2 + $0x70] sm:$0xff] %vm701, %v2301
    %2322 = vst.msk [vmem:[#allocation2 + $0x78] sm:$0xff] %vm701, %v2302
    %2323 = vst.msk [vmem:[#allocation2 + $0x80] sm:$0xff] %vm701, %v2303
    %2324 = vst.msk [vmem:[#allocation2 + $0x88] sm:$0xff] %vm701, %v2304
    %v2325 = vld [vmem:[#allocation2 + $0x7] sm:$0xff]
    %v2326 = vld [vmem:[#allocation2 + $0xf] sm:$0xff]
    %v2327 = vld [vmem:[#allocation2 + $0x17] sm:$0xff]
    %v2328 = vld [vmem:[#allocation2 + $0x1f] sm:$0xff]
    %v2329 = vld [vmem:[#allocation2 + $0x27] sm:$0xff]
    %v2330 = vld [vmem:[#allocation2 + $0x2f] sm:$0xff]
    %v2331 = vld [vmem:[#allocation2 + $0x37] sm:$0xff]
    %v2332 = vld [vmem:[#allocation2 + $0x3f] sm:$0xff]
    %v2333 = vld [vmem:[#allocation2 + $0x47] sm:$0xff]
    %v2334 = vld [vmem:[#allocation2 + $0x4f] sm:$0xff]
    %v2335 = vld [vmem:[#allocation2 + $0x57] sm:$0xff]
    %v2336 = vld [vmem:[#allocation2 + $0x5f] sm:$0xff]
    %v2337 = vld [vmem:[#allocation2 + $0x67] sm:$0xff]
    %v2338 = vld [vmem:[#allocation2 + $0x6f] sm:$0xff]
    %v2339 = vld [vmem:[#allocation2 + $0x77] sm:$0xff]
    %v2340 = vld [vmem:[#allocation2 + $0x7f] sm:$0xff]
    %v2341 = vld [vmem:[#allocation2 + $0x8] sm:$0xff]
    %v2342 = vld [vmem:[#allocation2 + $0x10] sm:$0xff]
    %v2343 = vld [vmem:[#allocation2 + $0x18] sm:$0xff]
    %v2344 = vld [vmem:[#allocation2 + $0x20] sm:$0xff]
    %v2345 = vld [vmem:[#allocation2 + $0x28] sm:$0xff]
    %v2346 = vld [vmem:[#allocation2 + $0x30] sm:$0xff]
    %v2347 = vld [vmem:[#allocation2 + $0x38] sm:$0xff]
    %v2348 = vld [vmem:[#allocation2 + $0x40] sm:$0xff]
    %v2349 = vld [vmem:[#allocation2 + $0x48] sm:$0xff]
    %v2350 = vld [vmem:[#allocation2 + $0x50] sm:$0xff]
    %v2351 = vld [vmem:[#allocation2 + $0x58] sm:$0xff]
    %v2352 = vld [vmem:[#allocation2 + $0x60] sm:$0xff]
    %v2353 = vld [vmem:[#allocation2 + $0x68] sm:$0xff]
    %v2354 = vld [vmem:[#allocation2 + $0x70] sm:$0xff]
    %v2355 = vld [vmem:[#allocation2 + $0x78] sm:$0xff]
    %v2356 = vld [vmem:[#allocation2 + $0x80] sm:$0xff]
    %v2357 = vld [vmem:[#allocation2 + $0x9] sm:$0xff]
    %v2358 = vld [vmem:[#allocation2 + $0x11] sm:$0xff]
    %v2359 = vld [vmem:[#allocation2 + $0x19] sm:$0xff]
    %v2360 = vld [vmem:[#allocation2 + $0x21] sm:$0xff]
    %v2361 = vld [vmem:[#allocation2 + $0x29] sm:$0xff]
    %v2362 = vld [vmem:[#allocation2 + $0x31] sm:$0xff]
    %v2363 = vld [vmem:[#allocation2 + $0x39] sm:$0xff]
    %v2364 = vld [vmem:[#allocation2 + $0x41] sm:$0xff]
    %v2365 = vld [vmem:[#allocation2 + $0x49] sm:$0xff]
    %v2366 = vld [vmem:[#allocation2 + $0x51] sm:$0xff]
    %v2367 = vld [vmem:[#allocation2 + $0x59] sm:$0xff]
    %v2368 = vld [vmem:[#allocation2 + $0x61] sm:$0xff]
    %v2369 = vld [vmem:[#allocation2 + $0x69] sm:$0xff]
    %v2370 = vld [vmem:[#allocation2 + $0x71] sm:$0xff]
    %v2371 = vld [vmem:[#allocation2 + $0x79] sm:$0xff]
    %v2372 = vld [vmem:[#allocation2 + $0x81] sm:$0xff]
    %v2373 = vld [vmem:[#allocation2 + $0x87] sm:$0xff]
    %v2374 = vld [vmem:[#allocation2 + $0x88] sm:$0xff]
    %v2375 = vld [vmem:[#allocation2 + $0x89] sm:$0xff]
    %v2376 = vld [vmem:[#allocation2 + $0x8f] sm:$0xff]
    %v2377 = vld [vmem:[#allocation2 + $0x90] sm:$0xff]
    %v2378 = vld [vmem:[#allocation2 + $0x91] sm:$0xff]
    %2395 = vrot.lane.b32.xlu0 %v2341, 16
    %v2396 = vpop.permute.xlu0 %2395
    %2397 = vrot.lane.b32.xlu0 %v2342, 16
    %v2398 = vpop.permute.xlu0 %2397
    %2399 = vrot.lane.b32.xlu0 %v2343, 16
    %v2400 = vpop.permute.xlu0 %2399
    %2401 = vrot.lane.b32.xlu0 %v2344, 16
    %v2402 = vpop.permute.xlu0 %2401
    %2403 = vrot.lane.b32.xlu0 %v2345, 16
    %v2404 = vpop.permute.xlu0 %2403
    %2405 = vrot.lane.b32.xlu0 %v2346, 16
    %v2406 = vpop.permute.xlu0 %2405
    %2407 = vrot.lane.b32.xlu0 %v2347, 16
    %v2408 = vpop.permute.xlu0 %2407
    %2409 = vrot.lane.b32.xlu0 %v2348, 16
    %v2410 = vpop.permute.xlu0 %2409
    %2411 = vrot.lane.b32.xlu0 %v2349, 16
    %v2412 = vpop.permute.xlu0 %2411
    %2413 = vrot.lane.b32.xlu0 %v2350, 16
    %v2414 = vpop.permute.xlu0 %2413
    %2415 = vrot.lane.b32.xlu0 %v2351, 16
    %v2416 = vpop.permute.xlu0 %2415
    %2417 = vrot.lane.b32.xlu0 %v2352, 16
    %v2418 = vpop.permute.xlu0 %2417
    %2419 = vrot.lane.b32.xlu0 %v2353, 16
    %v2420 = vpop.permute.xlu0 %2419
    %2421 = vrot.lane.b32.xlu0 %v2354, 16
    %v2422 = vpop.permute.xlu0 %2421
    %2423 = vrot.lane.b32.xlu0 %v2355, 16
    %v2424 = vpop.permute.xlu0 %2423
    %2425 = vrot.lane.b32.xlu0 %v2356, 16
    %v2426 = vpop.permute.xlu0 %2425
    %2459 = vrot.lane.b32.xlu0 %v2357, 32
    %v2460 = vpop.permute.xlu0 %2459
    %2461 = vrot.lane.b32.xlu0 %v2358, 32
    %v2462 = vpop.permute.xlu0 %2461
    %2463 = vrot.lane.b32.xlu0 %v2359, 32
    %v2464 = vpop.permute.xlu0 %2463
    %2465 = vrot.lane.b32.xlu0 %v2360, 32
    %v2466 = vpop.permute.xlu0 %2465
    %2467 = vrot.lane.b32.xlu0 %v2361, 32
    %v2468 = vpop.permute.xlu0 %2467
    %2469 = vrot.lane.b32.xlu0 %v2362, 32
    %v2470 = vpop.permute.xlu0 %2469
    %2471 = vrot.lane.b32.xlu0 %v2363, 32
    %v2472 = vpop.permute.xlu0 %2471
    %2473 = vrot.lane.b32.xlu0 %v2364, 32
    %v2474 = vpop.permute.xlu0 %2473
    %2475 = vrot.lane.b32.xlu0 %v2365, 32
    %v2476 = vpop.permute.xlu0 %2475
    %2477 = vrot.lane.b32.xlu0 %v2366, 32
    %v2478 = vpop.permute.xlu0 %2477
    %2479 = vrot.lane.b32.xlu0 %v2367, 32
    %v2480 = vpop.permute.xlu0 %2479
    %2481 = vrot.lane.b32.xlu0 %v2368, 32
    %v2482 = vpop.permute.xlu0 %2481
    %2483 = vrot.lane.b32.xlu0 %v2369, 32
    %v2484 = vpop.permute.xlu0 %2483
    %2485 = vrot.lane.b32.xlu0 %v2370, 32
    %v2486 = vpop.permute.xlu0 %2485
    %2487 = vrot.lane.b32.xlu0 %v2371, 32
    %v2488 = vpop.permute.xlu0 %2487
    %2489 = vrot.lane.b32.xlu0 %v2372, 32
    %v2490 = vpop.permute.xlu0 %2489
    %2523 = vrot.lane.b32.xlu0 %v2326, 48
    %v2524 = vpop.permute.xlu0 %2523
    %2525 = vrot.lane.b32.xlu0 %v2327, 48
    %v2526 = vpop.permute.xlu0 %2525
    %2527 = vrot.lane.b32.xlu0 %v2328, 48
    %v2528 = vpop.permute.xlu0 %2527
    %2529 = vrot.lane.b32.xlu0 %v2329, 48
    %v2530 = vpop.permute.xlu0 %2529
    %2531 = vrot.lane.b32.xlu0 %v2330, 48
    %v2532 = vpop.permute.xlu0 %2531
    %2533 = vrot.lane.b32.xlu0 %v2331, 48
    %v2534 = vpop.permute.xlu0 %2533
    %2535 = vrot.lane.b32.xlu0 %v2332, 48
    %v2536 = vpop.permute.xlu0 %2535
    %2537 = vrot.lane.b32.xlu0 %v2333, 48
    %v2538 = vpop.permute.xlu0 %2537
    %2539 = vrot.lane.b32.xlu0 %v2334, 48
    %v2540 = vpop.permute.xlu0 %2539
    %2541 = vrot.lane.b32.xlu0 %v2335, 48
    %v2542 = vpop.permute.xlu0 %2541
    %2543 = vrot.lane.b32.xlu0 %v2336, 48
    %v2544 = vpop.permute.xlu0 %2543
    %2545 = vrot.lane.b32.xlu0 %v2337, 48
    %v2546 = vpop.permute.xlu0 %2545
    %2547 = vrot.lane.b32.xlu0 %v2338, 48
    %v2548 = vpop.permute.xlu0 %2547
    %2549 = vrot.lane.b32.xlu0 %v2339, 48
    %v2550 = vpop.permute.xlu0 %2549
    %2551 = vrot.lane.b32.xlu0 %v2340, 48
    %v2552 = vpop.permute.xlu0 %2551
    %2553 = vrot.lane.b32.xlu0 %v2373, 48
    %v2554 = vpop.permute.xlu0 %2553
    %2572 = vrot.lane.b32.xlu0 %v2342, 64
    %v2573 = vpop.permute.xlu0 %2572
    %2574 = vrot.lane.b32.xlu0 %v2343, 64
    %v2575 = vpop.permute.xlu0 %2574
    %2576 = vrot.lane.b32.xlu0 %v2344, 64
    %v2577 = vpop.permute.xlu0 %2576
    %2578 = vrot.lane.b32.xlu0 %v2345, 64
    %v2579 = vpop.permute.xlu0 %2578
    %2580 = vrot.lane.b32.xlu0 %v2346, 64
    %v2581 = vpop.permute.xlu0 %2580
    %2582 = vrot.lane.b32.xlu0 %v2347, 64
    %v2583 = vpop.permute.xlu0 %2582
    %2584 = vrot.lane.b32.xlu0 %v2348, 64
    %v2585 = vpop.permute.xlu0 %2584
    %2586 = vrot.lane.b32.xlu0 %v2349, 64
    %v2587 = vpop.permute.xlu0 %2586
    %2588 = vrot.lane.b32.xlu0 %v2350, 64
    %v2589 = vpop.permute.xlu0 %2588
    %2590 = vrot.lane.b32.xlu0 %v2351, 64
    %v2591 = vpop.permute.xlu0 %2590
    %2592 = vrot.lane.b32.xlu0 %v2352, 64
    %v2593 = vpop.permute.xlu0 %2592
    %2594 = vrot.lane.b32.xlu0 %v2353, 64
    %v2595 = vpop.permute.xlu0 %2594
    %2596 = vrot.lane.b32.xlu0 %v2354, 64
    %v2597 = vpop.permute.xlu0 %2596
    %2598 = vrot.lane.b32.xlu0 %v2355, 64
    %v2599 = vpop.permute.xlu0 %2598
    %2600 = vrot.lane.b32.xlu0 %v2356, 64
    %v2601 = vpop.permute.xlu0 %2600
    %2602 = vrot.lane.b32.xlu0 %v2374, 64
    %v2603 = vpop.permute.xlu0 %2602
    %2621 = vrot.lane.b32.xlu0 %v2358, 80
    %v2622 = vpop.permute.xlu0 %2621
    %2623 = vrot.lane.b32.xlu0 %v2359, 80
    %v2624 = vpop.permute.xlu0 %2623
    %2625 = vrot.lane.b32.xlu0 %v2360, 80
    %v2626 = vpop.permute.xlu0 %2625
    %2627 = vrot.lane.b32.xlu0 %v2361, 80
    %v2628 = vpop.permute.xlu0 %2627
    %2629 = vrot.lane.b32.xlu0 %v2362, 80
    %v2630 = vpop.permute.xlu0 %2629
    %2631 = vrot.lane.b32.xlu0 %v2363, 80
    %v2632 = vpop.permute.xlu0 %2631
    %2633 = vrot.lane.b32.xlu0 %v2364, 80
    %v2634 = vpop.permute.xlu0 %2633
    %2635 = vrot.lane.b32.xlu0 %v2365, 80
    %v2636 = vpop.permute.xlu0 %2635
    %2637 = vrot.lane.b32.xlu0 %v2366, 80
    %v2638 = vpop.permute.xlu0 %2637
    %2639 = vrot.lane.b32.xlu0 %v2367, 80
    %v2640 = vpop.permute.xlu0 %2639
    %2641 = vrot.lane.b32.xlu0 %v2368, 80
    %v2642 = vpop.permute.xlu0 %2641
    %2643 = vrot.lane.b32.xlu0 %v2369, 80
    %v2644 = vpop.permute.xlu0 %2643
    %2645 = vrot.lane.b32.xlu0 %v2370, 80
    %v2646 = vpop.permute.xlu0 %2645
    %2647 = vrot.lane.b32.xlu0 %v2371, 80
    %v2648 = vpop.permute.xlu0 %2647
    %2649 = vrot.lane.b32.xlu0 %v2372, 80
    %v2650 = vpop.permute.xlu0 %2649
    %2651 = vrot.lane.b32.xlu0 %v2375, 80
    %v2652 = vpop.permute.xlu0 %2651
    %2670 = vrot.lane.b32.xlu0 %v2327, 96
    %v2671 = vpop.permute.xlu0 %2670
    %2672 = vrot.lane.b32.xlu0 %v2328, 96
    %v2673 = vpop.permute.xlu0 %2672
    %2674 = vrot.lane.b32.xlu0 %v2329, 96
    %v2675 = vpop.permute.xlu0 %2674
    %2676 = vrot.lane.b32.xlu0 %v2330, 96
    %v2677 = vpop.permute.xlu0 %2676
    %2678 = vrot.lane.b32.xlu0 %v2331, 96
    %v2679 = vpop.permute.xlu0 %2678
    %2680 = vrot.lane.b32.xlu0 %v2332, 96
    %v2681 = vpop.permute.xlu0 %2680
    %2682 = vrot.lane.b32.xlu0 %v2333, 96
    %v2683 = vpop.permute.xlu0 %2682
    %2684 = vrot.lane.b32.xlu0 %v2334, 96
    %v2685 = vpop.permute.xlu0 %2684
    %2686 = vrot.lane.b32.xlu0 %v2335, 96
    %v2687 = vpop.permute.xlu0 %2686
    %2688 = vrot.lane.b32.xlu0 %v2336, 96
    %v2689 = vpop.permute.xlu0 %2688
    %2690 = vrot.lane.b32.xlu0 %v2337, 96
    %v2691 = vpop.permute.xlu0 %2690
    %2692 = vrot.lane.b32.xlu0 %v2338, 96
    %v2693 = vpop.permute.xlu0 %2692
    %2694 = vrot.lane.b32.xlu0 %v2339, 96
    %v2695 = vpop.permute.xlu0 %2694
    %2696 = vrot.lane.b32.xlu0 %v2340, 96
    %v2697 = vpop.permute.xlu0 %2696
    %2698 = vrot.lane.b32.xlu0 %v2373, 96
    %v2699 = vpop.permute.xlu0 %2698
    %2700 = vrot.lane.b32.xlu0 %v2376, 96
    %v2701 = vpop.permute.xlu0 %2700
    %2719 = vrot.lane.b32.xlu0 %v2343, 112
    %v2720 = vpop.permute.xlu0 %2719
    %2721 = vrot.lane.b32.xlu0 %v2344, 112
    %v2722 = vpop.permute.xlu0 %2721
    %2723 = vrot.lane.b32.xlu0 %v2345, 112
    %v2724 = vpop.permute.xlu0 %2723
    %2725 = vrot.lane.b32.xlu0 %v2346, 112
    %v2726 = vpop.permute.xlu0 %2725
    %2727 = vrot.lane.b32.xlu0 %v2347, 112
    %v2728 = vpop.permute.xlu0 %2727
    %2729 = vrot.lane.b32.xlu0 %v2348, 112
    %v2730 = vpop.permute.xlu0 %2729
    %2731 = vrot.lane.b32.xlu0 %v2349, 112
    %v2732 = vpop.permute.xlu0 %2731
    %2733 = vrot.lane.b32.xlu0 %v2350, 112
    %v2734 = vpop.permute.xlu0 %2733
    %2735 = vrot.lane.b32.xlu0 %v2351, 112
    %v2736 = vpop.permute.xlu0 %2735
    %2737 = vrot.lane.b32.xlu0 %v2352, 112
    %v2738 = vpop.permute.xlu0 %2737
    %2739 = vrot.lane.b32.xlu0 %v2353, 112
    %v2740 = vpop.permute.xlu0 %2739
    %2741 = vrot.lane.b32.xlu0 %v2354, 112
    %v2742 = vpop.permute.xlu0 %2741
    %2743 = vrot.lane.b32.xlu0 %v2355, 112
    %v2744 = vpop.permute.xlu0 %2743
    %2745 = vrot.lane.b32.xlu0 %v2356, 112
    %v2746 = vpop.permute.xlu0 %2745
    %2747 = vrot.lane.b32.xlu0 %v2374, 112
    %v2748 = vpop.permute.xlu0 %2747
    %2749 = vrot.lane.b32.xlu0 %v2377, 112
    %v2750 = vpop.permute.xlu0 %2749
    %v2767 = vsel %vm701, %v2325, %v2396
    %v2768 = vsel %vm701, %v2326, %v2398
    %v2769 = vsel %vm701, %v2327, %v2400
    %v2770 = vsel %vm701, %v2328, %v2402
    %v2771 = vsel %vm701, %v2329, %v2404
    %v2772 = vsel %vm701, %v2330, %v2406
    %v2773 = vsel %vm701, %v2331, %v2408
    %v2774 = vsel %vm701, %v2332, %v2410
    %v2775 = vsel %vm701, %v2333, %v2412
    %v2776 = vsel %vm701, %v2334, %v2414
    %v2777 = vsel %vm701, %v2335, %v2416
    %v2778 = vsel %vm701, %v2336, %v2418
    %v2779 = vsel %vm701, %v2337, %v2420
    %v2780 = vsel %vm701, %v2338, %v2422
    %v2781 = vsel %vm701, %v2339, %v2424
    %v2782 = vsel %vm701, %v2340, %v2426
    %vm2783 = vcmask 261120
    %v2784 = vsel %vm2783, %v2767, %v2460
    %v2785 = vsel %vm2783, %v2768, %v2462
    %v2786 = vsel %vm2783, %v2769, %v2464
    %v2787 = vsel %vm2783, %v2770, %v2466
    %v2788 = vsel %vm2783, %v2771, %v2468
    %v2789 = vsel %vm2783, %v2772, %v2470
    %v2790 = vsel %vm2783, %v2773, %v2472
    %v2791 = vsel %vm2783, %v2774, %v2474
    %v2792 = vsel %vm2783, %v2775, %v2476
    %v2793 = vsel %vm2783, %v2776, %v2478
    %v2794 = vsel %vm2783, %v2777, %v2480
    %v2795 = vsel %vm2783, %v2778, %v2482
    %v2796 = vsel %vm2783, %v2779, %v2484
    %v2797 = vsel %vm2783, %v2780, %v2486
    %v2798 = vsel %vm2783, %v2781, %v2488
    %v2799 = vsel %vm2783, %v2782, %v2490
    %vm2800 = vcmask 392192
    %v2801 = vsel %vm2800, %v2784, %v2524
    %v2802 = vsel %vm2800, %v2785, %v2526
    %v2803 = vsel %vm2800, %v2786, %v2528
    %v2804 = vsel %vm2800, %v2787, %v2530
    %v2805 = vsel %vm2800, %v2788, %v2532
    %v2806 = vsel %vm2800, %v2789, %v2534
    %v2807 = vsel %vm2800, %v2790, %v2536
    %v2808 = vsel %vm2800, %v2791, %v2538
    %v2809 = vsel %vm2800, %v2792, %v2540
    %v2810 = vsel %vm2800, %v2793, %v2542
    %v2811 = vsel %vm2800, %v2794, %v2544
    %v2812 = vsel %vm2800, %v2795, %v2546
    %v2813 = vsel %vm2800, %v2796, %v2548
    %v2814 = vsel %vm2800, %v2797, %v2550
    %v2815 = vsel %vm2800, %v2798, %v2552
    %v2816 = vsel %vm2800, %v2799, %v2554
    %vm2817 = vcmask 523264
    %v2818 = vsel %vm2817, %v2801, %v2573
    %v2819 = vsel %vm2817, %v2802, %v2575
    %v2820 = vsel %vm2817, %v2803, %v2577
    %v2821 = vsel %vm2817, %v2804, %v2579
    %v2822 = vsel %vm2817, %v2805, %v2581
    %v2823 = vsel %vm2817, %v2806, %v2583
    %v2824 = vsel %vm2817, %v2807, %v2585
    %v2825 = vsel %vm2817, %v2808, %v2587
    %v2826 = vsel %vm2817, %v2809, %v2589
    %v2827 = vsel %vm2817, %v2810, %v2591
    %v2828 = vsel %vm2817, %v2811, %v2593
    %v2829 = vsel %vm2817, %v2812, %v2595
    %v2830 = vsel %vm2817, %v2813, %v2597
    %v2831 = vsel %vm2817, %v2814, %v2599
    %v2832 = vsel %vm2817, %v2815, %v2601
    %v2833 = vsel %vm2817, %v2816, %v2603
    %vm2834 = vcmask 654336
    %v2835 = vsel %vm2834, %v2818, %v2622
    %v2836 = vsel %vm2834, %v2819, %v2624
    %v2837 = vsel %vm2834, %v2820, %v2626
    %v2838 = vsel %vm2834, %v2821, %v2628
    %v2839 = vsel %vm2834, %v2822, %v2630
    %v2840 = vsel %vm2834, %v2823, %v2632
    %v2841 = vsel %vm2834, %v2824, %v2634
    %v2842 = vsel %vm2834, %v2825, %v2636
    %v2843 = vsel %vm2834, %v2826, %v2638
    %v2844 = vsel %vm2834, %v2827, %v2640
    %v2845 = vsel %vm2834, %v2828, %v2642
    %v2846 = vsel %vm2834, %v2829, %v2644
    %v2847 = vsel %vm2834, %v2830, %v2646
    %v2848 = vsel %vm2834, %v2831, %v2648
    %v2849 = vsel %vm2834, %v2832, %v2650
    %v2850 = vsel %vm2834, %v2833, %v2652
    %vm2851 = vcmask 785408
    %v2852 = vsel %vm2851, %v2835, %v2671
    %v2853 = vsel %vm2851, %v2836, %v2673
    %v2854 = vsel %vm2851, %v2837, %v2675
    %v2855 = vsel %vm2851, %v2838, %v2677
    %v2856 = vsel %vm2851, %v2839, %v2679
    %v2857 = vsel %vm2851, %v2840, %v2681
    %v2858 = vsel %vm2851, %v2841, %v2683
    %v2859 = vsel %vm2851, %v2842, %v2685
    %v2860 = vsel %vm2851, %v2843, %v2687
    %v2861 = vsel %vm2851, %v2844, %v2689
    %v2862 = vsel %vm2851, %v2845, %v2691
    %v2863 = vsel %vm2851, %v2846, %v2693
    %v2864 = vsel %vm2851, %v2847, %v2695
    %v2865 = vsel %vm2851, %v2848, %v2697
    %v2866 = vsel %vm2851, %v2849, %v2699
    %v2867 = vsel %vm2851, %v2850, %v2701
    %vm2868 = vcmask 916480
    %v2869 = vsel %vm2868, %v2852, %v2720
    %v2870 = vsel %vm2868, %v2853, %v2722
    %v2871 = vsel %vm2868, %v2854, %v2724
    %v2872 = vsel %vm2868, %v2855, %v2726
    %v2873 = vsel %vm2868, %v2856, %v2728
    %v2874 = vsel %vm2868, %v2857, %v2730
    %v2875 = vsel %vm2868, %v2858, %v2732
    %v2876 = vsel %vm2868, %v2859, %v2734
    %v2877 = vsel %vm2868, %v2860, %v2736
    %v2878 = vsel %vm2868, %v2861, %v2738
    %v2879 = vsel %vm2868, %v2862, %v2740
    %v2880 = vsel %vm2868, %v2863, %v2742
    %v2881 = vsel %vm2868, %v2864, %v2744
    %v2882 = vsel %vm2868, %v2865, %v2746
    %v2883 = vsel %vm2868, %v2866, %v2748
    %v2884 = vsel %vm2868, %v2867, %v2750
    %v2885 = vld [vmem:[%s8] sm:$0xff]
    %v2886 = vld [vmem:[%s8 + $0x8] sm:$0xff]
    %v2887 = vld [vmem:[%s8 + $0x10] sm:$0xff]
    %v2888 = vld [vmem:[%s8 + $0x18] sm:$0xff]
    %v2889 = vld [vmem:[%s8 + $0x20] sm:$0xff]
    %v2890 = vld [vmem:[%s8 + $0x28] sm:$0xff]
    %v2891 = vld [vmem:[%s8 + $0x30] sm:$0xff]
    %v2892 = vld [vmem:[%s8 + $0x38] sm:$0xff]
    %v2893 = vld [vmem:[%s8 + $0x40] sm:$0xff]
    %v2894 = vld [vmem:[%s8 + $0x48] sm:$0xff]
    %v2895 = vld [vmem:[%s8 + $0x50] sm:$0xff]
    %v2896 = vld [vmem:[%s8 + $0x58] sm:$0xff]
    %v2897 = vld [vmem:[%s8 + $0x60] sm:$0xff]
    %v2898 = vld [vmem:[%s8 + $0x68] sm:$0xff]
    %v2899 = vld [vmem:[%s8 + $0x70] sm:$0xff]
    %v2900 = vld [vmem:[%s8 + $0x78] sm:$0xff]
    %v2901 = vld [vmem:[%s8 + $0x80] sm:$0xff]
    %v2902 = vld [vmem:[%s8 + $0x88] sm:$0xff]
    %v2903 = vld [vmem:[%s8 + $0x90] sm:$0xff]
    %v2904 = vld [vmem:[%s8 + $0x98] sm:$0xff]
    %v2905 = vld [vmem:[%s8 + $0xa0] sm:$0xff]
    %v2906 = vld [vmem:[%s8 + $0xa8] sm:$0xff]
    %v2907 = vld [vmem:[%s8 + $0xb0] sm:$0xff]
    %v2908 = vld [vmem:[%s8 + $0xb8] sm:$0xff]
    %v2909 = vld [vmem:[%s8 + $0xc0] sm:$0xff]
    %v2910 = vld [vmem:[%s8 + $0xc8] sm:$0xff]
    %v2911 = vld [vmem:[%s8 + $0xd0] sm:$0xff]
    %v2912 = vld [vmem:[%s8 + $0xd8] sm:$0xff]
    %v2913 = vld [vmem:[%s8 + $0xe0] sm:$0xff]
    %v2914 = vld [vmem:[%s8 + $0xe8] sm:$0xff]
    %v2915 = vld [vmem:[%s8 + $0xf0] sm:$0xff]
    %v2916 = vld [vmem:[%s8 + $0xf8] sm:$0xff]
    %v2917 = vmul.f32 %v2869, %v2885
    %v2918 = vmul.f32 %v2359, %v2886
    %v2919 = vmul.f32 %v2870, %v2887
    %v2920 = vmul.f32 %v2360, %v2888
    %v2921 = vmul.f32 %v2871, %v2889
    %v2922 = vmul.f32 %v2361, %v2890
    %v2923 = vmul.f32 %v2872, %v2891
    %v2924 = vmul.f32 %v2362, %v2892
    %v2925 = vmul.f32 %v2873, %v2893
    %v2926 = vmul.f32 %v2363, %v2894
    %v2927 = vmul.f32 %v2874, %v2895
    %v2928 = vmul.f32 %v2364, %v2896
    %v2929 = vmul.f32 %v2875, %v2897
    %v2930 = vmul.f32 %v2365, %v2898
    %v2931 = vmul.f32 %v2876, %v2899
    %v2932 = vmul.f32 %v2366, %v2900
    %v2933 = vmul.f32 %v2877, %v2901
    %v2934 = vmul.f32 %v2367, %v2902
    %v2935 = vmul.f32 %v2878, %v2903
    %v2936 = vmul.f32 %v2368, %v2904
    %v2937 = vmul.f32 %v2879, %v2905
    %v2938 = vmul.f32 %v2369, %v2906
    %v2939 = vmul.f32 %v2880, %v2907
    %v2940 = vmul.f32 %v2370, %v2908
    %v2941 = vmul.f32 %v2881, %v2909
    %v2942 = vmul.f32 %v2371, %v2910
    %v2943 = vmul.f32 %v2882, %v2911
    %v2944 = vmul.f32 %v2372, %v2912
    %v2945 = vmul.f32 %v2883, %v2913
    %v2946 = vmul.f32 %v2375, %v2914
    %v2947 = vmul.f32 %v2884, %v2915
    %v2948 = vmul.f32 %v2378, %v2916
    %v2949 = vld [vmem:[%s2] sm:$0xff]
    %v2950 = vld [vmem:[%s2 + $0x8] sm:$0xff]
    %v2951 = vld [vmem:[%s2 + $0x10] sm:$0xff]
    %v2952 = vld [vmem:[%s2 + $0x18] sm:$0xff]
    %v2953 = vld [vmem:[%s2 + $0x20] sm:$0xff]
    %v2954 = vld [vmem:[%s2 + $0x28] sm:$0xff]
    %v2955 = vld [vmem:[%s2 + $0x30] sm:$0xff]
    %v2956 = vld [vmem:[%s2 + $0x38] sm:$0xff]
    %v2957 = vld [vmem:[%s2 + $0x40] sm:$0xff]
    %v2958 = vld [vmem:[%s2 + $0x48] sm:$0xff]
    %v2959 = vld [vmem:[%s2 + $0x50] sm:$0xff]
    %v2960 = vld [vmem:[%s2 + $0x58] sm:$0xff]
    %v2961 = vld [vmem:[%s2 + $0x60] sm:$0xff]
    %v2962 = vld [vmem:[%s2 + $0x68] sm:$0xff]
    %v2963 = vld [vmem:[%s2 + $0x70] sm:$0xff]
    %v2964 = vld [vmem:[%s2 + $0x78] sm:$0xff]
    %v2965 = vld [vmem:[%s2 + $0x80] sm:$0xff]
    %v2966 = vld [vmem:[%s2 + $0x88] sm:$0xff]
    %v2968 = vsel %vm701, %v2918, 0
    %v2971 = vsel %vm701, %v2920, 0
    %v2974 = vsel %vm701, %v2922, 0
    %v2977 = vsel %vm701, %v2924, 0
    %v2980 = vsel %vm701, %v2926, 0
    %v2983 = vsel %vm701, %v2928, 0
    %v2986 = vsel %vm701, %v2930, 0
    %v2989 = vsel %vm701, %v2932, 0
    %v2992 = vsel %vm701, %v2934, 0
    %v2995 = vsel %vm701, %v2936, 0
    %v2998 = vsel %vm701, %v2938, 0
    %v3001 = vsel %vm701, %v2940, 0
    %v3004 = vsel %vm701, %v2942, 0
    %v3007 = vsel %vm701, %v2944, 0
    %v3010 = vsel %vm701, %v2946, 0
    %v3013 = vsel %vm701, %v2948, 0
    %3015 = vmatprep.subr.mxu0 0.0
    %3016 = vmatpush1.msra.mxu0 %v2949
    %3017 = vmatprep.subr.mxu0 0.0
    %3018 = vmatpush1.msra.mxu0 %v2950
    %3019 = vmatprep.subr.mxu0 0.0
    %3020 = vmatpush1.msra.mxu0 %v2951
    %3021 = vmatprep.subr.mxu0 0.0
    %3022 = vmatpush1.msra.mxu0 %v2952
    %3023 = vmatprep.subr.mxu0 0.0
    %3024 = vmatpush1.msra.mxu0 %v2953
    %3025 = vmatprep.subr.mxu0 0.0
    %3026 = vmatpush1.msra.mxu0 %v2954
    %3027 = vmatprep.subr.mxu0 0.0
    %3028 = vmatpush1.msra.mxu0 %v2955
    %3029 = vmatprep.subr.mxu0 0.0
    %3030 = vmatpush1.msra.mxu0 %v2956
    %3031 = vmatprep.subr.mxu0 0.0
    %3032 = vmatpush1.msra.mxu0 %v2957
    %3033 = vmatprep.subr.mxu0 0.0
    %3034 = vmatpush1.msra.mxu0 %v2958
    %3035 = vmatprep.subr.mxu0 0.0
    %3036 = vmatpush1.msra.mxu0 %v2959
    %3037 = vmatprep.subr.mxu0 0.0
    %3038 = vmatpush1.msra.mxu0 %v2960
    %3039 = vmatprep.subr.mxu0 0.0
    %3040 = vmatpush1.msra.mxu0 %v2961
    %3041 = vmatprep.subr.mxu0 0.0
    %3042 = vmatpush1.msra.mxu0 %v2962
    %3043 = vmatprep.subr.mxu0 0.0
    %3044 = vmatpush1.msra.mxu0 %v2963
    %3045 = vmatprep.subr.mxu0 0.0
    %3046 = vmatpush1.msra.mxu0 %v2964
    %3047 = vmatprep.subr.mxu0 0.0
    %3048 = vmatpush1.msra.mxu0 %v2965
    %3049 = vmatprep.subr.mxu0 0.0
    %3050 = vmatpush1.msra.mxu0 %v2966
    %3051 = vmatprep.subr.mxu0 0.0
    %3052 = vmatpush1.msra.mxu0 0.0
    %3053 = vmatprep.subr.mxu0 0.0
    %3054 = vmatpush1.msra.mxu0 0.0
    %3055 = vmatprep.subr.mxu0 0.0
    %3056 = vmatpush1.msra.mxu0 0.0
    %3057 = vmatprep.subr.mxu0 0.0
    %3058 = vmatpush1.msra.mxu0 0.0
    %3059 = vmatprep.subr.mxu0 0.0
    %3060 = vmatpush1.msra.mxu0 0.0
    %3061 = vmatprep.subr.mxu0 0.0
    %3062 = vmatpush1.msra.mxu0 0.0
    %3063 = vmatprep.subr.mxu0 0.0
    %3064 = vmatpush1.msra.mxu0 0.0
    %3065 = vmatprep.subr.mxu0 0.0
    %3066 = vmatpush1.msra.mxu0 0.0
    %3067 = vmatprep.subr.mxu0 0.0
    %3068 = vmatpush1.msra.mxu0 0.0
    %3069 = vmatprep.subr.mxu0 0.0
    %3070 = vmatpush1.msra.mxu0 0.0
    %3071 = vmatprep.subr.mxu0 0.0
    %3072 = vmatpush1.msra.mxu0 0.0
    %3073 = vmatprep.subr.mxu0 0.0
    %3074 = vmatpush1.msra.mxu0 0.0
    %3075 = vmatprep.subr.mxu0 0.0
    %3076 = vmatpush1.msra.mxu0 0.0
    %3077 = vmatprep.subr.mxu0 0.0
    %3078 = vmatpush1.msra.mxu0 0.0
    %3079 = vmatprep.mubr.f32.mxu0 %v2968
    %3080 = vmatmul.mubr.f32.gmra.mrb[0].mxu0 %v2917
    %v3081 = vpop.f32.mrb[0].mxu0
    %v3082 = vadd.f32 0.0, %v3081
    %v3083 = vpop.f32.mrb[0].mxu0
    %3084 = vmatprep.mubr.f32.mxu0 %v2971
    %3085 = vmatmul.mubr.f32.gmra.mrb[0].mxu0 %v2919
    %v3086 = vpop.f32.mrb[0].mxu0
    %v3087 = vadd.f32 0.0, %v3086
    %v3088 = vpop.f32.mrb[0].mxu0
    %3089 = vmatprep.mubr.f32.mxu0 %v2974
    %3090 = vmatmul.mubr.f32.gmra.mrb[0].mxu0 %v2921
    %v3091 = vpop.f32.mrb[0].mxu0
    %v3092 = vadd.f32 0.0, %v3091
    %v3093 = vpop.f32.mrb[0].mxu0
    %3094 = vmatprep.mubr.f32.mxu0 %v2977
    %3095 = vmatmul.mubr.f32.gmra.mrb[0].mxu0 %v2923
    %v3096 = vpop.f32.mrb[0].mxu0
    %v3097 = vadd.f32 0.0, %v3096
    %v3098 = vpop.f32.mrb[0].mxu0
    %3099 = vmatprep.mubr.f32.mxu0 %v2980
    %3100 = vmatmul.mubr.f32.gmra.mrb[0].mxu0 %v2925
    %v3101 = vpop.f32.mrb[0].mxu0
    %v3102 = vadd.f32 0.0, %v3101
    %v3103 = vpop.f32.mrb[0].mxu0
    %3104 = vmatprep.mubr.f32.mxu0 %v2983
    %3105 = vmatmul.mubr.f32.gmra.mrb[0].mxu0 %v2927
    %v3106 = vpop.f32.mrb[0].mxu0
    %v3107 = vadd.f32 0.0, %v3106
    %v3108 = vpop.f32.mrb[0].mxu0
    %3109 = vmatprep.mubr.f32.mxu0 %v2986
    %3110 = vmatmul.mubr.f32.gmra.mrb[0].mxu0 %v2929
    %v3111 = vpop.f32.mrb[0].mxu0
    %v3112 = vadd.f32 0.0, %v3111
    %v3113 = vpop.f32.mrb[0].mxu0
    %3114 = vmatprep.mubr.f32.mxu0 %v2989
    %3115 = vmatmul.mubr.f32.gmra.mrb[0].mxu0 %v2931
    %v3116 = vpop.f32.mrb[0].mxu0
    %v3117 = vadd.f32 0.0, %v3116
    %v3118 = vpop.f32.mrb[0].mxu0
    %3119 = vmatprep.mubr.f32.mxu0 %v2992
    %3120 = vmatmul.mubr.f32.gmra.mrb[0].mxu0 %v2933
    %v3121 = vpop.f32.mrb[0].mxu0
    %v3122 = vadd.f32 0.0, %v3121
    %v3123 = vpop.f32.mrb[0].mxu0
    %3124 = vmatprep.mubr.f32.mxu0 %v2995
    %3125 = vmatmul.mubr.f32.gmra.mrb[0].mxu0 %v2935
    %v3126 = vpop.f32.mrb[0].mxu0
    %v3127 = vadd.f32 0.0, %v3126
    %v3128 = vpop.f32.mrb[0].mxu0
    %3129 = vmatprep.mubr.f32.mxu0 %v2998
    %3130 = vmatmul.mubr.f32.gmra.mrb[0].mxu0 %v2937
    %v3131 = vpop.f32.mrb[0].mxu0
    %v3132 = vadd.f32 0.0, %v3131
    %v3133 = vpop.f32.mrb[0].mxu0
    %3134 = vmatprep.mubr.f32.mxu0 %v3001
    %3135 = vmatmul.mubr.f32.gmra.mrb[0].mxu0 %v2939
    %v3136 = vpop.f32.mrb[0].mxu0
    %v3137 = vadd.f32 0.0, %v3136
    %v3138 = vpop.f32.mrb[0].mxu0
    %3139 = vmatprep.mubr.f32.mxu0 %v3004
    %3140 = vmatmul.mubr.f32.gmra.mrb[0].mxu0 %v2941
    %v3141 = vpop.f32.mrb[0].mxu0
    %v3142 = vadd.f32 0.0, %v3141
    %v3143 = vpop.f32.mrb[0].mxu0
    %3144 = vmatprep.mubr.f32.mxu0 %v3007
    %3145 = vmatmul.mubr.f32.gmra.mrb[0].mxu0 %v2943
    %v3146 = vpop.f32.mrb[0].mxu0
    %v3147 = vadd.f32 0.0, %v3146
    %v3148 = vpop.f32.mrb[0].mxu0
    %3149 = vmatprep.mubr.f32.mxu0 %v3010
    %3150 = vmatmul.mubr.f32.gmra.mrb[0].mxu0 %v2945
    %v3151 = vpop.f32.mrb[0].mxu0
    %v3152 = vadd.f32 0.0, %v3151
    %v3153 = vpop.f32.mrb[0].mxu0
    %3154 = vmatprep.mubr.f32.mxu0 %v3013
    %3155 = vmatmul.mubr.f32.gmra.mrb[0].mxu0 %v2947
    %v3156 = vpop.f32.mrb[0].mxu0
    %v3157 = vadd.f32 0.0, %v3156
    %v3158 = vpop.f32.mrb[0].mxu0
    %3159 = vdwg.mxu0
    %v3160 = vsel %vm2783, %v3082, 0.0
    %v3161 = vsel %vm2783, %v3087, 0.0
    %v3162 = vadd.f32 %v3160, %v3161
    %v3163 = vsel %vm2783, %v3092, 0.0
    %v3164 = vadd.f32 %v3162, %v3163
    %v3165 = vsel %vm2783, %v3097, 0.0
    %v3166 = vadd.f32 %v3164, %v3165
    %v3167 = vsel %vm2783, %v3102, 0.0
    %v3168 = vadd.f32 %v3166, %v3167
    %v3169 = vsel %vm2783, %v3107, 0.0
    %v3170 = vadd.f32 %v3168, %v3169
    %v3171 = vsel %vm2783, %v3112, 0.0
    %v3172 = vadd.f32 %v3170, %v3171
    %v3173 = vsel %vm2783, %v3117, 0.0
    %v3174 = vadd.f32 %v3172, %v3173
    %v3175 = vsel %vm2783, %v3122, 0.0
    %v3176 = vadd.f32 %v3174, %v3175
    %v3177 = vsel %vm2783, %v3127, 0.0
    %v3178 = vadd.f32 %v3176, %v3177
    %v3179 = vsel %vm2783, %v3132, 0.0
    %v3180 = vadd.f32 %v3178, %v3179
    %v3181 = vsel %vm2783, %v3137, 0.0
    %v3182 = vadd.f32 %v3180, %v3181
    %v3183 = vsel %vm2783, %v3142, 0.0
    %v3184 = vadd.f32 %v3182, %v3183
    %v3185 = vsel %vm2783, %v3147, 0.0
    %v3186 = vadd.f32 %v3184, %v3185
    %v3187 = vsel %vm2783, %v3152, 0.0
    %v3188 = vadd.f32 %v3186, %v3187
    %v3189 = vsel %vm2783, %v3157, 0.0
    %v3190 = vadd.f32 %v3188, %v3189
    %v3191 = vrot.slane %v3190, 4
    %v3192 = vadd.f32 %v3190, %v3191
    %v3193 = vrot.slane %v3192, 2
    %v3194 = vadd.f32 %v3192, %v3193
    %v3195 = vrot.slane %v3194, 1
    %v3196 = vadd.f32 %v3194, %v3195
    %v3197 = vmul.f32 %v3082, %v3082
    %v3198 = vmul.f32 %v3087, %v3087
    %v3199 = vmul.f32 %v3092, %v3092
    %v3200 = vmul.f32 %v3097, %v3097
    %v3201 = vmul.f32 %v3102, %v3102
    %v3202 = vmul.f32 %v3107, %v3107
    %v3203 = vmul.f32 %v3112, %v3112
    %v3204 = vmul.f32 %v3117, %v3117
    %v3205 = vmul.f32 %v3122, %v3122
    %v3206 = vmul.f32 %v3127, %v3127
    %v3207 = vmul.f32 %v3132, %v3132
    %v3208 = vmul.f32 %v3137, %v3137
    %v3209 = vmul.f32 %v3142, %v3142
    %v3210 = vmul.f32 %v3147, %v3147
    %v3211 = vmul.f32 %v3152, %v3152
    %v3212 = vmul.f32 %v3157, %v3157
    %v3213 = vsel %vm2783, %v3197, 0.0
    %v3214 = vsel %vm2783, %v3198, 0.0
    %v3215 = vadd.f32 %v3213, %v3214
    %v3216 = vsel %vm2783, %v3199, 0.0
    %v3217 = vadd.f32 %v3215, %v3216
    %v3218 = vsel %vm2783, %v3200, 0.0
    %v3219 = vadd.f32 %v3217, %v3218
    %v3220 = vsel %vm2783, %v3201, 0.0
    %v3221 = vadd.f32 %v3219, %v3220
    %v3222 = vsel %vm2783, %v3202, 0.0
    %v3223 = vadd.f32 %v3221, %v3222
    %v3224 = vsel %vm2783, %v3203, 0.0
    %v3225 = vadd.f32 %v3223, %v3224
    %v3226 = vsel %vm2783, %v3204, 0.0
    %v3227 = vadd.f32 %v3225, %v3226
    %v3228 = vsel %vm2783, %v3205, 0.0
    %v3229 = vadd.f32 %v3227, %v3228
    %v3230 = vsel %vm2783, %v3206, 0.0
    %v3231 = vadd.f32 %v3229, %v3230
    %v3232 = vsel %vm2783, %v3207, 0.0
    %v3233 = vadd.f32 %v3231, %v3232
    %v3234 = vsel %vm2783, %v3208, 0.0
    %v3235 = vadd.f32 %v3233, %v3234
    %v3236 = vsel %vm2783, %v3209, 0.0
    %v3237 = vadd.f32 %v3235, %v3236
    %v3238 = vsel %vm2783, %v3210, 0.0
    %v3239 = vadd.f32 %v3237, %v3238
    %v3240 = vsel %vm2783, %v3211, 0.0
    %v3241 = vadd.f32 %v3239, %v3240
    %v3242 = vsel %vm2783, %v3212, 0.0
    %v3243 = vadd.f32 %v3241, %v3242
    %v3244 = vrot.slane %v3243, 4
    %v3245 = vadd.f32 %v3243, %v3244
    %v3246 = vrot.slane %v3245, 2
    %v3247 = vadd.f32 %v3245, %v3246
    %v3248 = vrot.slane %v3247, 1
    %v3249 = vadd.f32 %v3247, %v3248
    %v3250 = vmul.f32 %v3196, 0.0078125
    %v3251 = vmul.f32 %v3249, 0.0078125
    %v3252 = vmul.f32 %v3250, %v3250
    %v3253 = vsub.f32 %v3251, %v3252
    %v3254 = vmax.f32 %v3253, 0.0
    %v3255 = vsub.f32 %v3082, %v3250
    %v3256 = vsub.f32 %v3087, %v3250
    %v3257 = vsub.f32 %v3092, %v3250
    %v3258 = vsub.f32 %v3097, %v3250
    %v3259 = vsub.f32 %v3102, %v3250
    %v3260 = vsub.f32 %v3107, %v3250
    %v3261 = vsub.f32 %v3112, %v3250
    %v3262 = vsub.f32 %v3117, %v3250
    %v3263 = vsub.f32 %v3122, %v3250
    %v3264 = vsub.f32 %v3127, %v3250
    %v3265 = vsub.f32 %v3132, %v3250
    %v3266 = vsub.f32 %v3137, %v3250
    %v3267 = vsub.f32 %v3142, %v3250
    %v3268 = vsub.f32 %v3147, %v3250
    %v3269 = vsub.f32 %v3152, %v3250
    %v3270 = vsub.f32 %v3157, %v3250
    %v3271 = vadd.f32 %v3254, 1e-05
    %v3272 = vrsqrt.pop %v3271
    %v3273 = vmul.f32 %v3255, %v3272
    %v3274 = vmul.f32 %v3256, %v3272
    %v3275 = vmul.f32 %v3257, %v3272
    %v3276 = vmul.f32 %v3258, %v3272
    %v3277 = vmul.f32 %v3259, %v3272
    %v3278 = vmul.f32 %v3260, %v3272
    %v3279 = vmul.f32 %v3261, %v3272
    %v3280 = vmul.f32 %v3262, %v3272
    %v3281 = vmul.f32 %v3263, %v3272
    %v3282 = vmul.f32 %v3264, %v3272
    %v3283 = vmul.f32 %v3265, %v3272
    %v3284 = vmul.f32 %v3266, %v3272
    %v3285 = vmul.f32 %v3267, %v3272
    %v3286 = vmul.f32 %v3268, %v3272
    %v3287 = vmul.f32 %v3269, %v3272
    %v3288 = vmul.f32 %v3270, %v3272
    %v3289 = vmax.f32 %v3273, 0.0
    %v3290 = vmax.f32 %v3274, 0.0
    %v3291 = vmax.f32 %v3275, 0.0
    %v3292 = vmax.f32 %v3276, 0.0
    %v3293 = vmax.f32 %v3277, 0.0
    %v3294 = vmax.f32 %v3278, 0.0
    %v3295 = vmax.f32 %v3279, 0.0
    %v3296 = vmax.f32 %v3280, 0.0
    %v3297 = vmax.f32 %v3281, 0.0
    %v3298 = vmax.f32 %v3282, 0.0
    %v3299 = vmax.f32 %v3283, 0.0
    %v3300 = vmax.f32 %v3284, 0.0
    %v3301 = vmax.f32 %v3285, 0.0
    %v3302 = vmax.f32 %v3286, 0.0
    %v3303 = vmax.f32 %v3287, 0.0
    %v3304 = vmax.f32 %v3288, 0.0
    %v3305 = vld [vmem:[%s7] sm:$0xff]
    %v3306 = vld [vmem:[%s7 + $0x8] sm:$0xff]
    %v3307 = vld [vmem:[%s7 + $0x10] sm:$0xff]
    %v3308 = vld [vmem:[%s7 + $0x18] sm:$0xff]
    %v3309 = vld [vmem:[%s7 + $0x20] sm:$0xff]
    %v3310 = vld [vmem:[%s7 + $0x28] sm:$0xff]
    %v3311 = vld [vmem:[%s7 + $0x30] sm:$0xff]
    %v3312 = vld [vmem:[%s7 + $0x38] sm:$0xff]
    %v3313 = vld [vmem:[%s7 + $0x40] sm:$0xff]
    %v3314 = vld [vmem:[%s7 + $0x48] sm:$0xff]
    %v3315 = vld [vmem:[%s7 + $0x50] sm:$0xff]
    %v3316 = vld [vmem:[%s7 + $0x58] sm:$0xff]
    %v3317 = vld [vmem:[%s7 + $0x60] sm:$0xff]
    %v3318 = vld [vmem:[%s7 + $0x68] sm:$0xff]
    %v3319 = vld [vmem:[%s7 + $0x70] sm:$0xff]
    %v3320 = vld [vmem:[%s7 + $0x78] sm:$0xff]
    %3321 = vmatprep.subr.mxu0 0.0
    %3322 = vmatpush1.msra.mxu0 %v3289
    %3323 = vmatprep.subr.mxu0 0.0
    %3324 = vmatpush1.msra.mxu0 %v3290
    %3325 = vmatprep.subr.mxu0 0.0
    %3326 = vmatpush1.msra.mxu0 %v3291
    %3327 = vmatprep.subr.mxu0 0.0
    %3328 = vmatpush1.msra.mxu0 %v3292
    %3329 = vmatprep.subr.mxu0 0.0
    %3330 = vmatpush1.msra.mxu0 %v3293
    %3331 = vmatprep.subr.mxu0 0.0
    %3332 = vmatpush1.msra.mxu0 %v3294
    %3333 = vmatprep.subr.mxu0 0.0
    %3334 = vmatpush1.msra.mxu0 %v3295
    %3335 = vmatprep.subr.mxu0 0.0
    %3336 = vmatpush1.msra.mxu0 %v3296
    %3337 = vmatprep.subr.mxu0 0.0
    %3338 = vmatpush1.msra.mxu0 %v3297
    %3339 = vmatprep.subr.mxu0 0.0
    %3340 = vmatpush1.msra.mxu0 %v3298
    %3341 = vmatprep.subr.mxu0 0.0
    %3342 = vmatpush1.msra.mxu0 %v3299
    %3343 = vmatprep.subr.mxu0 0.0
    %3344 = vmatpush1.msra.mxu0 %v3300
    %3345 = vmatprep.subr.mxu0 0.0
    %3346 = vmatpush1.msra.mxu0 %v3301
    %3347 = vmatprep.subr.mxu0 0.0
    %3348 = vmatpush1.msra.mxu0 %v3302
    %3349 = vmatprep.subr.mxu0 0.0
    %3350 = vmatpush1.msra.mxu0 %v3303
    %3351 = vmatprep.subr.mxu0 0.0
    %3352 = vmatpush1.msra.mxu0 %v3304
    %3353 = vmatprep.subr.mxu0 0.0
    %3354 = vmatpush1.msra.mxu0 0.0
    %3355 = vmatprep.subr.mxu0 0.0
    %3356 = vmatpush1.msra.mxu0 0.0
    %3357 = vmatprep.subr.mxu0 0.0
    %3358 = vmatpush1.msra.mxu0 0.0
    %3359 = vmatprep.subr.mxu0 0.0
    %3360 = vmatpush1.msra.mxu0 0.0
    %3361 = vmatprep.subr.mxu0 0.0
    %3362 = vmatpush1.msra.mxu0 0.0
    %3363 = vmatprep.subr.mxu0 0.0
    %3364 = vmatpush1.msra.mxu0 0.0
    %3365 = vmatprep.subr.mxu0 0.0
    %3366 = vmatpush1.msra.mxu0 0.0
    %3367 = vmatprep.subr.mxu0 0.0
    %3368 = vmatpush1.msra.mxu0 0.0
    %3369 = vmatprep.subr.mxu0 0.0
    %3370 = vmatpush1.msra.mxu0 0.0
    %3371 = vmatprep.subr.mxu0 0.0
    %3372 = vmatpush1.msra.mxu0 0.0
    %3373 = vmatprep.subr.mxu0 0.0
    %3374 = vmatpush1.msra.mxu0 0.0
    %3375 = vmatprep.subr.mxu0 0.0
    %3376 = vmatpush1.msra.mxu0 0.0
    %3377 = vmatprep.subr.mxu0 0.0
    %3378 = vmatpush1.msra.mxu0 0.0
    %3379 = vmatprep.subr.mxu0 0.0
    %3380 = vmatpush1.msra.mxu0 0.0
    %3381 = vmatprep.subr.mxu0 0.0
    %3382 = vmatpush1.msra.mxu0 0.0
    %3383 = vmatprep.subr.mxu0 0.0
    %3384 = vmatpush1.msra.mxu0 0.0
    %3385 = vmatprep.mubr.f32.mxu0 0.0
    %3386 = vmatmul.mubr.f32.gmra.mrb[0].mxu0 %v3305
    %v3387 = vpop.f32.mrb[0].mxu0
    %v3388 = vadd.f32 0.0, %v3387
    %v3389 = vpop.f32.mrb[0].mxu0
    %3390 = vmatprep.mubr.f32.mxu0 0.0
    %3391 = vmatmul.mubr.f32.gmra.mrb[0].mxu0 %v3306
    %v3392 = vpop.f32.mrb[0].mxu0
    %v3393 = vadd.f32 0.0, %v3392
    %v3394 = vpop.f32.mrb[0].mxu0
    %3395 = vmatprep.mubr.f32.mxu0 0.0
    %3396 = vmatmul.mubr.f32.gmra.mrb[0].mxu0 %v3307
    %v3397 = vpop.f32.mrb[0].mxu0
    %v3398 = vadd.f32 0.0, %v3397
    %v3399 = vpop.f32.mrb[0].mxu0
    %3400 = vmatprep.mubr.f32.mxu0 0.0
    %3401 = vmatmul.mubr.f32.gmra.mrb[0].mxu0 %v3308
    %v3402 = vpop.f32.mrb[0].mxu0
    %v3403 = vadd.f32 0.0, %v3402
    %v3404 = vpop.f32.mrb[0].mxu0
    %3405 = vmatprep.mubr.f32.mxu0 0.0
    %3406 = vmatmul.mubr.f32.gmra.mrb[0].mxu0 %v3309
    %v3407 = vpop.f32.mrb[0].mxu0
    %v3408 = vadd.f32 0.0, %v3407
    %v3409 = vpop.f32.mrb[0].mxu0
    %3410 = vmatprep.mubr.f32.mxu0 0.0
    %3411 = vmatmul.mubr.f32.gmra.mrb[0].mxu0 %v3310
    %v3412 = vpop.f32.mrb[0].mxu0
    %v3413 = vadd.f32 0.0, %v3412
    %v3414 = vpop.f32.mrb[0].mxu0
    %3415 = vmatprep.mubr.f32.mxu0 0.0
    %3416 = vmatmul.mubr.f32.gmra.mrb[0].mxu0 %v3311
    %v3417 = vpop.f32.mrb[0].mxu0
    %v3418 = vadd.f32 0.0, %v3417
    %v3419 = vpop.f32.mrb[0].mxu0
    %3420 = vmatprep.mubr.f32.mxu0 0.0
    %3421 = vmatmul.mubr.f32.gmra.mrb[0].mxu0 %v3312
    %v3422 = vpop.f32.mrb[0].mxu0
    %v3423 = vadd.f32 0.0, %v3422
    %v3424 = vpop.f32.mrb[0].mxu0
    %3425 = vmatprep.mubr.f32.mxu0 0.0
    %3426 = vmatmul.mubr.f32.gmra.mrb[0].mxu0 %v3313
    %v3427 = vpop.f32.mrb[0].mxu0
    %v3428 = vadd.f32 0.0, %v3427
    %v3429 = vpop.f32.mrb[0].mxu0
    %3430 = vmatprep.mubr.f32.mxu0 0.0
    %3431 = vmatmul.mubr.f32.gmra.mrb[0].mxu0 %v3314
    %v3432 = vpop.f32.mrb[0].mxu0
    %v3433 = vadd.f32 0.0, %v3432
    %v3434 = vpop.f32.mrb[0].mxu0
    %3435 = vmatprep.mubr.f32.mxu0 0.0
    %3436 = vmatmul.mubr.f32.gmra.mrb[0].mxu0 %v3315
    %v3437 = vpop.f32.mrb[0].mxu0
    %v3438 = vadd.f32 0.0, %v3437
    %v3439 = vpop.f32.mrb[0].mxu0
    %3440 = vmatprep.mubr.f32.mxu0 0.0
    %3441 = vmatmul.mubr.f32.gmra.mrb[0].mxu0 %v3316
    %v3442 = vpop.f32.mrb[0].mxu0
    %v3443 = vadd.f32 0.0, %v3442
    %v3444 = vpop.f32.mrb[0].mxu0
    %3445 = vmatprep.mubr.f32.mxu0 0.0
    %3446 = vmatmul.mubr.f32.gmra.mrb[0].mxu0 %v3317
    %v3447 = vpop.f32.mrb[0].mxu0
    %v3448 = vadd.f32 0.0, %v3447
    %v3449 = vpop.f32.mrb[0].mxu0
    %3450 = vmatprep.mubr.f32.mxu0 0.0
    %3451 = vmatmul.mubr.f32.gmra.mrb[0].mxu0 %v3318
    %v3452 = vpop.f32.mrb[0].mxu0
    %v3453 = vadd.f32 0.0, %v3452
    %v3454 = vpop.f32.mrb[0].mxu0
    %3455 = vmatprep.mubr.f32.mxu0 0.0
    %3456 = vmatmul.mubr.f32.gmra.mrb[0].mxu0 %v3319
    %v3457 = vpop.f32.mrb[0].mxu0
    %v3458 = vadd.f32 0.0, %v3457
    %v3459 = vpop.f32.mrb[0].mxu0
    %3460 = vmatprep.mubr.f32.mxu0 0.0
    %3461 = vmatmul.mubr.f32.gmra.mrb[0].mxu0 %v3320
    %v3462 = vpop.f32.mrb[0].mxu0
    %v3463 = vadd.f32 0.0, %v3462
    %v3464 = vpop.f32.mrb[0].mxu0
    %3465 = vdwg.mxu0
    %v3466 = vmax.f32 %v3388, %v3408
    %v3467 = vmax.f32 %v3393, %v3413
    %v3468 = vmax.f32 %v3398, %v3418
    %v3469 = vmax.f32 %v3403, %v3423
    %v3470 = vmax.f32 %v3428, %v3448
    %v3471 = vmax.f32 %v3433, %v3453
    %v3472 = vmax.f32 %v3438, %v3458
    %v3473 = vmax.f32 %v3443, %v3463
    %v3474 = vmax.f32 %v3466, %v3470
    %v3475 = vmax.f32 %v3467, %v3471
    %v3476 = vmax.f32 %v3468, %v3472
    %v3477 = vmax.f32 %v3469, %v3473
    %3478 = vst.msk [vmem:[#allocation3] sm:$0xff] %vm2783, 0.0
    %3479 = vst.msk [vmem:[#allocation3 + $0x28] sm:$0xff] %vm2783, 0.0
    %3480 = vst.msk [vmem:[#allocation3 + $0x8] sm:$0xff] %vm2783, %v3474
    %3481 = vst.msk [vmem:[#allocation3 + $0x10] sm:$0xff] %vm2783, %v3475
    %3482 = vst.msk [vmem:[#allocation3 + $0x18] sm:$0xff] %vm2783, %v3476
    %3483 = vst.msk [vmem:[#allocation3 + $0x20] sm:$0xff] %vm2783, %v3477
    %v3484 = vld [vmem:[#allocation3 + $0x3] sm:$0xff]
    %v3485 = vld [vmem:[#allocation3 + $0xb] sm:$0xff]
    %v3486 = vld [vmem:[#allocation3 + $0x13] sm:$0xff]
    %v3487 = vld [vmem:[#allocation3 + $0x1b] sm:$0xff]
    %v3488 = vld [vmem:[#allocation3 + $0x4] sm:$0xff]
    %v3489 = vld [vmem:[#allocation3 + $0xc] sm:$0xff]
    %v3490 = vld [vmem:[#allocation3 + $0x14] sm:$0xff]
    %v3491 = vld [vmem:[#allocation3 + $0x1c] sm:$0xff]
    %v3492 = vld [vmem:[#allocation3 + $0x5] sm:$0xff]
    %v3493 = vld [vmem:[#allocation3 + $0xd] sm:$0xff]
    %v3494 = vld [vmem:[#allocation3 + $0x15] sm:$0xff]
    %v3495 = vld [vmem:[#allocation3 + $0x1d] sm:$0xff]
    %v3496 = vld [vmem:[#allocation3 + $0x7] sm:$0xff]
    %v3497 = vld [vmem:[#allocation3 + $0xf] sm:$0xff]
    %v3498 = vld [vmem:[#allocation3 + $0x17] sm:$0xff]
    %v3499 = vld [vmem:[#allocation3 + $0x1f] sm:$0xff]
    %v3500 = vld [vmem:[#allocation3 + $0x8] sm:$0xff]
    %v3501 = vld [vmem:[#allocation3 + $0x10] sm:$0xff]
    %v3502 = vld [vmem:[#allocation3 + $0x18] sm:$0xff]
    %v3503 = vld [vmem:[#allocation3 + $0x20] sm:$0xff]
    %v3504 = vld [vmem:[#allocation3 + $0x9] sm:$0xff]
    %v3505 = vld [vmem:[#allocation3 + $0x11] sm:$0xff]
    %v3506 = vld [vmem:[#allocation3 + $0x19] sm:$0xff]
    %v3507 = vld [vmem:[#allocation3 + $0x21] sm:$0xff]
    %v3508 = vld [vmem:[#allocation3 + $0x23] sm:$0xff]
    %v3509 = vld [vmem:[#allocation3 + $0x24] sm:$0xff]
    %v3510 = vld [vmem:[#allocation3 + $0x25] sm:$0xff]
    %3515 = vrot.lane.b32.xlu0 %v3488, 32
    %v3516 = vpop.permute.xlu0 %3515
    %3517 = vrot.lane.b32.xlu0 %v3489, 32
    %v3518 = vpop.permute.xlu0 %3517
    %3519 = vrot.lane.b32.xlu0 %v3490, 32
    %v3520 = vpop.permute.xlu0 %3519
    %3521 = vrot.lane.b32.xlu0 %v3491, 32
    %v3522 = vpop.permute.xlu0 %3521
    %3531 = vrot.lane.b32.xlu0 %v3492, 64
    %v3532 = vpop.permute.xlu0 %3531
    %3533 = vrot.lane.b32.xlu0 %v3493, 64
    %v3534 = vpop.permute.xlu0 %3533
    %3535 = vrot.lane.b32.xlu0 %v3494, 64
    %v3536 = vpop.permute.xlu0 %3535
    %3537 = vrot.lane.b32.xlu0 %v3495, 64
    %v3538 = vpop.permute.xlu0 %3537
    %3547 = vrot.lane.b32.xlu0 %v3496, 96
    %v3548 = vpop.permute.xlu0 %3547
    %3549 = vrot.lane.b32.xlu0 %v3497, 96
    %v3550 = vpop.permute.xlu0 %3549
    %3551 = vrot.lane.b32.xlu0 %v3498, 96
    %v3552 = vpop.permute.xlu0 %3551
    %3553 = vrot.lane.b32.xlu0 %v3499, 96
    %v3554 = vpop.permute.xlu0 %3553
    %3563 = vrot.lane.b32.xlu0 %v3504, 32
    %v3564 = vpop.permute.xlu0 %3563
    %3565 = vrot.lane.b32.xlu0 %v3505, 32
    %v3566 = vpop.permute.xlu0 %3565
    %3567 = vrot.lane.b32.xlu0 %v3506, 32
    %v3568 = vpop.permute.xlu0 %3567
    %3569 = vrot.lane.b32.xlu0 %v3507, 32
    %v3570 = vpop.permute.xlu0 %3569
    %3579 = vrot.lane.b32.xlu0 %v3485, 64
    %v3580 = vpop.permute.xlu0 %3579
    %3581 = vrot.lane.b32.xlu0 %v3486, 64
    %v3582 = vpop.permute.xlu0 %3581
    %3583 = vrot.lane.b32.xlu0 %v3487, 64
    %v3584 = vpop.permute.xlu0 %3583
    %3585 = vrot.lane.b32.xlu0 %v3508, 64
    %v3586 = vpop.permute.xlu0 %3585
    %3592 = vrot.lane.b32.xlu0 %v3489, 96
    %v3593 = vpop.permute.xlu0 %3592
    %3594 = vrot.lane.b32.xlu0 %v3490, 96
    %v3595 = vpop.permute.xlu0 %3594
    %3596 = vrot.lane.b32.xlu0 %v3491, 96
    %v3597 = vpop.permute.xlu0 %3596
    %3598 = vrot.lane.b32.xlu0 %v3509, 96
    %v3599 = vpop.permute.xlu0 %3598
    %v3604 = vsel %vm2783, %v3484, %v3516
    %v3605 = vsel %vm2783, %v3485, %v3518
    %v3606 = vsel %vm2783, %v3486, %v3520
    %v3607 = vsel %vm2783, %v3487, %v3522
    %v3608 = vsel %vm2817, %v3604, %v3532
    %v3609 = vsel %vm2817, %v3605, %v3534
    %v3610 = vsel %vm2817, %v3606, %v3536
    %v3611 = vsel %vm2817, %v3607, %v3538
    %v3612 = vsel %vm2851, %v3608, %v3548
    %v3613 = vsel %vm2851, %v3609, %v3550
    %v3614 = vsel %vm2851, %v3610, %v3552
    %v3615 = vsel %vm2851, %v3611, %v3554
    %v3616 = vsel %vm2783, %v3500, %v3564
    %v3617 = vsel %vm2783, %v3501, %v3566
    %v3618 = vsel %vm2783, %v3502, %v3568
    %v3619 = vsel %vm2783, %v3503, %v3570
    %v3620 = vsel %vm2817, %v3616, %v3580
    %v3621 = vsel %vm2817, %v3617, %v3582
    %v3622 = vsel %vm2817, %v3618, %v3584
    %v3623 = vsel %vm2817, %v3619, %v3586
    %v3624 = vsel %vm2851, %v3620, %v3593
    %v3625 = vsel %vm2851, %v3621, %v3595
    %v3626 = vsel %vm2851, %v3622, %v3597
    %v3627 = vsel %vm2851, %v3623, %v3599
    %v3628 = vld [vmem:[%s9] sm:$0xff]
    %v3629 = vld [vmem:[%s9 + $0x8] sm:$0xff]
    %v3630 = vld [vmem:[%s9 + $0x10] sm:$0xff]
    %v3631 = vld [vmem:[%s9 + $0x18] sm:$0xff]
    %v3632 = vld [vmem:[%s9 + $0x20] sm:$0xff]
    %v3633 = vld [vmem:[%s9 + $0x28] sm:$0xff]
    %v3634 = vld [vmem:[%s9 + $0x30] sm:$0xff]
    %v3635 = vld [vmem:[%s9 + $0x38] sm:$0xff]
    %v3636 = vld [vmem:[%s9 + $0x40] sm:$0xff]
    %v3637 = vld [vmem:[%s9 + $0x48] sm:$0xff]
    %v3638 = vld [vmem:[%s9 + $0x50] sm:$0xff]
    %v3639 = vld [vmem:[%s9 + $0x58] sm:$0xff]
    %v3640 = vmul.f32 %v3612, %v3628
    %v3641 = vmul.f32 %v3624, %v3629
    %v3642 = vmul.f32 %v3493, %v3630
    %v3643 = vmul.f32 %v3613, %v3631
    %v3644 = vmul.f32 %v3625, %v3632
    %v3645 = vmul.f32 %v3494, %v3633
    %v3646 = vmul.f32 %v3614, %v3634
    %v3647 = vmul.f32 %v3626, %v3635
    %v3648 = vmul.f32 %v3495, %v3636
    %v3649 = vmul.f32 %v3615, %v3637
    %v3650 = vmul.f32 %v3627, %v3638
    %v3651 = vmul.f32 %v3510, %v3639
    %v3652 = vld [vmem:[%s3] sm:$0xff]
    %v3653 = vld [vmem:[%s3 + $0x8] sm:$0xff]
    %v3654 = vld [vmem:[%s3 + $0x10] sm:$0xff]
    %v3655 = vld [vmem:[%s3 + $0x18] sm:$0xff]
    %v3656 = vld [vmem:[%s3 + $0x20] sm:$0xff]
    %v3657 = vld [vmem:[%s3 + $0x28] sm:$0xff]
    %v3658 = vld [vmem:[%s3 + $0x30] sm:$0xff]
    %v3659 = vld [vmem:[%s3 + $0x38] sm:$0xff]
    %v3660 = vld [vmem:[%s3 + $0x40] sm:$0xff]
    %v3661 = vld [vmem:[%s3 + $0x48] sm:$0xff]
    %v3662 = vld [vmem:[%s3 + $0x50] sm:$0xff]
    %v3663 = vld [vmem:[%s3 + $0x58] sm:$0xff]
    %v3664 = vld [vmem:[%s3 + $0x60] sm:$0xff]
    %v3665 = vld [vmem:[%s3 + $0x68] sm:$0xff]
    %v3666 = vld [vmem:[%s3 + $0x70] sm:$0xff]
    %v3667 = vld [vmem:[%s3 + $0x78] sm:$0xff]
    %v3668 = vld [vmem:[%s3 + $0x80] sm:$0xff]
    %v3669 = vld [vmem:[%s3 + $0x88] sm:$0xff]
    %v3670 = vld [vmem:[%s3 + $0x90] sm:$0xff]
    %v3671 = vld [vmem:[%s3 + $0x98] sm:$0xff]
    %v3672 = vld [vmem:[%s3 + $0xa0] sm:$0xff]
    %v3673 = vld [vmem:[%s3 + $0xa8] sm:$0xff]
    %v3674 = vld [vmem:[%s3 + $0xb0] sm:$0xff]
    %v3675 = vld [vmem:[%s3 + $0xb8] sm:$0xff]
    %v3676 = vld [vmem:[%s3 + $0xc0] sm:$0xff]
    %v3677 = vld [vmem:[%s3 + $0xc8] sm:$0xff]
    %v3678 = vld [vmem:[%s3 + $0xd0] sm:$0xff]
    %v3679 = vld [vmem:[%s3 + $0xd8] sm:$0xff]
    %v3680 = vld [vmem:[%s3 + $0xe0] sm:$0xff]
    %v3681 = vld [vmem:[%s3 + $0xe8] sm:$0xff]
    %v3682 = vld [vmem:[%s3 + $0xf0] sm:$0xff]
    %v3683 = vld [vmem:[%s3 + $0xf8] sm:$0xff]
    %v3684 = vld [vmem:[%s3 + $0x100] sm:$0xff]
    %v3685 = vld [vmem:[%s3 + $0x108] sm:$0xff]
    %v3686 = vld [vmem:[%s3 + $0x110] sm:$0xff]
    %v3687 = vld [vmem:[%s3 + $0x118] sm:$0xff]
    %v3689 = vsel %vm2783, %v3642, 0
    %v3692 = vsel %vm2783, %v3645, 0
    %v3695 = vsel %vm2783, %v3648, 0
    %v3698 = vsel %vm2783, %v3651, 0
    %3700 = vmatprep.subr.mxu0 0.0
    %3701 = vmatpush1.msra.mxu0 %v3652
    %3702 = vmatprep.subr.mxu0 0.0
    %3703 = vmatpush1.msra.mxu0 %v3653
    %3704 = vmatprep.subr.mxu0 0.0
    %3705 = vmatpush1.msra.mxu0 %v3654
    %3706 = vmatprep.subr.mxu0 0.0
    %3707 = vmatpush1.msra.mxu0 %v3655
    %3708 = vmatprep.subr.mxu0 0.0
    %3709 = vmatpush1.msra.mxu0 %v3656
    %3710 = vmatprep.subr.mxu0 0.0
    %3711 = vmatpush1.msra.mxu0 %v3657
    %3712 = vmatprep.subr.mxu0 0.0
    %3713 = vmatpush1.msra.mxu0 %v3658
    %3714 = vmatprep.subr.mxu0 0.0
    %3715 = vmatpush1.msra.mxu0 %v3659
    %3716 = vmatprep.subr.mxu0 0.0
    %3717 = vmatpush1.msra.mxu0 %v3660
    %3718 = vmatprep.subr.mxu0 0.0
    %3719 = vmatpush1.msra.mxu0 %v3661
    %3720 = vmatprep.subr.mxu0 0.0
    %3721 = vmatpush1.msra.mxu0 %v3662
    %3722 = vmatprep.subr.mxu0 0.0
    %3723 = vmatpush1.msra.mxu0 %v3663
    %3724 = vmatprep.subr.mxu0 0.0
    %3725 = vmatpush1.msra.mxu0 %v3664
    %3726 = vmatprep.subr.mxu0 0.0
    %3727 = vmatpush1.msra.mxu0 %v3665
    %3728 = vmatprep.subr.mxu0 0.0
    %3729 = vmatpush1.msra.mxu0 %v3666
    %3730 = vmatprep.subr.mxu0 0.0
    %3731 = vmatpush1.msra.mxu0 %v3667
    %3732 = vmatprep.subr.mxu0 0.0
    %3733 = vmatpush1.msra.mxu0 %v3668
    %3734 = vmatprep.subr.mxu0 0.0
    %3735 = vmatpush1.msra.mxu0 %v3669
    %3736 = vmatprep.subr.mxu0 0.0
    %3737 = vmatpush1.msra.mxu0 %v3670
    %3738 = vmatprep.subr.mxu0 0.0
    %3739 = vmatpush1.msra.mxu0 %v3671
    %3740 = vmatprep.subr.mxu0 0.0
    %3741 = vmatpush1.msra.mxu0 %v3672
    %3742 = vmatprep.subr.mxu0 0.0
    %3743 = vmatpush1.msra.mxu0 %v3673
    %3744 = vmatprep.subr.mxu0 0.0
    %3745 = vmatpush1.msra.mxu0 %v3674
    %3746 = vmatprep.subr.mxu0 0.0
    %3747 = vmatpush1.msra.mxu0 %v3675
    %3748 = vmatprep.subr.mxu0 0.0
    %3749 = vmatpush1.msra.mxu0 %v3676
    %3750 = vmatprep.subr.mxu0 0.0
    %3751 = vmatpush1.msra.mxu0 %v3677
    %3752 = vmatprep.subr.mxu0 0.0
    %3753 = vmatpush1.msra.mxu0 %v3678
    %3754 = vmatprep.subr.mxu0 0.0
    %3755 = vmatpush1.msra.mxu0 %v3679
    %3756 = vmatprep.subr.mxu0 0.0
    %3757 = vmatpush1.msra.mxu0 %v3680
    %3758 = vmatprep.subr.mxu0 0.0
    %3759 = vmatpush1.msra.mxu0 %v3681
    %3760 = vmatprep.subr.mxu0 0.0
    %3761 = vmatpush1.msra.mxu0 %v3682
    %3762 = vmatprep.subr.mxu0 0.0
    %3763 = vmatpush1.msra.mxu0 %v3683
    %3764 = vmatprep.mubr.f32.mxu0 %v3641
    %3765 = vmatmul.mubr.f32.gmra.mrb[0].mxu0 %v3640
    %v3766 = vpop.f32.mrb[0].mxu0
    %v3767 = vadd.f32 0.0, %v3766
    %v3768 = vpop.f32.mrb[0].mxu0
    %3769 = vmatprep.mubr.f32.mxu0 %v3644
    %3770 = vmatmul.mubr.f32.gmra.mrb[0].mxu0 %v3643
    %v3771 = vpop.f32.mrb[0].mxu0
    %v3772 = vadd.f32 0.0, %v3771
    %v3773 = vpop.f32.mrb[0].mxu0
    %3774 = vmatprep.mubr.f32.mxu0 %v3647
    %3775 = vmatmul.mubr.f32.gmra.mrb[0].mxu0 %v3646
    %v3776 = vpop.f32.mrb[0].mxu0
    %v3777 = vadd.f32 0.0, %v3776
    %v3778 = vpop.f32.mrb[0].mxu0
    %3779 = vmatprep.mubr.f32.mxu0 %v3650
    %3780 = vmatmul.mubr.f32.gmra.mrb[0].mxu0 %v3649
    %v3781 = vpop.f32.mrb[0].mxu0
    %v3782 = vadd.f32 0.0, %v3781
    %v3783 = vpop.f32.mrb[0].mxu0
    %3784 = vdwg.mxu0
    %3785 = vmatprep.subr.mxu0 0.0
    %3786 = vmatpush1.msra.mxu0 %v3684
    %3787 = vmatprep.subr.mxu0 0.0
    %3788 = vmatpush1.msra.mxu0 %v3685
    %3789 = vmatprep.subr.mxu0 0.0
    %3790 = vmatpush1.msra.mxu0 %v3686
    %3791 = vmatprep.subr.mxu0 0.0
    %3792 = vmatpush1.msra.mxu0 %v3687
    %3793 = vmatprep.subr.mxu0 0.0
    %3794 = vmatpush1.msra.mxu0 0.0
    %3795 = vmatprep.subr.mxu0 0.0
    %3796 = vmatpush1.msra.mxu0 0.0
    %3797 = vmatprep.subr.mxu0 0.0
    %3798 = vmatpush1.msra.mxu0 0.0
    %3799 = vmatprep.subr.mxu0 0.0
    %3800 = vmatpush1.msra.mxu0 0.0
    %3801 = vmatprep.subr.mxu0 0.0
    %3802 = vmatpush1.msra.mxu0 0.0
    %3803 = vmatprep.subr.mxu0 0.0
    %3804 = vmatpush1.msra.mxu0 0.0
    %3805 = vmatprep.subr.mxu0 0.0
    %3806 = vmatpush1.msra.mxu0 0.0
    %3807 = vmatprep.subr.mxu0 0.0
    %3808 = vmatpush1.msra.mxu0 0.0
    %3809 = vmatprep.subr.mxu0 0.0
    %3810 = vmatpush1.msra.mxu0 0.0
    %3811 = vmatprep.subr.mxu0 0.0
    %3812 = vmatpush1.msra.mxu0 0.0
    %3813 = vmatprep.subr.mxu0 0.0
    %3814 = vmatpush1.msra.mxu0 0.0
    %3815 = vmatprep.subr.mxu0 0.0
    %3816 = vmatpush1.msra.mxu0 0.0
    %3817 = vmatprep.subr.mxu0 0.0
    %3818 = vmatpush1.msra.mxu0 0.0
    %3819 = vmatprep.subr.mxu0 0.0
    %3820 = vmatpush1.msra.mxu0 0.0
    %3821 = vmatprep.subr.mxu0 0.0
    %3822 = vmatpush1.msra.mxu0 0.0
    %3823 = vmatprep.subr.mxu0 0.0
    %3824 = vmatpush1.msra.mxu0 0.0
    %3825 = vmatprep.subr.mxu0 0.0
    %3826 = vmatpush1.msra.mxu0 0.0
    %3827 = vmatprep.subr.mxu0 0.0
    %3828 = vmatpush1.msra.mxu0 0.0
    %3829 = vmatprep.subr.mxu0 0.0
    %3830 = vmatpush1.msra.mxu0 0.0
    %3831 = vmatprep.subr.mxu0 0.0
    %3832 = vmatpush1.msra.mxu0 0.0
    %3833 = vmatprep.subr.mxu0 0.0
    %3834 = vmatpush1.msra.mxu0 0.0
    %3835 = vmatprep.subr.mxu0 0.0
    %3836 = vmatpush1.msra.mxu0 0.0
    %3837 = vmatprep.subr.mxu0 0.0
    %3838 = vmatpush1.msra.mxu0 0.0
    %3839 = vmatprep.subr.mxu0 0.0
    %3840 = vmatpush1.msra.mxu0 0.0
    %3841 = vmatprep.subr.mxu0 0.0
    %3842 = vmatpush1.msra.mxu0 0.0
    %3843 = vmatprep.subr.mxu0 0.0
    %3844 = vmatpush1.msra.mxu0 0.0
    %3845 = vmatprep.subr.mxu0 0.0
    %3846 = vmatpush1.msra.mxu0 0.0
    %3847 = vmatprep.subr.mxu0 0.0
    %3848 = vmatpush1.msra.mxu0 0.0
    %3849 = vmatprep.mubr.f32.mxu0 0.0
    %3850 = vmatmul.mubr.f32.gmra.mrb[0].mxu0 %v3689
    %v3851 = vpop.f32.mrb[0].mxu0
    %v3852 = vadd.f32 %v3767, %v3851
    %v3853 = vpop.f32.mrb[0].mxu0
    %3854 = vmatprep.mubr.f32.mxu0 0.0
    %3855 = vmatmul.mubr.f32.gmra.mrb[0].mxu0 %v3692
    %v3856 = vpop.f32.mrb[0].mxu0
    %v3857 = vadd.f32 %v3772, %v3856
    %v3858 = vpop.f32.mrb[0].mxu0
    %3859 = vmatprep.mubr.f32.mxu0 0.0
    %3860 = vmatmul.mubr.f32.gmra.mrb[0].mxu0 %v3695
    %v3861 = vpop.f32.mrb[0].mxu0
    %v3862 = vadd.f32 %v3777, %v3861
    %v3863 = vpop.f32.mrb[0].mxu0
    %3864 = vmatprep.mubr.f32.mxu0 0.0
    %3865 = vmatmul.mubr.f32.gmra.mrb[0].mxu0 %v3698
    %v3866 = vpop.f32.mrb[0].mxu0
    %v3867 = vadd.f32 %v3782, %v3866
    %v3868 = vpop.f32.mrb[0].mxu0
    %3869 = vdwg.mxu0
    %v3870 = vsel %vm2817, %v3852, 0.0
    %v3871 = vsel %vm2817, %v3857, 0.0
    %v3872 = vadd.f32 %v3870, %v3871
    %v3873 = vsel %vm2817, %v3862, 0.0
    %v3874 = vadd.f32 %v3872, %v3873
    %v3875 = vsel %vm2817, %v3867, 0.0
    %v3876 = vadd.f32 %v3874, %v3875
    %v3877 = vrot.slane %v3876, 4
    %v3878 = vadd.f32 %v3876, %v3877
    %v3879 = vrot.slane %v3878, 2
    %v3880 = vadd.f32 %v3878, %v3879
    %v3881 = vrot.slane %v3880, 1
    %v3882 = vadd.f32 %v3880, %v3881
    %v3883 = vmul.f32 %v3852, %v3852
    %v3884 = vmul.f32 %v3857, %v3857
    %v3885 = vmul.f32 %v3862, %v3862
    %v3886 = vmul.f32 %v3867, %v3867
    %v3887 = vsel %vm2817, %v3883, 0.0
    %v3888 = vsel %vm2817, %v3884, 0.0
    %v3889 = vadd.f32 %v3887, %v3888
    %v3890 = vsel %vm2817, %v3885, 0.0
    %v3891 = vadd.f32 %v3889, %v3890
    %v3892 = vsel %vm2817, %v3886, 0.0
    %v3893 = vadd.f32 %v3891, %v3892
    %v3894 = vrot.slane %v3893, 4
    %v3895 = vadd.f32 %v3893, %v3894
    %v3896 = vrot.slane %v3895, 2
    %v3897 = vadd.f32 %v3895, %v3896
    %v3898 = vrot.slane %v3897, 1
    %v3899 = vadd.f32 %v3897, %v3898
    %v3900 = vmul.f32 %v3882, 0.03125
    %v3901 = vmul.f32 %v3899, 0.03125
    %v3902 = vmul.f32 %v3900, %v3900
    %v3903 = vsub.f32 %v3901, %v3902
    %v3904 = vmax.f32 %v3903, 0.0
    %v3905 = vsub.f32 %v3852, %v3900
    %v3906 = vsub.f32 %v3857, %v3900
    %v3907 = vsub.f32 %v3862, %v3900
    %v3908 = vsub.f32 %v3867, %v3900
    %v3909 = vadd.f32 %v3904, 1e-05
    %v3910 = vrsqrt.pop %v3909
    %v3911 = vmul.f32 %v3905, %v3910
    %v3912 = vmul.f32 %v3906, %v3910
    %v3913 = vmul.f32 %v3907, %v3910
    %v3914 = vmul.f32 %v3908, %v3910
    %v3915 = vmax.f32 %v3911, 0.0
    %v3916 = vmax.f32 %v3912, 0.0
    %v3917 = vmax.f32 %v3913, 0.0
    %v3918 = vmax.f32 %v3914, 0.0
    %v3919 = vld [vmem:[%s10] sm:$0x3]
    %v3921 = vsel %vm2783, %v3919, 0
    %3923 = vmatprep.subr.mxu0 0.0
    %3924 = vmatpush1.msra.mxu0 %v3915
    %3925 = vmatprep.subr.mxu0 0.0
    %3926 = vmatpush1.msra.mxu0 %v3916
    %3927 = vmatprep.subr.mxu0 0.0
    %3928 = vmatpush1.msra.mxu0 %v3917
    %3929 = vmatprep.subr.mxu0 0.0
    %3930 = vmatpush1.msra.mxu0 %v3918
    %3931 = vmatprep.subr.mxu0 0.0
    %3932 = vmatpush1.msra.mxu0 0.0
    %3933 = vmatprep.subr.mxu0 0.0
    %3934 = vmatpush1.msra.mxu0 0.0
    %3935 = vmatprep.subr.mxu0 0.0
    %3936 = vmatpush1.msra.mxu0 0.0
    %3937 = vmatprep.subr.mxu0 0.0
    %3938 = vmatpush1.msra.mxu0 0.0
    %3939 = vmatprep.subr.mxu0 0.0
    %3940 = vmatpush1.msra.mxu0 0.0
    %3941 = vmatprep.subr.mxu0 0.0
    %3942 = vmatpush1.msra.mxu0 0.0
    %3943 = vmatprep.subr.mxu0 0.0
    %3944 = vmatpush1.msra.mxu0 0.0
    %3945 = vmatprep.subr.mxu0 0.0
    %3946 = vmatpush1.msra.mxu0 0.0
    %3947 = vmatprep.subr.mxu0 0.0
    %3948 = vmatpush1.msra.mxu0 0.0
    %3949 = vmatprep.subr.mxu0 0.0
    %3950 = vmatpush1.msra.mxu0 0.0
    %3951 = vmatprep.subr.mxu0 0.0
    %3952 = vmatpush1.msra.mxu0 0.0
    %3953 = vmatprep.subr.mxu0 0.0
    %3954 = vmatpush1.msra.mxu0 0.0
    %3955 = vmatprep.subr.mxu0 0.0
    %3956 = vmatpush1.msra.mxu0 0.0
    %3957 = vmatprep.subr.mxu0 0.0
    %3958 = vmatpush1.msra.mxu0 0.0
    %3959 = vmatprep.subr.mxu0 0.0
    %3960 = vmatpush1.msra.mxu0 0.0
    %3961 = vmatprep.subr.mxu0 0.0
    %3962 = vmatpush1.msra.mxu0 0.0
    %3963 = vmatprep.subr.mxu0 0.0
    %3964 = vmatpush1.msra.mxu0 0.0
    %3965 = vmatprep.subr.mxu0 0.0
    %3966 = vmatpush1.msra.mxu0 0.0
    %3967 = vmatprep.subr.mxu0 0.0
    %3968 = vmatpush1.msra.mxu0 0.0
    %3969 = vmatprep.subr.mxu0 0.0
    %3970 = vmatpush1.msra.mxu0 0.0
    %3971 = vmatprep.subr.mxu0 0.0
    %3972 = vmatpush1.msra.mxu0 0.0
    %3973 = vmatprep.subr.mxu0 0.0
    %3974 = vmatpush1.msra.mxu0 0.0
    %3975 = vmatprep.subr.mxu0 0.0
    %3976 = vmatpush1.msra.mxu0 0.0
    %3977 = vmatprep.subr.mxu0 0.0
    %3978 = vmatpush1.msra.mxu0 0.0
    %3979 = vmatprep.subr.mxu0 0.0
    %3980 = vmatpush1.msra.mxu0 0.0
    %3981 = vmatprep.subr.mxu0 0.0
    %3982 = vmatpush1.msra.mxu0 0.0
    %3983 = vmatprep.subr.mxu0 0.0
    %3984 = vmatpush1.msra.mxu0 0.0
    %3985 = vmatprep.subr.mxu0 0.0
    %3986 = vmatpush1.msra.mxu0 0.0
    %3987 = vmatprep.mubr.f32.mxu0 0.0
    %3988 = vmatmul.mubr.f32.gmra.mrb[0].mxu0 %v3921
    %v3989 = vpop.f32.mrb[0].mxu0
    %v3990 = vadd.f32 0.0, %v3989
    %v3991 = vpop.f32.mrb[0].mxu0
    %3992 = vdwg.mxu0
    %v3993 = vld [vmem:[%s4] sm:$0xff]
    %v3994 = vld [vmem:[%s4 + $0x8] sm:$0xff]
    %v3995 = vld [vmem:[%s4 + $0x10] sm:$0xff]
    %v3996 = vld [vmem:[%s4 + $0x18] sm:$0xff]
    %v3997 = vld [vmem:[%s4 + $0x20] sm:$0xff]
    %v3998 = vld [vmem:[%s4 + $0x28] sm:$0xff]
    %v3999 = vld [vmem:[%s4 + $0x30] sm:$0xff]
    %v4000 = vld [vmem:[%s4 + $0x38] sm:$0xff]
    %v4001 = vld [vmem:[%s5] sm:$0x1]
    %v4003 = vlaneseq
    %v4004 = vshrl.u32 %v4003, 7
    %v4005 = vsub.s32 0, %v4004
    %v4006 = vrot.slane %v4001, %v4005
    %v4009 = vsel %vm2817, %v3990, 0
    %4011 = vmatprep.subr.mxu0 0.0
    %4012 = vmatpush1.msra.mxu0 %v3993
    %4013 = vmatprep.subr.mxu0 0.0
    %4014 = vmatpush1.msra.mxu0 %v3994
    %4015 = vmatprep.subr.mxu0 0.0
    %4016 = vmatpush1.msra.mxu0 %v3995
    %4017 = vmatprep.subr.mxu0 0.0
    %4018 = vmatpush1.msra.mxu0 %v3996
    %4019 = vmatprep.subr.mxu0 0.0
    %4020 = vmatpush1.msra.mxu0 %v3997
    %4021 = vmatprep.subr.mxu0 0.0
    %4022 = vmatpush1.msra.mxu0 %v3998
    %4023 = vmatprep.subr.mxu0 0.0
    %4024 = vmatpush1.msra.mxu0 %v3999
    %4025 = vmatprep.subr.mxu0 0.0
    %4026 = vmatpush1.msra.mxu0 %v4000
    %4027 = vmatprep.subr.mxu0 0.0
    %4028 = vmatpush1.msra.mxu0 0.0
    %4029 = vmatprep.subr.mxu0 0.0
    %4030 = vmatpush1.msra.mxu0 0.0
    %4031 = vmatprep.subr.mxu0 0.0
    %4032 = vmatpush1.msra.mxu0 0.0
    %4033 = vmatprep.subr.mxu0 0.0
    %4034 = vmatpush1.msra.mxu0 0.0
    %4035 = vmatprep.subr.mxu0 0.0
    %4036 = vmatpush1.msra.mxu0 0.0
    %4037 = vmatprep.subr.mxu0 0.0
    %4038 = vmatpush1.msra.mxu0 0.0
    %4039 = vmatprep.subr.mxu0 0.0
    %4040 = vmatpush1.msra.mxu0 0.0
    %4041 = vmatprep.subr.mxu0 0.0
    %4042 = vmatpush1.msra.mxu0 0.0
    %4043 = vmatprep.subr.mxu0 0.0
    %4044 = vmatpush1.msra.mxu0 0.0
    %4045 = vmatprep.subr.mxu0 0.0
    %4046 = vmatpush1.msra.mxu0 0.0
    %4047 = vmatprep.subr.mxu0 0.0
    %4048 = vmatpush1.msra.mxu0 0.0
    %4049 = vmatprep.subr.mxu0 0.0
    %4050 = vmatpush1.msra.mxu0 0.0
    %4051 = vmatprep.subr.mxu0 0.0
    %4052 = vmatpush1.msra.mxu0 0.0
    %4053 = vmatprep.subr.mxu0 0.0
    %4054 = vmatpush1.msra.mxu0 0.0
    %4055 = vmatprep.subr.mxu0 0.0
    %4056 = vmatpush1.msra.mxu0 0.0
    %4057 = vmatprep.subr.mxu0 0.0
    %4058 = vmatpush1.msra.mxu0 0.0
    %4059 = vmatprep.subr.mxu0 0.0
    %4060 = vmatpush1.msra.mxu0 0.0
    %4061 = vmatprep.subr.mxu0 0.0
    %4062 = vmatpush1.msra.mxu0 0.0
    %4063 = vmatprep.subr.mxu0 0.0
    %4064 = vmatpush1.msra.mxu0 0.0
    %4065 = vmatprep.subr.mxu0 0.0
    %4066 = vmatpush1.msra.mxu0 0.0
    %4067 = vmatprep.subr.mxu0 0.0
    %4068 = vmatpush1.msra.mxu0 0.0
    %4069 = vmatprep.subr.mxu0 0.0
    %4070 = vmatpush1.msra.mxu0 0.0
    %4071 = vmatprep.subr.mxu0 0.0
    %4072 = vmatpush1.msra.mxu0 0.0
    %4073 = vmatprep.subr.mxu0 0.0
    %4074 = vmatpush1.msra.mxu0 0.0
    %4075 = vmatprep.mubr.f32.mxu0 0.0
    %4076 = vmatmul.mubr.f32.gmra.mrb[0].mxu0 %v4009
    %v4077 = vpop.f32.mrb[0].mxu0
    %v4078 = vadd.f32 %v4006, %v4077
    %v4079 = vpop.f32.mrb[0].mxu0
    %4080 = vdwg.mxu0
    %vm4081 = vcmask 25600
    %4082 = vst.msk [vmem:[#allocation7] sm:$0x3] %vm4081, %v4078
    // Predicated region
    $region50: #{simple_cnn_forward.1} parent=1 // pred_check
      _
    $region51: #{simple_cnn_forward.1} parent=1 // pred_check_branch
      %4084 = sbr.rel (0) target = $region53
    $region52: #{simple_cnn_forward.1} parent=1 // pred_region
      %s4086 = ssub.s32 32, 32
      %4087 = vsyncadd [#allocation6], %s4086
      %s4089 = sshll.u32 [#allocation7], 4
      %s4090 = int_to_ptr.vmem [resolvable:$true] %s4089
      %4092 = dma.vmem_to_hbm [thread:$0]  %s4090, 32, %s11, [#allocation6]
    $region53: #{simple_cnn_forward.1} parent=1 // pred_fallthru
      _
    // Predicated region
    $region54: #{simple_cnn_forward.1} parent=1 // pred_check
      _
    $region55: #{simple_cnn_forward.1} parent=1 // pred_check_branch
      %4094 = sbr.rel (0) target = $region57
    $region56: #{simple_cnn_forward.1} parent=1 // pred_region
      %4095 = dma.done [#allocation6], 32
    $region57: #{simple_cnn_forward.1} parent=1 // pred_fallthru
      _
    %4096 = vsyncpa [#allocation5], 1
    %4097 = vsyncpa [#allocation6], 1

</llo_original>
